<compile_context>
chip_gen: v7x
topology: tpu7x:2x2x1
jax: 0.10.0
libtpu: 0.0.40
codegen_flags: <defaults>
</compile_context>

<pallas_src>
import functools
import math

import jax
import jax.numpy as jnp
from jax.experimental import pallas as pl
from jax.experimental.pallas import tpu as pltpu


# ----------------------------------------------------------------------------- helpers
def _round_up(x, m):
    return (x + m - 1) // m * m


def _layer_norm(x, g, b, eps=1e-5):
    mu = jnp.mean(x, axis=-1, keepdims=True)
    var = jnp.mean((x - mu) ** 2, axis=-1, keepdims=True)
    return (x - mu) * jax.lax.rsqrt(var + eps) * g + b


def _gelu(x):
    # TODO(synk): PyTorch F.gelu is the exact erf form; tanh approximation used for Mosaic safety.
    c = math.sqrt(2.0 / math.pi)
    return 0.5 * x * (1.0 + jnp.tanh(c * (x + 0.044715 * x * x * x)))


def _pick_vmem_limit():
    """Use most of physical VMEM (128 MiB v5e/v6e, 64 MiB v7x), leaving compiler headroom."""
    try:
        cap = int(pltpu.get_tpu_info().vmem_capacity_bytes)
    except Exception:
        cap = 64 * 1024 * 1024
    return max(32 * 1024 * 1024, cap - 16 * 1024 * 1024)


def _pick_bblk(B, batch_block):
    """Largest divisor of B <= batch_block, while keeping >=2 batch blocks (v7x megacore)."""
    bblk = min(batch_block, B)
    while B % bblk:
        bblk -= 1
    if B // bblk < 2 and B >= 2:
        bblk = max(1, B // 2)
        while B % bblk:
            bblk -= 1
    return bblk


# --------------------------------------------------------- fused encoder + LM-head kernel
def fused_encoder_lm_kernel(
        x_ref, bias_ref,
        ln1g_ref, ln1b_ref,
        wqkv_ref, bqkv_ref, wo_ref, bo_ref,
        ln2g_ref, ln2b_ref,
        w1_ref, b1_ref, w2_ref, b2_ref,
        hwt_ref, hbt_ref, hlng_ref, hlnb_ref, hwo_ref, hlmb_ref,
        o_ref,
        xs_ref,
        *, num_heads, head_dim, bblk, tpad):
    l = pl.program_id(1)
    num_layers = pl.num_programs(1)
    M = bblk * tpad
    D = num_heads * head_dim

    # Residual stream stays resident in VMEM scratch across the whole layer axis.
    @pl.when(l == 0)
    def _():
        xs_ref[...] = x_ref[...].reshape(M, D)

    x = xs_ref[...]                                     # [M, D] f32

    # ---------------- multi-head self attention (pre-LN) ----------------
    xn = _layer_norm(x, ln1g_ref[0], ln1b_ref[0])
    xb = xn.astype(jnp.bfloat16)

    # Single fused QKV projection (full MXU N-width, lane-dense weight block).
    # 1/sqrt(head_dim) is already folded into Wq / bq at pack time.
    qkv = jnp.dot(xb, wqkv_ref[0], preferred_element_type=jnp.float32) + bqkv_ref[0]

    ctx_heads = []
    for h in range(num_heads):                          # only tiny score/PV einsums per head
        off = h * head_dim
        qh = qkv[:, off:off + head_dim].reshape(bblk, tpad, head_dim).astype(jnp.bfloat16)
        kh = qkv[:, D + off:D + off + head_dim].reshape(bblk, tpad, head_dim).astype(jnp.bfloat16)
        vh = qkv[:, 2 * D + off:2 * D + off + head_dim].reshape(bblk, tpad, head_dim).astype(jnp.bfloat16)

        s = jnp.einsum('btd,bsd->bts', qh, kh, preferred_element_type=jnp.float32)
        s = s + bias_ref[:, h].astype(jnp.float32)      # bias streamed bf16, upcast here
        s = s - jnp.max(s, axis=-1, keepdims=True)
        p = jnp.exp(s)
        p = p * pl.reciprocal(jnp.sum(p, axis=-1, keepdims=True), approx=True)
        ctx = jnp.einsum('bts,bsd->btd', p.astype(jnp.bfloat16), vh,
                         preferred_element_type=jnp.float32)          # [bblk, Tp, hd]
        ctx_heads.append(ctx.reshape(M, head_dim).astype(jnp.bfloat16))

    # Single fused out-projection: concat_h(ctx_h) @ Wo (lane-dense [D, D] weight block).
    ctx_all = jnp.concatenate(ctx_heads, axis=-1)                     # [M, D] bf16
    x = x + jnp.dot(ctx_all, wo_ref[0], preferred_element_type=jnp.float32) + bo_ref[0]

    # ---------------- feed-forward (pre-LN, GELU) ----------------
    # TODO(synk): at production F (>=3072) tile the FFN hidden dim in chunks (extra grid
    # axis / streamed w1 column- and w2 row-chunks) to bound the [M, F] intermediate and
    # fit v7x's 64 MiB VMEM; unnecessary at these shapes.
    xn2 = _layer_norm(x, ln2g_ref[0], ln2b_ref[0])
    ff = _gelu(jnp.dot(xn2.astype(jnp.bfloat16), w1_ref[0],
                       preferred_element_type=jnp.float32) + b1_ref[0])
    ff = jnp.dot(ff.astype(jnp.bfloat16), w2_ref[0],
                 preferred_element_type=jnp.float32) + b2_ref[0]
    x = x + ff
    xs_ref[...] = x

    # ---------------- LM head, fused at the last layer ----------------
    @pl.when(l == num_layers - 1)
    def _():
        t = _gelu(jnp.dot(x.astype(jnp.bfloat16), hwt_ref[...],
                          preferred_element_type=jnp.float32) + hbt_ref[...])
        t = _layer_norm(t, hlng_ref[...], hlnb_ref[...])
        logits = jnp.dot(t.astype(jnp.bfloat16), hwo_ref[...],
                         preferred_element_type=jnp.float32) + hlmb_ref[...]
        o_ref[...] = logits.reshape(bblk, tpad, hwo_ref.shape[-1]).astype(o_ref.dtype)


def fused_encoder_lm_head(x, gb, enc, head, *, num_heads, head_dim, bblk):
    B, Tp, D = x.shape
    H = num_heads
    L = enc['wqkv'].shape[0]
    Cp = head['w_out'].shape[1]
    nb = B // bblk

    def lw(shape):                       # per-layer stacked param, indexed by layer axis
        nd = len(shape)
        return pl.BlockSpec((1,) + tuple(shape[1:]),
                            lambda b, l, _nd=nd: (l,) + (0,) * (_nd - 1))

    def const(shape):                    # grid-invariant param (loaded once per batch block)
        nd = len(shape)
        return pl.BlockSpec(tuple(shape), lambda b, l, _nd=nd: (0,) * _nd)

    # TODO(synk): on v7x at production sizes, set pipeline_mode=pl.Buffered(1) on the bias,
    # x and const(...) specs (they change at most once per batch block) to reclaim VMEM,
    # and consider int8 (v5e/v6e) / fp8 (v7x) weight streaming with dequant folded into bias.
    in_specs = [
        pl.BlockSpec((bblk, Tp, D), lambda b, l: (b, 0, 0)),          # x (read once per batch block)
        pl.BlockSpec((bblk, H, Tp, Tp), lambda b, l: (b, 0, 0, 0)),   # graph attn bias (bf16, resident over l)
        lw(enc['ln1_g'].shape), lw(enc['ln1_b'].shape),
        lw(enc['wqkv'].shape), lw(enc['bqkv'].shape),
        lw(enc['wo'].shape), lw(enc['bo'].shape),
        lw(enc['ln2_g'].shape), lw(enc['ln2_b'].shape),
        lw(enc['w1'].shape), lw(enc['b1'].shape),
        lw(enc['w2'].shape), lw(enc['b2'].shape),
        const(head['w_t'].shape), const(head['b_t'].shape),
        const(head['ln_g'].shape), const(head['ln_b'].shape),
        const(head['w_out'].shape), const(head['lm_bias'].shape),
    ]
    kernel = functools.partial(fused_encoder_lm_kernel, num_heads=H,
                               head_dim=head_dim, bblk=bblk, tpad=Tp)
    grid_spec = pltpu.PrefetchScalarGridSpec(
        num_scalar_prefetch=0,
        grid=(nb, L),                                   # layer (reduction-like) axis last
        in_specs=in_specs,
        out_specs=pl.BlockSpec((bblk, Tp, Cp), lambda b, l: (b, 0, 0)),
        scratch_shapes=[pltpu.VMEM((bblk * Tp, D), jnp.float32)],
    )
    return pl.pallas_call(
        kernel,
        out_shape=jax.ShapeDtypeStruct((B, Tp, Cp), jnp.bfloat16),    # lane-dense bf16 writeback
        grid_spec=grid_spec,
        compiler_params=pltpu.CompilerParams(
            dimension_semantics=("parallel", "arbitrary"),
            vmem_limit_bytes=_pick_vmem_limit()),
    )(x, gb,
      enc['ln1_g'], enc['ln1_b'],
      enc['wqkv'], enc['bqkv'], enc['wo'], enc['bo'],
      enc['ln2_g'], enc['ln2_b'],
      enc['w1'], enc['b1'], enc['w2'], enc['b2'],
      head['w_t'], head['b_t'], head['ln_g'], head['ln_b'],
      head['w_out'], head['lm_bias'])


# -------------------------------------------------------------------------- parameters
def init_params(key, cfg):
    D, F, H, L = cfg['embed_dim'], cfg['ffn_dim'], cfg['heads'], cfg['layers']
    std = 0.02

    def nrm(k, shape):
        return std * jax.random.normal(k, shape, dtype=jnp.float32)

    keys = jax.random.split(key, 16 + 9 * L)
    ki = iter(range(len(keys)))

    params = {}
    atom_emb = nrm(keys[next(ki)], (cfg['num_atoms'] + 1, D)).at[0].set(0.0)
    spatial_emb = nrm(keys[next(ki)], (cfg['num_spatial'], H)).at[0].set(0.0)
    edge_emb = nrm(keys[next(ki)], (cfg['num_edges'] + 1, H)).at[0].set(0.0)
    params.update(
        atom_emb=atom_emb,
        in_deg_emb=nrm(keys[next(ki)], (cfg['num_in_degree'], D)),
        out_deg_emb=nrm(keys[next(ki)], (cfg['num_out_degree'], D)),
        spatial_emb=spatial_emb,
        edge_emb=edge_emb,
        graph_token=nrm(keys[next(ki)], (1, D)),
        virtual_dist=nrm(keys[next(ki)], (1, H)),
        emb_ln_g=jnp.ones((D,), jnp.float32),
        emb_ln_b=jnp.zeros((D,), jnp.float32),
    )

    layers = []
    for _ in range(L):
        layers.append(dict(
            ln1_g=jnp.ones((D,), jnp.float32), ln1_b=jnp.zeros((D,), jnp.float32),
            wq=nrm(keys[next(ki)], (D, D)), bq=jnp.zeros((D,), jnp.float32),
            wk=nrm(keys[next(ki)], (D, D)), bk=jnp.zeros((D,), jnp.float32),
            wv=nrm(keys[next(ki)], (D, D)), bv=jnp.zeros((D,), jnp.float32),
            wo=nrm(keys[next(ki)], (D, D)), bo=jnp.zeros((D,), jnp.float32),
            ln2_g=jnp.ones((D,), jnp.float32), ln2_b=jnp.zeros((D,), jnp.float32),
            w1=nrm(keys[next(ki)], (D, F)), b1=jnp.zeros((F,), jnp.float32),
            w2=nrm(keys[next(ki)], (F, D)), b2=jnp.zeros((D,), jnp.float32),
        ))
    params['layers'] = layers

    params['head'] = dict(
        w_t=nrm(keys[next(ki)], (D, D)),                      # lm_head_transform_weight
        b_t=jnp.zeros((D,), jnp.float32),
        ln_g=jnp.ones((D,), jnp.float32), ln_b=jnp.zeros((D,), jnp.float32),
        w_out=nrm(keys[next(ki)], (D, cfg['num_classes'])),   # embed_out (no bias)
        lm_bias=jnp.zeros((1,), jnp.float32),                 # lm_output_learned_bias
    )
    return params


def pack_params(params, cfg, class_pad):
    """Stack per-layer weights over L, fuse QKV into one lane-dense [L, D, 3D] bf16 weight
    (with the 1/sqrt(head_dim) scale folded into Wq/bq), keep Wo as a lane-dense [L, D, D]
    bf16 weight, and pad embed_out columns to a full 128-lane width."""
    D, F, H, L = cfg['embed_dim'], cfg['ffn_dim'], cfg['heads'], cfg['layers']
    hd = D // H
    C = cfg['num_classes']
    scale = 1.0 / math.sqrt(hd)

    def stack(name):
        return jnp.stack([lp[name] for lp in params['layers']], axis=0)

    wq = stack('wq') * scale
    bq = stack('bq') * scale
    wqkv = jnp.concatenate([wq, stack('wk'), stack('wv')], axis=-1)     # [L, D, 3D]
    bqkv = jnp.concatenate([bq, stack('bk'), stack('bv')], axis=-1)     # [L, 3D]

    enc = dict(
        ln1_g=stack('ln1_g')[:, None, :], ln1_b=stack('ln1_b')[:, None, :],
        wqkv=wqkv.astype(jnp.bfloat16), bqkv=bqkv[:, None, :],
        wo=stack('wo').astype(jnp.bfloat16), bo=stack('bo')[:, None, :],
        ln2_g=stack('ln2_g')[:, None, :], ln2_b=stack('ln2_b')[:, None, :],
        w1=stack('w1').astype(jnp.bfloat16), b1=stack('b1')[:, None, :],
        w2=stack('w2').astype(jnp.bfloat16), b2=stack('b2')[:, None, :],
    )
    hp = params['head']
    w_out_p = jnp.zeros((D, class_pad), jnp.float32).at[:, :C].set(hp['w_out'])
    head = dict(
        w_t=hp['w_t'].astype(jnp.bfloat16),
        b_t=hp['b_t'][None, :],
        ln_g=hp['ln_g'][None, :], ln_b=hp['ln_b'][None, :],
        w_out=w_out_p.astype(jnp.bfloat16),
        lm_bias=hp['lm_bias'][None, :],              # [1, 1]
    )
    return enc, head


# ----------------------------------------------------------------------------- forward
def transformer_m_forward(batched_data, params, cfg, batch_block=8):
    xa = batched_data['x']                      # [B, N, 3]  atom features (ints)
    in_deg = batched_data['in_degree']          # [B, N]
    out_deg = batched_data['out_degree']        # [B, N]
    spatial_pos = batched_data['spatial_pos']   # [B, N, N]
    attn_bias0 = batched_data['attn_bias']      # [B, N+1, N+1] float
    edge_type = batched_data['attn_edge_type']  # [B, N, N, 3]

    B, N = in_deg.shape
    T = N + 1
    H, D = cfg['heads'], cfg['embed_dim']
    hd = D // H
    C = cfg['num_classes']

    # --- node embedding (graph token + atom/degree features) ---
    node = params['atom_emb'][xa].sum(axis=2)
    node = node + params['in_deg_emb'][in_deg] + params['out_deg_emb'][out_deg]
    gtok = jnp.broadcast_to(params['graph_token'][0][None, None, :], (B, 1, D))
    x = jnp.concatenate([gtok, node], axis=1)                       # [B, T, D]
    x = _layer_norm(x, params['emb_ln_g'], params['emb_ln_b'])      # encoder_normalize_before

    # --- graph attention bias [B, H, T, T] ---
    gb = jnp.broadcast_to(attn_bias0[:, None, :, :], (B, H, T, T))
    sp = jnp.transpose(params['spatial_emb'][spatial_pos], (0, 3, 1, 2))
    ed = jnp.transpose(params['edge_emb'][edge_type].mean(axis=3), (0, 3, 1, 2))
    # TODO(synk): multi-hop edge encoding (edge_type='multi_hop') reduced to single-hop mean.
    gb = gb.at[:, :, 1:, 1:].add(sp + ed)
    t = params['virtual_dist'].reshape(1, H, 1)
    gb = gb.at[:, :, 1:, 0].add(t)
    gb = gb.at[:, :, 0, :].add(t)
    gb = gb + attn_bias0[:, None, :, :]          # Graphormer "reset" add (matches reference)

    # --- pad sequence to a sublane multiple and classes to a full lane width ---
    Tp = _round_up(T, 8)
    Cp = _round_up(C, 128)
    x = jnp.pad(x, ((0, 0), (0, Tp - T), (0, 0)))
    gb = jnp.pad(gb, ((0, 0), (0, 0), (0, Tp - T), (0, Tp - T)))
    key_pad = jnp.arange(Tp) >= T                # mask padded key positions
    gb = jnp.where(key_pad[None, None, None, :], jnp.float32(-1e9), gb)
    gb = gb.astype(jnp.bfloat16)                 # streamed bf16, upcast inside the kernel

    bblk = _pick_bblk(B, batch_block)            # keep >= 2 batch blocks for v7x megacore
    assert B % bblk == 0, "batch must be divisible by the batch block size"

    enc, head = pack_params(params, cfg, Cp)
    logits = fused_encoder_lm_head(x, gb, enc, head,
                                   num_heads=H, head_dim=hd, bblk=bblk)
    logits = logits[:, :T, :C].astype(jnp.float32)   # strip padding, upcast for downstream

    # TODO(synk): add_3d=False — 3D Gaussian bias kernel and NodeTaskHead atom_output omitted.
    atom_output = None
    return logits, atom_output


# -------------------------------------------------------------------------------- main
if __name__ == "__main__":
    cfg = dict(
        num_atoms=64, num_in_degree=16, num_out_degree=16,
        num_edges=16, num_spatial=16,
        layers=2, embed_dim=32, ffn_dim=64, heads=4,
        num_classes=8, max_nodes=8,
    )

    key = jax.random.PRNGKey(0)
    kp, kx, kid, kod, ksp, ket = jax.random.split(key, 6)

    params = init_params(kp, cfg)

    B, N = 2, cfg['max_nodes']
    T = N + 1
    batched_data = dict(
        x=jax.random.randint(kx, (B, N, 3), 1, cfg['num_atoms'] + 1, dtype=jnp.int32),
        in_degree=jax.random.randint(kid, (B, N), 0, cfg['num_in_degree'], dtype=jnp.int32),
        out_degree=jax.random.randint(kod, (B, N), 0, cfg['num_out_degree'], dtype=jnp.int32),
        spatial_pos=jax.random.randint(ksp, (B, N, N), 1, cfg['num_spatial'], dtype=jnp.int32),
        attn_bias=jnp.zeros((B, T, T), jnp.float32),
        attn_edge_type=jax.random.randint(ket, (B, N, N, 3), 1, cfg['num_edges'] + 1, dtype=jnp.int32),
    )

    logits, atom_output = transformer_m_forward(batched_data, params, cfg)
    jax.block_until_ready(logits)
    assert logits.shape == (B, T, cfg['num_classes'])
    assert bool(jnp.all(jnp.isfinite(logits)))
    print("KERNEL_OK")
</pallas_src>

<mosaic_0001>
module attributes {stable_mosaic.version = 11 : i64} {
  func.func @fused_encoder_lm_kernel(%arg0: i32, %arg1: i32, %arg2: memref<1x16x32xf32, #tpu.memory_space<vmem>>, %arg3: memref<1x4x16x16xbf16, #tpu.memory_space<vmem>>, %arg4: memref<1x1x32xf32, #tpu.memory_space<vmem>>, %arg5: memref<1x1x32xf32, #tpu.memory_space<vmem>>, %arg6: memref<1x32x96xbf16, #tpu.memory_space<vmem>>, %arg7: memref<1x1x96xf32, #tpu.memory_space<vmem>>, %arg8: memref<1x32x32xbf16, #tpu.memory_space<vmem>>, %arg9: memref<1x1x32xf32, #tpu.memory_space<vmem>>, %arg10: memref<1x1x32xf32, #tpu.memory_space<vmem>>, %arg11: memref<1x1x32xf32, #tpu.memory_space<vmem>>, %arg12: memref<1x32x64xbf16, #tpu.memory_space<vmem>>, %arg13: memref<1x1x64xf32, #tpu.memory_space<vmem>>, %arg14: memref<1x64x32xbf16, #tpu.memory_space<vmem>>, %arg15: memref<1x1x32xf32, #tpu.memory_space<vmem>>, %arg16: memref<32x32xbf16, #tpu.memory_space<vmem>>, %arg17: memref<1x32xf32, #tpu.memory_space<vmem>>, %arg18: memref<1x32xf32, #tpu.memory_space<vmem>>, %arg19: memref<1x32xf32, #tpu.memory_space<vmem>>, %arg20: memref<32x128xbf16, #tpu.memory_space<vmem>>, %arg21: memref<1x1xf32, #tpu.memory_space<vmem>>, %arg22: memref<1x16x128xbf16, #tpu.memory_space<vmem>>, %arg23: memref<16x32xf32, #tpu.memory_space<vmem>>) attributes {dimension_semantics = [#tpu.dimension_semantics<parallel>, #tpu.dimension_semantics<arbitrary>], iteration_bounds = array<i64: 2, 2>, scalar_prefetch = 0 : i64, scratch_operands = 1 : i64, tpu.core_type = #tpu.core_type<tc>, window_params = [{transform_indices = @transform_0, window_bounds = array<i64: 1, 16, 32>}, {transform_indices = @transform_1, window_bounds = array<i64: 1, 4, 16, 16>}, {transform_indices = @transform_2, window_bounds = array<i64: 1, 1, 32>}, {transform_indices = @transform_3, window_bounds = array<i64: 1, 1, 32>}, {transform_indices = @transform_4, window_bounds = array<i64: 1, 32, 96>}, {transform_indices = @transform_5, window_bounds = array<i64: 1, 1, 96>}, {transform_indices = @transform_6, window_bounds = array<i64: 1, 32, 32>}, {transform_indices = @transform_7, window_bounds = array<i64: 1, 1, 32>}, {transform_indices = @transform_8, window_bounds = array<i64: 1, 1, 32>}, {transform_indices = @transform_9, window_bounds = array<i64: 1, 1, 32>}, {transform_indices = @transform_10, window_bounds = array<i64: 1, 32, 64>}, {transform_indices = @transform_11, window_bounds = array<i64: 1, 1, 64>}, {transform_indices = @transform_12, window_bounds = array<i64: 1, 64, 32>}, {transform_indices = @transform_13, window_bounds = array<i64: 1, 1, 32>}, {pipeline_mode = #tpu.pipeline_mode<synchronous>, transform_indices = @transform_14, window_bounds = array<i64: 32, 32>}, {pipeline_mode = #tpu.pipeline_mode<synchronous>, transform_indices = @transform_15, window_bounds = array<i64: 1, 32>}, {pipeline_mode = #tpu.pipeline_mode<synchronous>, transform_indices = @transform_16, window_bounds = array<i64: 1, 32>}, {pipeline_mode = #tpu.pipeline_mode<synchronous>, transform_indices = @transform_17, window_bounds = array<i64: 1, 32>}, {pipeline_mode = #tpu.pipeline_mode<synchronous>, transform_indices = @transform_18, window_bounds = array<i64: 32, 128>}, {pipeline_mode = #tpu.pipeline_mode<synchronous>, transform_indices = @transform_19, window_bounds = array<i64: 1, 1>}, {transform_indices = @transform_20, window_bounds = array<i64: 1, 16, 128>}]} {
    %c0_i32 = arith.constant 0 : i32
    %0 = arith.cmpi eq, %arg1, %c0_i32 : i32
    %1 = arith.extui %0 : i1 to i32
    %c0_i32_0 = arith.constant 0 : i32
    %2 = arith.cmpi ne, %1, %c0_i32_0 : i32
    scf.if %2 {
      %c0_87 = arith.constant 0 : index
      %c0_88 = arith.constant 0 : index
      %c0_89 = arith.constant 0 : index
      %219 = vector.load %arg2[%c0_87, %c0_88, %c0_89] : memref<1x16x32xf32, #tpu.memory_space<vmem>>, vector<1x16x32xf32>
      %220 = vector.shape_cast %219 : vector<1x16x32xf32> to vector<16x32xf32>
      %c0_90 = arith.constant 0 : index
      %c0_91 = arith.constant 0 : index
      %221 = vector.load %arg23[%c0_90, %c0_91] : memref<16x32xf32, #tpu.memory_space<vmem>>, vector<16x32xf32>
      tpu.vector_store %arg23[%c0_90, %c0_91], %220 {strides = array<i32>} : memref<16x32xf32, #tpu.memory_space<vmem>>, vector<16x32xf32>,
    } else {
    }
    %c0 = arith.constant 0 : index
    %c0_1 = arith.constant 0 : index
    %3 = vector.load %arg23[%c0, %c0_1] : memref<16x32xf32, #tpu.memory_space<vmem>>, vector<16x32xf32>
    %c0_2 = arith.constant 0 : index
    %c0_3 = arith.constant 0 : index
    %c0_4 = arith.constant 0 : index
    %4 = vector.load %arg4[%c0_2, %c0_3, %c0_4] : memref<1x1x32xf32, #tpu.memory_space<vmem>>, vector<1x1x32xf32>
    %5 = vector.shape_cast %4 : vector<1x1x32xf32> to vector<1x32xf32>
    %c0_5 = arith.constant 0 : index
    %c0_6 = arith.constant 0 : index
    %c0_7 = arith.constant 0 : index
    %6 = vector.load %arg5[%c0_5, %c0_6, %c0_7] : memref<1x1x32xf32, #tpu.memory_space<vmem>>, vector<1x1x32xf32>
    %7 = vector.shape_cast %6 : vector<1x1x32xf32> to vector<1x32xf32>
    %cst = arith.constant dense<0.000000e+00> : vector<16xf32>
    %8 = vector.multi_reduction <add>, %3, %cst [1] : vector<16x32xf32> to vector<16xf32>
    %9 = vector.shape_cast %8 : vector<16xf32> to vector<16x1xf32>
    %cst_8 = arith.constant 3.200000e+01 : f32
    %10 = vector.broadcast %cst_8 : f32 to vector<16x1xf32>
    %11 = arith.divf %9, %10 : vector<16x1xf32>
    %12 = vector.broadcast %11 : vector<16x1xf32> to vector<16x32xf32>
    %13 = arith.subf %3, %12 : vector<16x32xf32>
    %14 = arith.mulf %13, %13 : vector<16x32xf32>
    %cst_9 = arith.constant dense<0.000000e+00> : vector<16xf32>
    %15 = vector.multi_reduction <add>, %14, %cst_9 [1] : vector<16x32xf32> to vector<16xf32>
    %16 = vector.shape_cast %15 : vector<16xf32> to vector<16x1xf32>
    %cst_10 = arith.constant 3.200000e+01 : f32
    %17 = vector.broadcast %cst_10 : f32 to vector<16x1xf32>
    %18 = arith.divf %16, %17 : vector<16x1xf32>
    %19 = vector.broadcast %11 : vector<16x1xf32> to vector<16x32xf32>
    %20 = arith.subf %3, %19 : vector<16x32xf32>
    %cst_11 = arith.constant 9.99999974E-6 : f32
    %21 = vector.broadcast %cst_11 : f32 to vector<16x1xf32>
    %22 = arith.addf %18, %21 : vector<16x1xf32>
    %23 = math.rsqrt %22 : vector<16x1xf32>
    %24 = vector.broadcast %23 : vector<16x1xf32> to vector<16x32xf32>
    %25 = arith.mulf %20, %24 : vector<16x32xf32>
    %26 = vector.broadcast %5 : vector<1x32xf32> to vector<16x32xf32>
    %27 = arith.mulf %25, %26 : vector<16x32xf32>
    %28 = vector.broadcast %7 : vector<1x32xf32> to vector<16x32xf32>
    %29 = arith.addf %27, %28 : vector<16x32xf32>
    %30 = arith.truncf %29 : vector<16x32xf32> to vector<16x32xbf16>
    %c0_12 = arith.constant 0 : index
    %c0_13 = arith.constant 0 : index
    %c0_14 = arith.constant 0 : index
    %31 = vector.load %arg6[%c0_12, %c0_13, %c0_14] : memref<1x32x96xbf16, #tpu.memory_space<vmem>>, vector<1x32x96xbf16>
    %32 = vector.shape_cast %31 : vector<1x32x96xbf16> to vector<32x96xbf16>
    %cst_15 = arith.constant dense<0.000000e+00> : vector<16x96xf32>
    %33 = tpu.matmul %30, %32, %cst_15 {dimension_numbers = #tpu.dot_dimension_numbers<[1], [0], [0], [1], [0, 0, 1, 1], [], []>} : vector<16x32xbf16>, vector<32x96xbf16>, vector<16x96xf32> -> vector<16x96xf32>
    %c0_16 = arith.constant 0 : index
    %c0_17 = arith.constant 0 : index
    %c0_18 = arith.constant 0 : index
    %34 = vector.load %arg7[%c0_16, %c0_17, %c0_18] : memref<1x1x96xf32, #tpu.memory_space<vmem>>, vector<1x1x96xf32>
    %35 = vector.shape_cast %34 : vector<1x1x96xf32> to vector<1x96xf32>
    %36 = vector.broadcast %35 : vector<1x96xf32> to vector<16x96xf32>
    %37 = arith.addf %33, %36 : vector<16x96xf32>
    %38 = vector.extract_strided_slice %37 {offsets = [0, 0], sizes = [16, 8], strides = [1, 1]} : vector<16x96xf32> to vector<16x8xf32>
    %39 = vector.shape_cast %38 : vector<16x8xf32> to vector<1x16x8xf32>
    %40 = arith.truncf %39 : vector<1x16x8xf32> to vector<1x16x8xbf16>
    %41 = vector.extract_strided_slice %37 {offsets = [0, 32], sizes = [16, 8], strides = [1, 1]} : vector<16x96xf32> to vector<16x8xf32>
    %42 = vector.shape_cast %41 : vector<16x8xf32> to vector<1x16x8xf32>
    %43 = arith.truncf %42 : vector<1x16x8xf32> to vector<1x16x8xbf16>
    %44 = vector.extract_strided_slice %37 {offsets = [0, 64], sizes = [16, 8], strides = [1, 1]} : vector<16x96xf32> to vector<16x8xf32>
    %45 = vector.shape_cast %44 : vector<16x8xf32> to vector<1x16x8xf32>
    %46 = arith.truncf %45 : vector<1x16x8xf32> to vector<1x16x8xbf16>
    "tpu.trace_start"() <{level = 10 : i32, message = "btd,bsd->bts"}> : () -> ()
    %cst_19 = arith.constant dense<0.000000e+00> : vector<1x16x16xf32>
    %47 = tpu.matmul %40, %43, %cst_19 {dimension_numbers = #tpu.dot_dimension_numbers<[2], [2], [1], [1], [0, 0, 0, 1, 1, 1], [0], [0]>} : vector<1x16x8xbf16>, vector<1x16x8xbf16>, vector<1x16x16xf32> -> vector<1x16x16xf32>
    "tpu.trace_stop"() : () -> ()
    %c0_20 = arith.constant 0 : index
    %c0_21 = arith.constant 0 : index
    %c0_22 = arith.constant 0 : index
    %c0_23 = arith.constant 0 : index
    %48 = vector.load %arg3[%c0_20, %c0_21, %c0_22, %c0_23] : memref<1x4x16x16xbf16, #tpu.memory_space<vmem>>, vector<1x1x16x16xbf16>
    %49 = vector.shape_cast %48 : vector<1x1x16x16xbf16> to vector<1x16x16xbf16>
    %50 = arith.extf %49 : vector<1x16x16xbf16> to vector<1x16x16xf32>
    %51 = arith.addf %47, %50 : vector<1x16x16xf32>
    %cst_24 = arith.constant dense<0xFF800000> : vector<1x16xf32>
    %52 = vector.multi_reduction <maximumf>, %51, %cst_24 [2] : vector<1x16x16xf32> to vector<1x16xf32>
    %53 = vector.shape_cast %52 : vector<1x16xf32> to vector<1x16x1xf32>
    %54 = vector.broadcast %53 : vector<1x16x1xf32> to vector<1x16x16xf32>
    %55 = arith.subf %51, %54 : vector<1x16x16xf32>
    %56 = math.exp %55 : vector<1x16x16xf32>
    %cst_25 = arith.constant dense<0.000000e+00> : vector<1x16xf32>
    %57 = vector.multi_reduction <add>, %56, %cst_25 [2] : vector<1x16x16xf32> to vector<1x16xf32>
    %58 = vector.shape_cast %57 : vector<1x16xf32> to vector<1x16x1xf32>
    %59 = tpu.reciprocal %58 {approx = true} : vector<1x16x1xf32> -> vector<1x16x1xf32>
    %60 = vector.broadcast %59 : vector<1x16x1xf32> to vector<1x16x16xf32>
    %61 = arith.mulf %56, %60 : vector<1x16x16xf32>
    %62 = arith.truncf %61 : vector<1x16x16xf32> to vector<1x16x16xbf16>
    "tpu.trace_start"() <{level = 10 : i32, message = "bts,bsd->btd"}> : () -> ()
    %cst_26 = arith.constant dense<0.000000e+00> : vector<1x16x8xf32>
    %63 = tpu.matmul %62, %46, %cst_26 {dimension_numbers = #tpu.dot_dimension_numbers<[2], [1], [1], [2], [0, 0, 0, 1, 1, 2], [0], [0]>} : vector<1x16x16xbf16>, vector<1x16x8xbf16>, vector<1x16x8xf32> -> vector<1x16x8xf32>
    "tpu.trace_stop"() : () -> ()
    %64 = vector.shape_cast %63 : vector<1x16x8xf32> to vector<16x8xf32>
    %65 = arith.truncf %64 : vector<16x8xf32> to vector<16x8xbf16>
    %66 = vector.extract_strided_slice %37 {offsets = [0, 8], sizes = [16, 8], strides = [1, 1]} : vector<16x96xf32> to vector<16x8xf32>
    %67 = vector.shape_cast %66 : vector<16x8xf32> to vector<1x16x8xf32>
    %68 = arith.truncf %67 : vector<1x16x8xf32> to vector<1x16x8xbf16>
    %69 = vector.extract_strided_slice %37 {offsets = [0, 40], sizes = [16, 8], strides = [1, 1]} : vector<16x96xf32> to vector<16x8xf32>
    %70 = vector.shape_cast %69 : vector<16x8xf32> to vector<1x16x8xf32>
    %71 = arith.truncf %70 : vector<1x16x8xf32> to vector<1x16x8xbf16>
    %72 = vector.extract_strided_slice %37 {offsets = [0, 72], sizes = [16, 8], strides = [1, 1]} : vector<16x96xf32> to vector<16x8xf32>
    %73 = vector.shape_cast %72 : vector<16x8xf32> to vector<1x16x8xf32>
    %74 = arith.truncf %73 : vector<1x16x8xf32> to vector<1x16x8xbf16>
    "tpu.trace_start"() <{level = 10 : i32, message = "btd,bsd->bts"}> : () -> ()
    %cst_27 = arith.constant dense<0.000000e+00> : vector<1x16x16xf32>
    %75 = tpu.matmul %68, %71, %cst_27 {dimension_numbers = #tpu.dot_dimension_numbers<[2], [2], [1], [1], [0, 0, 0, 1, 1, 1], [0], [0]>} : vector<1x16x8xbf16>, vector<1x16x8xbf16>, vector<1x16x16xf32> -> vector<1x16x16xf32>
    "tpu.trace_stop"() : () -> ()
    %c0_28 = arith.constant 0 : index
    %c1 = arith.constant 1 : index
    %c0_29 = arith.constant 0 : index
    %c0_30 = arith.constant 0 : index
    %76 = vector.load %arg3[%c0_28, %c1, %c0_29, %c0_30] : memref<1x4x16x16xbf16, #tpu.memory_space<vmem>>, vector<1x1x16x16xbf16>
    %77 = vector.shape_cast %76 : vector<1x1x16x16xbf16> to vector<1x16x16xbf16>
    %78 = arith.extf %77 : vector<1x16x16xbf16> to vector<1x16x16xf32>
    %79 = arith.addf %75, %78 : vector<1x16x16xf32>
    %cst_31 = arith.constant dense<0xFF800000> : vector<1x16xf32>
    %80 = vector.multi_reduction <maximumf>, %79, %cst_31 [2] : vector<1x16x16xf32> to vector<1x16xf32>
    %81 = vector.shape_cast %80 : vector<1x16xf32> to vector<1x16x1xf32>
    %82 = vector.broadcast %81 : vector<1x16x1xf32> to vector<1x16x16xf32>
    %83 = arith.subf %79, %82 : vector<1x16x16xf32>
    %84 = math.exp %83 : vector<1x16x16xf32>
    %cst_32 = arith.constant dense<0.000000e+00> : vector<1x16xf32>
    %85 = vector.multi_reduction <add>, %84, %cst_32 [2] : vector<1x16x16xf32> to vector<1x16xf32>
    %86 = vector.shape_cast %85 : vector<1x16xf32> to vector<1x16x1xf32>
    %87 = tpu.reciprocal %86 {approx = true} : vector<1x16x1xf32> -> vector<1x16x1xf32>
    %88 = vector.broadcast %87 : vector<1x16x1xf32> to vector<1x16x16xf32>
    %89 = arith.mulf %84, %88 : vector<1x16x16xf32>
    %90 = arith.truncf %89 : vector<1x16x16xf32> to vector<1x16x16xbf16>
    "tpu.trace_start"() <{level = 10 : i32, message = "bts,bsd->btd"}> : () -> ()
    %cst_33 = arith.constant dense<0.000000e+00> : vector<1x16x8xf32>
    %91 = tpu.matmul %90, %74, %cst_33 {dimension_numbers = #tpu.dot_dimension_numbers<[2], [1], [1], [2], [0, 0, 0, 1, 1, 2], [0], [0]>} : vector<1x16x16xbf16>, vector<1x16x8xbf16>, vector<1x16x8xf32> -> vector<1x16x8xf32>
    "tpu.trace_stop"() : () -> ()
    %92 = vector.shape_cast %91 : vector<1x16x8xf32> to vector<16x8xf32>
    %93 = arith.truncf %92 : vector<16x8xf32> to vector<16x8xbf16>
    %94 = vector.extract_strided_slice %37 {offsets = [0, 16], sizes = [16, 8], strides = [1, 1]} : vector<16x96xf32> to vector<16x8xf32>
    %95 = vector.shape_cast %94 : vector<16x8xf32> to vector<1x16x8xf32>
    %96 = arith.truncf %95 : vector<1x16x8xf32> to vector<1x16x8xbf16>
    %97 = vector.extract_strided_slice %37 {offsets = [0, 48], sizes = [16, 8], strides = [1, 1]} : vector<16x96xf32> to vector<16x8xf32>
    %98 = vector.shape_cast %97 : vector<16x8xf32> to vector<1x16x8xf32>
    %99 = arith.truncf %98 : vector<1x16x8xf32> to vector<1x16x8xbf16>
    %100 = vector.extract_strided_slice %37 {offsets = [0, 80], sizes = [16, 8], strides = [1, 1]} : vector<16x96xf32> to vector<16x8xf32>
    %101 = vector.shape_cast %100 : vector<16x8xf32> to vector<1x16x8xf32>
    %102 = arith.truncf %101 : vector<1x16x8xf32> to vector<1x16x8xbf16>
    "tpu.trace_start"() <{level = 10 : i32, message = "btd,bsd->bts"}> : () -> ()
    %cst_34 = arith.constant dense<0.000000e+00> : vector<1x16x16xf32>
    %103 = tpu.matmul %96, %99, %cst_34 {dimension_numbers = #tpu.dot_dimension_numbers<[2], [2], [1], [1], [0, 0, 0, 1, 1, 1], [0], [0]>} : vector<1x16x8xbf16>, vector<1x16x8xbf16>, vector<1x16x16xf32> -> vector<1x16x16xf32>
    "tpu.trace_stop"() : () -> ()
    %c0_35 = arith.constant 0 : index
    %c2 = arith.constant 2 : index
    %c0_36 = arith.constant 0 : index
    %c0_37 = arith.constant 0 : index
    %104 = vector.load %arg3[%c0_35, %c2, %c0_36, %c0_37] : memref<1x4x16x16xbf16, #tpu.memory_space<vmem>>, vector<1x1x16x16xbf16>
    %105 = vector.shape_cast %104 : vector<1x1x16x16xbf16> to vector<1x16x16xbf16>
    %106 = arith.extf %105 : vector<1x16x16xbf16> to vector<1x16x16xf32>
    %107 = arith.addf %103, %106 : vector<1x16x16xf32>
    %cst_38 = arith.constant dense<0xFF800000> : vector<1x16xf32>
    %108 = vector.multi_reduction <maximumf>, %107, %cst_38 [2] : vector<1x16x16xf32> to vector<1x16xf32>
    %109 = vector.shape_cast %108 : vector<1x16xf32> to vector<1x16x1xf32>
    %110 = vector.broadcast %109 : vector<1x16x1xf32> to vector<1x16x16xf32>
    %111 = arith.subf %107, %110 : vector<1x16x16xf32>
    %112 = math.exp %111 : vector<1x16x16xf32>
    %cst_39 = arith.constant dense<0.000000e+00> : vector<1x16xf32>
    %113 = vector.multi_reduction <add>, %112, %cst_39 [2] : vector<1x16x16xf32> to vector<1x16xf32>
    %114 = vector.shape_cast %113 : vector<1x16xf32> to vector<1x16x1xf32>
    %115 = tpu.reciprocal %114 {approx = true} : vector<1x16x1xf32> -> vector<1x16x1xf32>
    %116 = vector.broadcast %115 : vector<1x16x1xf32> to vector<1x16x16xf32>
    %117 = arith.mulf %112, %116 : vector<1x16x16xf32>
    %118 = arith.truncf %117 : vector<1x16x16xf32> to vector<1x16x16xbf16>
    "tpu.trace_start"() <{level = 10 : i32, message = "bts,bsd->btd"}> : () -> ()
    %cst_40 = arith.constant dense<0.000000e+00> : vector<1x16x8xf32>
    %119 = tpu.matmul %118, %102, %cst_40 {dimension_numbers = #tpu.dot_dimension_numbers<[2], [1], [1], [2], [0, 0, 0, 1, 1, 2], [0], [0]>} : vector<1x16x16xbf16>, vector<1x16x8xbf16>, vector<1x16x8xf32> -> vector<1x16x8xf32>
    "tpu.trace_stop"() : () -> ()
    %120 = vector.shape_cast %119 : vector<1x16x8xf32> to vector<16x8xf32>
    %121 = arith.truncf %120 : vector<16x8xf32> to vector<16x8xbf16>
    %122 = vector.extract_strided_slice %37 {offsets = [0, 24], sizes = [16, 8], strides = [1, 1]} : vector<16x96xf32> to vector<16x8xf32>
    %123 = vector.shape_cast %122 : vector<16x8xf32> to vector<1x16x8xf32>
    %124 = arith.truncf %123 : vector<1x16x8xf32> to vector<1x16x8xbf16>
    %125 = vector.extract_strided_slice %37 {offsets = [0, 56], sizes = [16, 8], strides = [1, 1]} : vector<16x96xf32> to vector<16x8xf32>
    %126 = vector.shape_cast %125 : vector<16x8xf32> to vector<1x16x8xf32>
    %127 = arith.truncf %126 : vector<1x16x8xf32> to vector<1x16x8xbf16>
    %128 = vector.extract_strided_slice %37 {offsets = [0, 88], sizes = [16, 8], strides = [1, 1]} : vector<16x96xf32> to vector<16x8xf32>
    %129 = vector.shape_cast %128 : vector<16x8xf32> to vector<1x16x8xf32>
    %130 = arith.truncf %129 : vector<1x16x8xf32> to vector<1x16x8xbf16>
    "tpu.trace_start"() <{level = 10 : i32, message = "btd,bsd->bts"}> : () -> ()
    %cst_41 = arith.constant dense<0.000000e+00> : vector<1x16x16xf32>
    %131 = tpu.matmul %124, %127, %cst_41 {dimension_numbers = #tpu.dot_dimension_numbers<[2], [2], [1], [1], [0, 0, 0, 1, 1, 1], [0], [0]>} : vector<1x16x8xbf16>, vector<1x16x8xbf16>, vector<1x16x16xf32> -> vector<1x16x16xf32>
    "tpu.trace_stop"() : () -> ()
    %c0_42 = arith.constant 0 : index
    %c3 = arith.constant 3 : index
    %c0_43 = arith.constant 0 : index
    %c0_44 = arith.constant 0 : index
    %132 = vector.load %arg3[%c0_42, %c3, %c0_43, %c0_44] : memref<1x4x16x16xbf16, #tpu.memory_space<vmem>>, vector<1x1x16x16xbf16>
    %133 = vector.shape_cast %132 : vector<1x1x16x16xbf16> to vector<1x16x16xbf16>
    %134 = arith.extf %133 : vector<1x16x16xbf16> to vector<1x16x16xf32>
    %135 = arith.addf %131, %134 : vector<1x16x16xf32>
    %cst_45 = arith.constant dense<0xFF800000> : vector<1x16xf32>
    %136 = vector.multi_reduction <maximumf>, %135, %cst_45 [2] : vector<1x16x16xf32> to vector<1x16xf32>
    %137 = vector.shape_cast %136 : vector<1x16xf32> to vector<1x16x1xf32>
    %138 = vector.broadcast %137 : vector<1x16x1xf32> to vector<1x16x16xf32>
    %139 = arith.subf %135, %138 : vector<1x16x16xf32>
    %140 = math.exp %139 : vector<1x16x16xf32>
    %cst_46 = arith.constant dense<0.000000e+00> : vector<1x16xf32>
    %141 = vector.multi_reduction <add>, %140, %cst_46 [2] : vector<1x16x16xf32> to vector<1x16xf32>
    %142 = vector.shape_cast %141 : vector<1x16xf32> to vector<1x16x1xf32>
    %143 = tpu.reciprocal %142 {approx = true} : vector<1x16x1xf32> -> vector<1x16x1xf32>
    %144 = vector.broadcast %143 : vector<1x16x1xf32> to vector<1x16x16xf32>
    %145 = arith.mulf %140, %144 : vector<1x16x16xf32>
    %146 = arith.truncf %145 : vector<1x16x16xf32> to vector<1x16x16xbf16>
    "tpu.trace_start"() <{level = 10 : i32, message = "bts,bsd->btd"}> : () -> ()
    %cst_47 = arith.constant dense<0.000000e+00> : vector<1x16x8xf32>
    %147 = tpu.matmul %146, %130, %cst_47 {dimension_numbers = #tpu.dot_dimension_numbers<[2], [1], [1], [2], [0, 0, 0, 1, 1, 2], [0], [0]>} : vector<1x16x16xbf16>, vector<1x16x8xbf16>, vector<1x16x8xf32> -> vector<1x16x8xf32>
    "tpu.trace_stop"() : () -> ()
    %148 = vector.shape_cast %147 : vector<1x16x8xf32> to vector<16x8xf32>
    %149 = arith.truncf %148 : vector<16x8xf32> to vector<16x8xbf16>
    %150 = tpu.concatenate %65, %93, %121, %149 in 1 : vector<16x8xbf16>, vector<16x8xbf16>, vector<16x8xbf16>, vector<16x8xbf16> -> vector<16x32xbf16>
    %c0_48 = arith.constant 0 : index
    %c0_49 = arith.constant 0 : index
    %c0_50 = arith.constant 0 : index
    %151 = vector.load %arg8[%c0_48, %c0_49, %c0_50] : memref<1x32x32xbf16, #tpu.memory_space<vmem>>, vector<1x32x32xbf16>
    %152 = vector.shape_cast %151 : vector<1x32x32xbf16> to vector<32x32xbf16>
    %cst_51 = arith.constant dense<0.000000e+00> : vector<16x32xf32>
    %153 = tpu.matmul %150, %152, %cst_51 {dimension_numbers = #tpu.dot_dimension_numbers<[1], [0], [0], [1], [0, 0, 1, 1], [], []>} : vector<16x32xbf16>, vector<32x32xbf16>, vector<16x32xf32> -> vector<16x32xf32>
    %154 = arith.addf %3, %153 : vector<16x32xf32>
    %c0_52 = arith.constant 0 : index
    %c0_53 = arith.constant 0 : index
    %c0_54 = arith.constant 0 : index
    %155 = vector.load %arg9[%c0_52, %c0_53, %c0_54] : memref<1x1x32xf32, #tpu.memory_space<vmem>>, vector<1x1x32xf32>
    %156 = vector.shape_cast %155 : vector<1x1x32xf32> to vector<1x32xf32>
    %157 = vector.broadcast %156 : vector<1x32xf32> to vector<16x32xf32>
    %158 = arith.addf %154, %157 : vector<16x32xf32>
    %c0_55 = arith.constant 0 : index
    %c0_56 = arith.constant 0 : index
    %c0_57 = arith.constant 0 : index
    %159 = vector.load %arg10[%c0_55, %c0_56, %c0_57] : memref<1x1x32xf32, #tpu.memory_space<vmem>>, vector<1x1x32xf32>
    %160 = vector.shape_cast %159 : vector<1x1x32xf32> to vector<1x32xf32>
    %c0_58 = arith.constant 0 : index
    %c0_59 = arith.constant 0 : index
    %c0_60 = arith.constant 0 : index
    %161 = vector.load %arg11[%c0_58, %c0_59, %c0_60] : memref<1x1x32xf32, #tpu.memory_space<vmem>>, vector<1x1x32xf32>
    %162 = vector.shape_cast %161 : vector<1x1x32xf32> to vector<1x32xf32>
    %cst_61 = arith.constant dense<0.000000e+00> : vector<16xf32>
    %163 = vector.multi_reduction <add>, %158, %cst_61 [1] : vector<16x32xf32> to vector<16xf32>
    %164 = vector.shape_cast %163 : vector<16xf32> to vector<16x1xf32>
    %cst_62 = arith.constant 3.200000e+01 : f32
    %165 = vector.broadcast %cst_62 : f32 to vector<16x1xf32>
    %166 = arith.divf %164, %165 : vector<16x1xf32>
    %167 = vector.broadcast %166 : vector<16x1xf32> to vector<16x32xf32>
    %168 = arith.subf %158, %167 : vector<16x32xf32>
    %169 = arith.mulf %168, %168 : vector<16x32xf32>
    %cst_63 = arith.constant dense<0.000000e+00> : vector<16xf32>
    %170 = vector.multi_reduction <add>, %169, %cst_63 [1] : vector<16x32xf32> to vector<16xf32>
    %171 = vector.shape_cast %170 : vector<16xf32> to vector<16x1xf32>
    %cst_64 = arith.constant 3.200000e+01 : f32
    %172 = vector.broadcast %cst_64 : f32 to vector<16x1xf32>
    %173 = arith.divf %171, %172 : vector<16x1xf32>
    %174 = vector.broadcast %166 : vector<16x1xf32> to vector<16x32xf32>
    %175 = arith.subf %158, %174 : vector<16x32xf32>
    %cst_65 = arith.constant 9.99999974E-6 : f32
    %176 = vector.broadcast %cst_65 : f32 to vector<16x1xf32>
    %177 = arith.addf %173, %176 : vector<16x1xf32>
    %178 = math.rsqrt %177 : vector<16x1xf32>
    %179 = vector.broadcast %178 : vector<16x1xf32> to vector<16x32xf32>
    %180 = arith.mulf %175, %179 : vector<16x32xf32>
    %181 = vector.broadcast %160 : vector<1x32xf32> to vector<16x32xf32>
    %182 = arith.mulf %180, %181 : vector<16x32xf32>
    %183 = vector.broadcast %162 : vector<1x32xf32> to vector<16x32xf32>
    %184 = arith.addf %182, %183 : vector<16x32xf32>
    %185 = arith.truncf %184 : vector<16x32xf32> to vector<16x32xbf16>
    %c0_66 = arith.constant 0 : index
    %c0_67 = arith.constant 0 : index
    %c0_68 = arith.constant 0 : index
    %186 = vector.load %arg12[%c0_66, %c0_67, %c0_68] : memref<1x32x64xbf16, #tpu.memory_space<vmem>>, vector<1x32x64xbf16>
    %187 = vector.shape_cast %186 : vector<1x32x64xbf16> to vector<32x64xbf16>
    %cst_69 = arith.constant dense<0.000000e+00> : vector<16x64xf32>
    %188 = tpu.matmul %185, %187, %cst_69 {dimension_numbers = #tpu.dot_dimension_numbers<[1], [0], [0], [1], [0, 0, 1, 1], [], []>} : vector<16x32xbf16>, vector<32x64xbf16>, vector<16x64xf32> -> vector<16x64xf32>
    %c0_70 = arith.constant 0 : index
    %c0_71 = arith.constant 0 : index
    %c0_72 = arith.constant 0 : index
    %189 = vector.load %arg13[%c0_70, %c0_71, %c0_72] : memref<1x1x64xf32, #tpu.memory_space<vmem>>, vector<1x1x64xf32>
    %190 = vector.shape_cast %189 : vector<1x1x64xf32> to vector<1x64xf32>
    %191 = vector.broadcast %190 : vector<1x64xf32> to vector<16x64xf32>
    %192 = arith.addf %188, %191 : vector<16x64xf32>
    %cst_73 = arith.constant 5.000000e-01 : f32
    %193 = vector.broadcast %cst_73 : f32 to vector<16x64xf32>
    %194 = arith.mulf %193, %192 : vector<16x64xf32>
    %cst_74 = arith.constant 4.471500e-02 : f32
    %195 = vector.broadcast %cst_74 : f32 to vector<16x64xf32>
    %196 = arith.mulf %195, %192 : vector<16x64xf32>
    %197 = arith.mulf %196, %192 : vector<16x64xf32>
    %198 = arith.mulf %197, %192 : vector<16x64xf32>
    %199 = arith.addf %192, %198 : vector<16x64xf32>
    %cst_75 = arith.constant 0.797884583 : f32
    %200 = vector.broadcast %cst_75 : f32 to vector<16x64xf32>
    %201 = arith.mulf %200, %199 : vector<16x64xf32>
    %202 = math.tanh %201 : vector<16x64xf32>
    %cst_76 = arith.constant 1.000000e+00 : f32
    %203 = vector.broadcast %cst_76 : f32 to vector<16x64xf32>
    %204 = arith.addf %203, %202 : vector<16x64xf32>
    %205 = arith.mulf %194, %204 : vector<16x64xf32>
    %206 = arith.truncf %205 : vector<16x64xf32> to vector<16x64xbf16>
    %c0_77 = arith.constant 0 : index
    %c0_78 = arith.constant 0 : index
    %c0_79 = arith.constant 0 : index
    %207 = vector.load %arg14[%c0_77, %c0_78, %c0_79] : memref<1x64x32xbf16, #tpu.memory_space<vmem>>, vector<1x64x32xbf16>
    %208 = vector.shape_cast %207 : vector<1x64x32xbf16> to vector<64x32xbf16>
    %cst_80 = arith.constant dense<0.000000e+00> : vector<16x32xf32>
    %209 = tpu.matmul %206, %208, %cst_80 {dimension_numbers = #tpu.dot_dimension_numbers<[1], [0], [0], [1], [0, 0, 1, 1], [], []>} : vector<16x64xbf16>, vector<64x32xbf16>, vector<16x32xf32> -> vector<16x32xf32>
    %c0_81 = arith.constant 0 : index
    %c0_82 = arith.constant 0 : index
    %c0_83 = arith.constant 0 : index
    %210 = vector.load %arg15[%c0_81, %c0_82, %c0_83] : memref<1x1x32xf32, #tpu.memory_space<vmem>>, vector<1x1x32xf32>
    %211 = vector.shape_cast %210 : vector<1x1x32xf32> to vector<1x32xf32>
    %212 = vector.broadcast %211 : vector<1x32xf32> to vector<16x32xf32>
    %213 = arith.addf %209, %212 : vector<16x32xf32>
    %214 = arith.addf %158, %213 : vector<16x32xf32>
    %c0_84 = arith.constant 0 : index
    %c0_85 = arith.constant 0 : index
    %215 = vector.load %arg23[%c0_84, %c0_85] : memref<16x32xf32, #tpu.memory_space<vmem>>, vector<16x32xf32>
    tpu.vector_store %arg23[%c0_84, %c0_85], %214 {strides = array<i32>} : memref<16x32xf32, #tpu.memory_space<vmem>>, vector<16x32xf32>,
    %c1_i32 = arith.constant 1 : i32
    %216 = arith.cmpi eq, %arg1, %c1_i32 : i32
    %217 = arith.extui %216 : i1 to i32
    %c0_i32_86 = arith.constant 0 : i32
    %218 = arith.cmpi ne, %217, %c0_i32_86 : i32
    scf.if %218 {
      %219 = arith.truncf %214 : vector<16x32xf32> to vector<16x32xbf16>
      %c0_87 = arith.constant 0 : index
      %c0_88 = arith.constant 0 : index
      %220 = vector.load %arg16[%c0_87, %c0_88] : memref<32x32xbf16, #tpu.memory_space<vmem>>, vector<32x32xbf16>
      %cst_89 = arith.constant dense<0.000000e+00> : vector<16x32xf32>
      %221 = tpu.matmul %219, %220, %cst_89 {dimension_numbers = #tpu.dot_dimension_numbers<[1], [0], [0], [1], [0, 0, 1, 1], [], []>} : vector<16x32xbf16>, vector<32x32xbf16>, vector<16x32xf32> -> vector<16x32xf32>
      %c0_90 = arith.constant 0 : index
      %c0_91 = arith.constant 0 : index
      %222 = vector.load %arg17[%c0_90, %c0_91] : memref<1x32xf32, #tpu.memory_space<vmem>>, vector<1x32xf32>
      %223 = vector.broadcast %222 : vector<1x32xf32> to vector<16x32xf32>
      %224 = arith.addf %221, %223 : vector<16x32xf32>
      %cst_92 = arith.constant 5.000000e-01 : f32
      %225 = vector.broadcast %cst_92 : f32 to vector<16x32xf32>
      %226 = arith.mulf %225, %224 : vector<16x32xf32>
      %cst_93 = arith.constant 4.471500e-02 : f32
      %227 = vector.broadcast %cst_93 : f32 to vector<16x32xf32>
      %228 = arith.mulf %227, %224 : vector<16x32xf32>
      %229 = arith.mulf %228, %224 : vector<16x32xf32>
      %230 = arith.mulf %229, %224 : vector<16x32xf32>
      %231 = arith.addf %224, %230 : vector<16x32xf32>
      %cst_94 = arith.constant 0.797884583 : f32
      %232 = vector.broadcast %cst_94 : f32 to vector<16x32xf32>
      %233 = arith.mulf %232, %231 : vector<16x32xf32>
      %234 = math.tanh %233 : vector<16x32xf32>
      %cst_95 = arith.constant 1.000000e+00 : f32
      %235 = vector.broadcast %cst_95 : f32 to vector<16x32xf32>
      %236 = arith.addf %235, %234 : vector<16x32xf32>
      %237 = arith.mulf %226, %236 : vector<16x32xf32>
      %c0_96 = arith.constant 0 : index
      %c0_97 = arith.constant 0 : index
      %238 = vector.load %arg18[%c0_96, %c0_97] : memref<1x32xf32, #tpu.memory_space<vmem>>, vector<1x32xf32>
      %c0_98 = arith.constant 0 : index
      %c0_99 = arith.constant 0 : index
      %239 = vector.load %arg19[%c0_98, %c0_99] : memref<1x32xf32, #tpu.memory_space<vmem>>, vector<1x32xf32>
      %cst_100 = arith.constant dense<0.000000e+00> : vector<16xf32>
      %240 = vector.multi_reduction <add>, %237, %cst_100 [1] : vector<16x32xf32> to vector<16xf32>
      %241 = vector.shape_cast %240 : vector<16xf32> to vector<16x1xf32>
      %cst_101 = arith.constant 3.200000e+01 : f32
      %242 = vector.broadcast %cst_101 : f32 to vector<16x1xf32>
      %243 = arith.divf %241, %242 : vector<16x1xf32>
      %244 = vector.broadcast %243 : vector<16x1xf32> to vector<16x32xf32>
      %245 = arith.subf %237, %244 : vector<16x32xf32>
      %246 = arith.mulf %245, %245 : vector<16x32xf32>
      %cst_102 = arith.constant dense<0.000000e+00> : vector<16xf32>
      %247 = vector.multi_reduction <add>, %246, %cst_102 [1] : vector<16x32xf32> to vector<16xf32>
      %248 = vector.shape_cast %247 : vector<16xf32> to vector<16x1xf32>
      %cst_103 = arith.constant 3.200000e+01 : f32
      %249 = vector.broadcast %cst_103 : f32 to vector<16x1xf32>
      %250 = arith.divf %248, %249 : vector<16x1xf32>
      %251 = vector.broadcast %243 : vector<16x1xf32> to vector<16x32xf32>
      %252 = arith.subf %237, %251 : vector<16x32xf32>
      %cst_104 = arith.constant 9.99999974E-6 : f32
      %253 = vector.broadcast %cst_104 : f32 to vector<16x1xf32>
      %254 = arith.addf %250, %253 : vector<16x1xf32>
      %255 = math.rsqrt %254 : vector<16x1xf32>
      %256 = vector.broadcast %255 : vector<16x1xf32> to vector<16x32xf32>
      %257 = arith.mulf %252, %256 : vector<16x32xf32>
      %258 = vector.broadcast %238 : vector<1x32xf32> to vector<16x32xf32>
      %259 = arith.mulf %257, %258 : vector<16x32xf32>
      %260 = vector.broadcast %239 : vector<1x32xf32> to vector<16x32xf32>
      %261 = arith.addf %259, %260 : vector<16x32xf32>
      %262 = arith.truncf %261 : vector<16x32xf32> to vector<16x32xbf16>
      %c0_105 = arith.constant 0 : index
      %c0_106 = arith.constant 0 : index
      %263 = vector.load %arg20[%c0_105, %c0_106] : memref<32x128xbf16, #tpu.memory_space<vmem>>, vector<32x128xbf16>
      %cst_107 = arith.constant dense<0.000000e+00> : vector<16x128xf32>
      %264 = tpu.matmul %262, %263, %cst_107 {dimension_numbers = #tpu.dot_dimension_numbers<[1], [0], [0], [1], [0, 0, 1, 1], [], []>} : vector<16x32xbf16>, vector<32x128xbf16>, vector<16x128xf32> -> vector<16x128xf32>
      %c0_108 = arith.constant 0 : index
      %c0_109 = arith.constant 0 : index
      %265 = vector.load %arg21[%c0_108, %c0_109] : memref<1x1xf32, #tpu.memory_space<vmem>>, vector<1x1xf32>
      %266 = vector.broadcast %265 : vector<1x1xf32> to vector<16x128xf32>
      %267 = arith.addf %264, %266 : vector<16x128xf32>
      %268 = vector.shape_cast %267 : vector<16x128xf32> to vector<1x16x128xf32>
      %269 = arith.truncf %268 : vector<1x16x128xf32> to vector<1x16x128xbf16>
      %c0_110 = arith.constant 0 : index
      %c0_111 = arith.constant 0 : index
      %c0_112 = arith.constant 0 : index
      %270 = vector.load %arg22[%c0_110, %c0_111, %c0_112] : memref<1x16x128xbf16, #tpu.memory_space<vmem>>, vector<1x16x128xbf16>
      tpu.vector_store %arg22[%c0_110, %c0_111, %c0_112], %269 {strides = array<i32>} : memref<1x16x128xbf16, #tpu.memory_space<vmem>>, vector<1x16x128xbf16>,
    } else {
    }
    return
  }
  func.func @transform_0(%arg0: i32, %arg1: i32) -> (i32, i32, i32) {
    %c0_i32 = arith.constant 0 : i32
    %c0_i32_0 = arith.constant 0 : i32
    %c0_i32_1 = arith.constant 0 : i32
    return %arg0, %c0_i32, %c0_i32_0 : i32, i32, i32
  }
  func.func @transform_1(%arg0: i32, %arg1: i32) -> (i32, i32, i32, i32) {
    %c0_i32 = arith.constant 0 : i32
    %c0_i32_0 = arith.constant 0 : i32
    %c0_i32_1 = arith.constant 0 : i32
    %c0_i32_2 = arith.constant 0 : i32
    return %arg0, %c0_i32, %c0_i32_0, %c0_i32_1 : i32, i32, i32, i32
  }
  func.func @transform_2(%arg0: i32, %arg1: i32) -> (i32, i32, i32) {
    %c0_i32 = arith.constant 0 : i32
    %c0_i32_0 = arith.constant 0 : i32
    %c0_i32_1 = arith.constant 0 : i32
    return %arg1, %c0_i32, %c0_i32_0 : i32, i32, i32
  }
  func.func @transform_3(%arg0: i32, %arg1: i32) -> (i32, i32, i32) {
    %c0_i32 = arith.constant 0 : i32
    %c0_i32_0 = arith.constant 0 : i32
    %c0_i32_1 = arith.constant 0 : i32
    return %arg1, %c0_i32, %c0_i32_0 : i32, i32, i32
  }
  func.func @transform_4(%arg0: i32, %arg1: i32) -> (i32, i32, i32) {
    %c0_i32 = arith.constant 0 : i32
    %c0_i32_0 = arith.constant 0 : i32
    %c0_i32_1 = arith.constant 0 : i32
    return %arg1, %c0_i32, %c0_i32_0 : i32, i32, i32
  }
  func.func @transform_5(%arg0: i32, %arg1: i32) -> (i32, i32, i32) {
    %c0_i32 = arith.constant 0 : i32
    %c0_i32_0 = arith.constant 0 : i32
    %c0_i32_1 = arith.constant 0 : i32
    return %arg1, %c0_i32, %c0_i32_0 : i32, i32, i32
  }
  func.func @transform_6(%arg0: i32, %arg1: i32) -> (i32, i32, i32) {
    %c0_i32 = arith.constant 0 : i32
    %c0_i32_0 = arith.constant 0 : i32
    %c0_i32_1 = arith.constant 0 : i32
    return %arg1, %c0_i32, %c0_i32_0 : i32, i32, i32
  }
  func.func @transform_7(%arg0: i32, %arg1: i32) -> (i32, i32, i32) {
    %c0_i32 = arith.constant 0 : i32
    %c0_i32_0 = arith.constant 0 : i32
    %c0_i32_1 = arith.constant 0 : i32
    return %arg1, %c0_i32, %c0_i32_0 : i32, i32, i32
  }
  func.func @transform_8(%arg0: i32, %arg1: i32) -> (i32, i32, i32) {
    %c0_i32 = arith.constant 0 : i32
    %c0_i32_0 = arith.constant 0 : i32
    %c0_i32_1 = arith.constant 0 : i32
    return %arg1, %c0_i32, %c0_i32_0 : i32, i32, i32
  }
  func.func @transform_9(%arg0: i32, %arg1: i32) -> (i32, i32, i32) {
    %c0_i32 = arith.constant 0 : i32
    %c0_i32_0 = arith.constant 0 : i32
    %c0_i32_1 = arith.constant 0 : i32
    return %arg1, %c0_i32, %c0_i32_0 : i32, i32, i32
  }
  func.func @transform_10(%arg0: i32, %arg1: i32) -> (i32, i32, i32) {
    %c0_i32 = arith.constant 0 : i32
    %c0_i32_0 = arith.constant 0 : i32
    %c0_i32_1 = arith.constant 0 : i32
    return %arg1, %c0_i32, %c0_i32_0 : i32, i32, i32
  }
  func.func @transform_11(%arg0: i32, %arg1: i32) -> (i32, i32, i32) {
    %c0_i32 = arith.constant 0 : i32
    %c0_i32_0 = arith.constant 0 : i32
    %c0_i32_1 = arith.constant 0 : i32
    return %arg1, %c0_i32, %c0_i32_0 : i32, i32, i32
  }
  func.func @transform_12(%arg0: i32, %arg1: i32) -> (i32, i32, i32) {
    %c0_i32 = arith.constant 0 : i32
    %c0_i32_0 = arith.constant 0 : i32
    %c0_i32_1 = arith.constant 0 : i32
    return %arg1, %c0_i32, %c0_i32_0 : i32, i32, i32
  }
  func.func @transform_13(%arg0: i32, %arg1: i32) -> (i32, i32, i32) {
    %c0_i32 = arith.constant 0 : i32
    %c0_i32_0 = arith.constant 0 : i32
    %c0_i32_1 = arith.constant 0 : i32
    return %arg1, %c0_i32, %c0_i32_0 : i32, i32, i32
  }
  func.func @transform_14(%arg0: i32, %arg1: i32) -> (i32, i32) {
    %c0_i32 = arith.constant 0 : i32
    %c0_i32_0 = arith.constant 0 : i32
    %c0_i32_1 = arith.constant 0 : i32
    return %c0_i32, %c0_i32_0 : i32, i32
  }
  func.func @transform_15(%arg0: i32, %arg1: i32) -> (i32, i32) {
    %c0_i32 = arith.constant 0 : i32
    %c0_i32_0 = arith.constant 0 : i32
    %c0_i32_1 = arith.constant 0 : i32
    return %c0_i32, %c0_i32_0 : i32, i32
  }
  func.func @transform_16(%arg0: i32, %arg1: i32) -> (i32, i32) {
    %c0_i32 = arith.constant 0 : i32
    %c0_i32_0 = arith.constant 0 : i32
    %c0_i32_1 = arith.constant 0 : i32
    return %c0_i32, %c0_i32_0 : i32, i32
  }
  func.func @transform_17(%arg0: i32, %arg1: i32) -> (i32, i32) {
    %c0_i32 = arith.constant 0 : i32
    %c0_i32_0 = arith.constant 0 : i32
    %c0_i32_1 = arith.constant 0 : i32
    return %c0_i32, %c0_i32_0 : i32, i32
  }
  func.func @transform_18(%arg0: i32, %arg1: i32) -> (i32, i32) {
    %c0_i32 = arith.constant 0 : i32
    %c0_i32_0 = arith.constant 0 : i32
    %c0_i32_1 = arith.constant 0 : i32
    return %c0_i32, %c0_i32_0 : i32, i32
  }
  func.func @transform_19(%arg0: i32, %arg1: i32) -> (i32, i32) {
    %c0_i32 = arith.constant 0 : i32
    %c0_i32_0 = arith.constant 0 : i32
    %c0_i32_1 = arith.constant 0 : i32
    return %c0_i32, %c0_i32_0 : i32, i32
  }
  func.func @transform_20(%arg0: i32, %arg1: i32) -> (i32, i32, i32) {
    %c0_i32 = arith.constant 0 : i32
    %c0_i32_0 = arith.constant 0 : i32
    %c0_i32_1 = arith.constant 0 : i32
    return %arg0, %c0_i32, %c0_i32_0 : i32, i32, i32
  }
}

</mosaic_0001>

<llo_original>
// kernel: tpu_custom_call.1
$region0: #{tpu_custom_call.1}
  #allocation0 [shape = 'u32[]', space=smem, size = 0x4, offset = 0x4, fixed_abs, tag = 'smem constant byte address 0x4 - core index']
  #allocation1 [shape = 'u32[144,128]{1,0:T(1,128)}', space=vmem, size = 0x12000, scoped, tag = 'internal scratch']
  #allocation2 [shape = 'f32[16,32]{1,0:T(8,128)}', space=vmem, size = 0x2000, scoped, tag = 'scratch operand']
  #allocation3 [shape = 'f32[1,1]{1,0:T(1,128)S(1)}', space=vmem, size = 0x200, scoped, tag = 'scoped memory for tpu_custom_call.1']
  %s0 = inlined_call_operand.vmem [shape: f32[2,16,32], index: 0, kind: input, shape index: {}]
  %s1 = inlined_call_operand.vmem [shape: bf16[2,4,16,16], index: 1, kind: input, shape index: {}]
  %s2 = inlined_call_operand.hbm [shape: f32[2,1,32], index: 2, kind: input, shape index: {}]
  %s3 = inlined_call_operand.hbm [shape: f32[2,1,32], index: 3, kind: input, shape index: {}]
  %s4 = inlined_call_operand.hbm [shape: bf16[2,32,96], index: 4, kind: input, shape index: {}]
  %s5 = inlined_call_operand.hbm [shape: f32[2,1,96], index: 5, kind: input, shape index: {}]
  %s6 = inlined_call_operand.hbm [shape: bf16[2,32,32], index: 6, kind: input, shape index: {}]
  %s7 = inlined_call_operand.hbm [shape: f32[2,1,32], index: 7, kind: input, shape index: {}]
  %s8 = inlined_call_operand.hbm [shape: f32[2,1,32], index: 8, kind: input, shape index: {}]
  %s9 = inlined_call_operand.hbm [shape: f32[2,1,32], index: 9, kind: input, shape index: {}]
  %s10 = inlined_call_operand.hbm [shape: bf16[2,32,64], index: 10, kind: input, shape index: {}]
  %s11 = inlined_call_operand.hbm [shape: f32[2,1,64], index: 11, kind: input, shape index: {}]
  %s12 = inlined_call_operand.vmem [shape: bf16[2,64,32], index: 12, kind: input, shape index: {}]
  %s13 = inlined_call_operand.hbm [shape: f32[2,1,32], index: 13, kind: input, shape index: {}]
  %s14 = inlined_call_operand.vmem [shape: bf16[32,32], index: 14, kind: input, shape index: {}]
  %s15 = inlined_call_operand.hbm [shape: f32[1,32], index: 15, kind: input, shape index: {}]
  %s16 = inlined_call_operand.hbm [shape: f32[1,32], index: 16, kind: input, shape index: {}]
  %s17 = inlined_call_operand.vmem [shape: f32[1,32], index: 17, kind: input, shape index: {}]
  %s18 = inlined_call_operand.vmem [shape: bf16[32,128], index: 18, kind: input, shape index: {}]
  %s19 = inlined_call_operand.<no memory space> [shape: f32[1,1], index: 19, kind: input, shape index: {}]
  %s20 = inlined_call_operand.hbm [shape: bf16[2,16,128], index: 20, kind: output, shape index: {}]
  %s21 = sld [smem:[#allocation0]]
  $region173: #{tpu_custom_call.1} parent=0
    _
  %s23 = ssub.s32 1, %s21
  %s24 = scalar_select 0, %s23, %s21
  %v25 = vstv %s19
  %26 = vst [vmem:[#allocation3] sm:$0x1] %v25
  $region1: #{tpu_custom_call.1} parent=0
    #allocation4 [shape = 'u8[1024]{0}', space=vmem, size = 0x400, scoped, tag = 'input window, operand 2']
    #allocation5 [shape = 's32[2]{0}', space=sflag, size = 0x8, scoped, tag = 'scoped memory for tpu_custom_call.1']
    #allocation6 [shape = 's32[2]{0}', space=sflag, size = 0x8, scoped, tag = 'scoped memory for tpu_custom_call.1']
    #allocation7 [shape = 'u8[1024]{0}', space=vmem, size = 0x400, scoped, tag = 'input window, operand 3']
    #allocation8 [shape = 's32[2]{0}', space=sflag, size = 0x8, scoped, tag = 'scoped memory for tpu_custom_call.1']
    #allocation9 [shape = 'u8[16384]{0}', space=vmem, size = 0x4000, scoped, tag = 'input window, operand 4']
    #allocation10 [shape = 'u8[1024]{0}', space=vmem, size = 0x400, scoped, tag = 'input window, operand 5']
    #allocation11 [shape = 's32[2]{0}', space=sflag, size = 0x8, scoped, tag = 'scoped memory for tpu_custom_call.1']
    #allocation12 [shape = 'u8[16384]{0}', space=vmem, size = 0x4000, scoped, tag = 'input window, operand 6']
    #allocation13 [shape = 'u8[1024]{0}', space=vmem, size = 0x400, scoped, tag = 'input window, operand 7']
    #allocation14 [shape = 's32[2]{0}', space=sflag, size = 0x8, scoped, tag = 'scoped memory for tpu_custom_call.1']
    #allocation15 [shape = 'u8[1024]{0}', space=vmem, size = 0x400, scoped, tag = 'input window, operand 8']
    #allocation16 [shape = 'u8[1024]{0}', space=vmem, size = 0x400, scoped, tag = 'input window, operand 9']
    #allocation17 [shape = 's32[2]{0}', space=sflag, size = 0x8, scoped, tag = 'scoped memory for tpu_custom_call.1']
    #allocation18 [shape = 'u8[16384]{0}', space=vmem, size = 0x4000, scoped, tag = 'input window, operand 10']
    #allocation19 [shape = 'u8[1024]{0}', space=vmem, size = 0x400, scoped, tag = 'input window, operand 11']
    #allocation20 [shape = 's32[2]{0}', space=sflag, size = 0x8, scoped, tag = 'scoped memory for tpu_custom_call.1']
    #allocation21 [shape = 'u8[1024]{0}', space=vmem, size = 0x400, scoped, tag = 'input window, operand 13']
    #allocation22 [shape = 'u8[512]{0}', space=vmem, size = 0x400, scoped, tag = 'input window, operand 15, single buffered']
    #allocation23 [shape = 's32[1]{0}', space=sflag, size = 0x4, scoped, tag = 'scoped memory for tpu_custom_call.1']
    #allocation24 [shape = 'u8[512]{0}', space=vmem, size = 0x400, scoped, tag = 'input window, operand 16, single buffered']
    #allocation25 [shape = 'u8[8192]{0}', space=vmem, size = 0x2000, scoped, tag = 'output window, operand 0']
    %27 = vsyncpa [#allocation5], 0
    %s28 = scalar_lea.sflag [#allocation5], 1
    %29 = vsyncpa %s28, 0
    %30 = vsyncpa [#allocation8], 0
    %s31 = scalar_lea.sflag [#allocation8], 1
    %32 = vsyncpa %s31, 0
    %33 = vsyncpa [#allocation11], 0
    %s34 = scalar_lea.sflag [#allocation11], 1
    %35 = vsyncpa %s34, 0
    %36 = vsyncpa [#allocation14], 0
    %s37 = scalar_lea.sflag [#allocation14], 1
    %38 = vsyncpa %s37, 0
    %39 = vsyncpa [#allocation17], 0
    %s40 = scalar_lea.sflag [#allocation17], 1
    %41 = vsyncpa %s40, 0
    %42 = vsyncpa [#allocation20], 0
    %s43 = scalar_lea.sflag [#allocation20], 1
    %44 = vsyncpa %s43, 0
    %45 = vsyncpa [#allocation23], 0
    %46 = vsyncpa [#allocation6], 0
    %s47 = scalar_lea.sflag [#allocation6], 1
    %48 = vsyncpa %s47, 0
    loop: start=0, step=1, limit=6
    $region2: #{tpu_custom_call.1} parent=1 // loop_pre_header
      _
    $region3: #{tpu_custom_call.1} parent=1 // loop_header
      %s50 = sphi 0, %s54
      %p51 = scmp.ge.s32.totalorder %s50, 6
      %s57 = sphi 0, %s69
      %s58 = sphi 0, %s65
      %s59 = sphi 0, %s57
      %s60 = sphi 0, %s58
      %s61 = sphi 0, %s59
      %s62 = sphi 0, %s60
      %s72 = sphi 0, %s74
      %s75 = sphi 0, %s72
      %s76 = sphi 0, %s75
      %s92 = sphi 0, %s76
      %s98 = sphi 0, %s100
      %s101 = sphi 0, %s98
      %s102 = sphi 0, %s101
      %s118 = sphi 0, %s102
      %s124 = sphi 0, %s126
      %s127 = sphi 0, %s124
      %s128 = sphi 0, %s127
      %s144 = sphi 0, %s128
      %s150 = sphi 0, %s152
      %s153 = sphi 0, %s150
      %s154 = sphi 0, %s153
      %s170 = sphi 0, %s154
      %s176 = sphi 0, %s178
      %s179 = sphi 0, %s176
      %s180 = sphi 0, %s179
      %s196 = sphi 0, %s180
      %s202 = sphi 0, %s204
      %s205 = sphi 0, %s202
      %s206 = sphi 0, %s205
      %s222 = sphi 0, %s206
      %s228 = sphi 0, %s230
      %s231 = sphi 0, %s228
      %s232 = sphi 0, %s231
      %s248 = sphi 0, %s232
      %s254 = sphi 0, %s256
      %s257 = sphi 0, %s254
      %s258 = sphi 0, %s257
      %s274 = sphi 0, %s258
      %s280 = sphi 0, %s282
      %s283 = sphi 0, %s280
      %s284 = sphi 0, %s283
      %s300 = sphi 0, %s284
      %s306 = sphi 0, %s308
      %s309 = sphi 0, %s306
      %s310 = sphi 0, %s309
      %s326 = sphi 0, %s310
      %s332 = sphi 0, %s334
      %s335 = sphi 0, %s332
      %s336 = sphi 0, %s335
      %s352 = sphi 0, %s336
      %s358 = sphi 0, %s360
      %s361 = sphi 0, %s358
      %s362 = sphi 0, %s361
      %s378 = sphi 0, %s362
      %s384 = sphi 0, %s386
      %s387 = sphi 0, %s384
      %s388 = sphi 0, %s387
      %s404 = sphi 0, %s388
      %s410 = sphi 0, %s412
      %s413 = sphi 0, %s410
      %s414 = sphi 0, %s413
      %s430 = sphi 0, %s414
      %s434 = sphi 0, %s434
      %s436 = sphi 0, %s434
      %s437 = sphi 0, %s436
      %s451 = sphi 0, %s437
      %s455 = sphi 0, %s455
      %s457 = sphi 0, %s455
      %s458 = sphi 0, %s457
      %s472 = sphi 0, %s458
      %s476 = sphi 0, %s476
      %s478 = sphi 0, %s476
      %s479 = sphi 0, %s478
      %s493 = sphi 0, %s479
      %s497 = sphi 0, %s497
      %s499 = sphi 0, %s497
      %s500 = sphi 0, %s499
      %s514 = sphi 0, %s500
      %s518 = sphi 0, %s518
      %s520 = sphi 0, %s518
      %s521 = sphi 0, %s520
      %s535 = sphi 0, %s521
      %s539 = sphi 0, %s539
      %s541 = sphi 0, %s539
      %s542 = sphi 0, %s541
      %s556 = sphi 0, %s542
      %s562 = sphi 0, %s564
      %s565 = sphi 0, %s562
      %s566 = sphi 0, %s565
      %s582 = sphi 0, %s566
    $region4: #{tpu_custom_call.1} parent=1 // loop_header_branch
      %53 = sbr.rel (%p51) target = $region8
    $region5: #{tpu_custom_call.1} parent=1 // loop_body
      %s55 = ssub.s32 %s50, 1
      %s56 = ssub.s32 %s50, 2
      %s63 = sadd.s32 1, %s58
      %p64 = scmp.ge.s32.totalorder %s63, 2
      %s65 = scalar_select %p64, 0, %s63
      %s66 = sadd.s32 1, %s57
      %s67 = scalar_select %p64, %s66, %s57
      %p68 = scmp.ge.s32.totalorder %s67, 2
      %s69 = scalar_select %p68, 0, %s67
      %s70 = ssub.s32 %s57, %s69
      %p71 = scmp.eq.s32.totalorder %s70, 0
      %s73 = sadd.s32 %s72, 1
      %s74 = scalar_select %p71, %s72, %s73
      %p77 = pneg %p71
      %p78 = scmp.eq.s32.totalorder %s50, 3
      %p79 = por %p77, %p78
      %p80 = scmp.ne.s32.totalorder %s72, %s75
      %p81 = scmp.eq.s32.totalorder %s50, 0
      %p82 = por %p80, %p81
      %p83 = scmp.ne.s32.totalorder %s72, %s75
      %p84 = scmp.eq.s32.totalorder %s55, 3
      %p85 = por %p83, %p84
      %p86 = scmp.ne.s32.totalorder %s75, %s76
      %p87 = scmp.eq.s32.totalorder %s55, 0
      %p88 = por %p86, %p87
      %p89 = scmp.ne.s32.totalorder %s75, %s76
      %p90 = scmp.eq.s32.totalorder %s56, 3
      %p91 = por %p89, %p90
      %p93 = scmp.ne.s32.totalorder %s76, %s92
      %p94 = scmp.eq.s32.totalorder %s56, 0
      %p95 = por %p93, %p94
      %s96 = ssub.s32 %s57, %s69
      %p97 = scmp.eq.s32.totalorder %s96, 0
      %s99 = sadd.s32 %s98, 1
      %s100 = scalar_select %p97, %s98, %s99
      %p103 = pneg %p97
      %p104 = scmp.eq.s32.totalorder %s50, 3
      %p105 = por %p103, %p104
      %p106 = scmp.ne.s32.totalorder %s98, %s101
      %p107 = scmp.eq.s32.totalorder %s50, 0
      %p108 = por %p106, %p107
      %p109 = scmp.ne.s32.totalorder %s98, %s101
      %p110 = scmp.eq.s32.totalorder %s55, 3
      %p111 = por %p109, %p110
      %p112 = scmp.ne.s32.totalorder %s101, %s102
      %p113 = scmp.eq.s32.totalorder %s55, 0
      %p114 = por %p112, %p113
      %p115 = scmp.ne.s32.totalorder %s101, %s102
      %p116 = scmp.eq.s32.totalorder %s56, 3
      %p117 = por %p115, %p116
      %p119 = scmp.ne.s32.totalorder %s102, %s118
      %p120 = scmp.eq.s32.totalorder %s56, 0
      %p121 = por %p119, %p120
      %s122 = ssub.s32 %s58, %s65
      %p123 = scmp.eq.s32.totalorder %s122, 0
      %s125 = sadd.s32 %s124, 1
      %s126 = scalar_select %p123, %s124, %s125
      %p129 = pneg %p123
      %p130 = scmp.eq.s32.totalorder %s50, 3
      %p131 = por %p129, %p130
      %p132 = scmp.ne.s32.totalorder %s124, %s127
      %p133 = scmp.eq.s32.totalorder %s50, 0
      %p134 = por %p132, %p133
      %p135 = scmp.ne.s32.totalorder %s124, %s127
      %p136 = scmp.eq.s32.totalorder %s55, 3
      %p137 = por %p135, %p136
      %p138 = scmp.ne.s32.totalorder %s127, %s128
      %p139 = scmp.eq.s32.totalorder %s55, 0
      %p140 = por %p138, %p139
      %p141 = scmp.ne.s32.totalorder %s127, %s128
      %p142 = scmp.eq.s32.totalorder %s56, 3
      %p143 = por %p141, %p142
      %p145 = scmp.ne.s32.totalorder %s128, %s144
      %p146 = scmp.eq.s32.totalorder %s56, 0
      %p147 = por %p145, %p146
      %s148 = ssub.s32 %s58, %s65
      %p149 = scmp.eq.s32.totalorder %s148, 0
      %s151 = sadd.s32 %s150, 1
      %s152 = scalar_select %p149, %s150, %s151
      %p155 = pneg %p149
      %p156 = scmp.eq.s32.totalorder %s50, 3
      %p157 = por %p155, %p156
      %p158 = scmp.ne.s32.totalorder %s150, %s153
      %p159 = scmp.eq.s32.totalorder %s50, 0
      %p160 = por %p158, %p159
      %p161 = scmp.ne.s32.totalorder %s150, %s153
      %p162 = scmp.eq.s32.totalorder %s55, 3
      %p163 = por %p161, %p162
      %p164 = scmp.ne.s32.totalorder %s153, %s154
      %p165 = scmp.eq.s32.totalorder %s55, 0
      %p166 = por %p164, %p165
      %p167 = scmp.ne.s32.totalorder %s153, %s154
      %p168 = scmp.eq.s32.totalorder %s56, 3
      %p169 = por %p167, %p168
      %p171 = scmp.ne.s32.totalorder %s154, %s170
      %p172 = scmp.eq.s32.totalorder %s56, 0
      %p173 = por %p171, %p172
      %s174 = ssub.s32 %s58, %s65
      %p175 = scmp.eq.s32.totalorder %s174, 0
      %s177 = sadd.s32 %s176, 1
      %s178 = scalar_select %p175, %s176, %s177
      %p181 = pneg %p175
      %p182 = scmp.eq.s32.totalorder %s50, 3
      %p183 = por %p181, %p182
      %p184 = scmp.ne.s32.totalorder %s176, %s179
      %p185 = scmp.eq.s32.totalorder %s50, 0
      %p186 = por %p184, %p185
      %p187 = scmp.ne.s32.totalorder %s176, %s179
      %p188 = scmp.eq.s32.totalorder %s55, 3
      %p189 = por %p187, %p188
      %p190 = scmp.ne.s32.totalorder %s179, %s180
      %p191 = scmp.eq.s32.totalorder %s55, 0
      %p192 = por %p190, %p191
      %p193 = scmp.ne.s32.totalorder %s179, %s180
      %p194 = scmp.eq.s32.totalorder %s56, 3
      %p195 = por %p193, %p194
      %p197 = scmp.ne.s32.totalorder %s180, %s196
      %p198 = scmp.eq.s32.totalorder %s56, 0
      %p199 = por %p197, %p198
      %s200 = ssub.s32 %s58, %s65
      %p201 = scmp.eq.s32.totalorder %s200, 0
      %s203 = sadd.s32 %s202, 1
      %s204 = scalar_select %p201, %s202, %s203
      %p207 = pneg %p201
      %p208 = scmp.eq.s32.totalorder %s50, 3
      %p209 = por %p207, %p208
      %p210 = scmp.ne.s32.totalorder %s202, %s205
      %p211 = scmp.eq.s32.totalorder %s50, 0
      %p212 = por %p210, %p211
      %p213 = scmp.ne.s32.totalorder %s202, %s205
      %p214 = scmp.eq.s32.totalorder %s55, 3
      %p215 = por %p213, %p214
      %p216 = scmp.ne.s32.totalorder %s205, %s206
      %p217 = scmp.eq.s32.totalorder %s55, 0
      %p218 = por %p216, %p217
      %p219 = scmp.ne.s32.totalorder %s205, %s206
      %p220 = scmp.eq.s32.totalorder %s56, 3
      %p221 = por %p219, %p220
      %p223 = scmp.ne.s32.totalorder %s206, %s222
      %p224 = scmp.eq.s32.totalorder %s56, 0
      %p225 = por %p223, %p224
      %s226 = ssub.s32 %s58, %s65
      %p227 = scmp.eq.s32.totalorder %s226, 0
      %s229 = sadd.s32 %s228, 1
      %s230 = scalar_select %p227, %s228, %s229
      %p233 = pneg %p227
      %p234 = scmp.eq.s32.totalorder %s50, 3
      %p235 = por %p233, %p234
      %p236 = scmp.ne.s32.totalorder %s228, %s231
      %p237 = scmp.eq.s32.totalorder %s50, 0
      %p238 = por %p236, %p237
      %p239 = scmp.ne.s32.totalorder %s228, %s231
      %p240 = scmp.eq.s32.totalorder %s55, 3
      %p241 = por %p239, %p240
      %p242 = scmp.ne.s32.totalorder %s231, %s232
      %p243 = scmp.eq.s32.totalorder %s55, 0
      %p244 = por %p242, %p243
      %p245 = scmp.ne.s32.totalorder %s231, %s232
      %p246 = scmp.eq.s32.totalorder %s56, 3
      %p247 = por %p245, %p246
      %p249 = scmp.ne.s32.totalorder %s232, %s248
      %p250 = scmp.eq.s32.totalorder %s56, 0
      %p251 = por %p249, %p250
      %s252 = ssub.s32 %s58, %s65
      %p253 = scmp.eq.s32.totalorder %s252, 0
      %s255 = sadd.s32 %s254, 1
      %s256 = scalar_select %p253, %s254, %s255
      %p259 = pneg %p253
      %p260 = scmp.eq.s32.totalorder %s50, 3
      %p261 = por %p259, %p260
      %p262 = scmp.ne.s32.totalorder %s254, %s257
      %p263 = scmp.eq.s32.totalorder %s50, 0
      %p264 = por %p262, %p263
      %p265 = scmp.ne.s32.totalorder %s254, %s257
      %p266 = scmp.eq.s32.totalorder %s55, 3
      %p267 = por %p265, %p266
      %p268 = scmp.ne.s32.totalorder %s257, %s258
      %p269 = scmp.eq.s32.totalorder %s55, 0
      %p270 = por %p268, %p269
      %p271 = scmp.ne.s32.totalorder %s257, %s258
      %p272 = scmp.eq.s32.totalorder %s56, 3
      %p273 = por %p271, %p272
      %p275 = scmp.ne.s32.totalorder %s258, %s274
      %p276 = scmp.eq.s32.totalorder %s56, 0
      %p277 = por %p275, %p276
      %s278 = ssub.s32 %s58, %s65
      %p279 = scmp.eq.s32.totalorder %s278, 0
      %s281 = sadd.s32 %s280, 1
      %s282 = scalar_select %p279, %s280, %s281
      %p285 = pneg %p279
      %p286 = scmp.eq.s32.totalorder %s50, 3
      %p287 = por %p285, %p286
      %p288 = scmp.ne.s32.totalorder %s280, %s283
      %p289 = scmp.eq.s32.totalorder %s50, 0
      %p290 = por %p288, %p289
      %p291 = scmp.ne.s32.totalorder %s280, %s283
      %p292 = scmp.eq.s32.totalorder %s55, 3
      %p293 = por %p291, %p292
      %p294 = scmp.ne.s32.totalorder %s283, %s284
      %p295 = scmp.eq.s32.totalorder %s55, 0
      %p296 = por %p294, %p295
      %p297 = scmp.ne.s32.totalorder %s283, %s284
      %p298 = scmp.eq.s32.totalorder %s56, 3
      %p299 = por %p297, %p298
      %p301 = scmp.ne.s32.totalorder %s284, %s300
      %p302 = scmp.eq.s32.totalorder %s56, 0
      %p303 = por %p301, %p302
      %s304 = ssub.s32 %s58, %s65
      %p305 = scmp.eq.s32.totalorder %s304, 0
      %s307 = sadd.s32 %s306, 1
      %s308 = scalar_select %p305, %s306, %s307
      %p311 = pneg %p305
      %p312 = scmp.eq.s32.totalorder %s50, 3
      %p313 = por %p311, %p312
      %p314 = scmp.ne.s32.totalorder %s306, %s309
      %p315 = scmp.eq.s32.totalorder %s50, 0
      %p316 = por %p314, %p315
      %p317 = scmp.ne.s32.totalorder %s306, %s309
      %p318 = scmp.eq.s32.totalorder %s55, 3
      %p319 = por %p317, %p318
      %p320 = scmp.ne.s32.totalorder %s309, %s310
      %p321 = scmp.eq.s32.totalorder %s55, 0
      %p322 = por %p320, %p321
      %p323 = scmp.ne.s32.totalorder %s309, %s310
      %p324 = scmp.eq.s32.totalorder %s56, 3
      %p325 = por %p323, %p324
      %p327 = scmp.ne.s32.totalorder %s310, %s326
      %p328 = scmp.eq.s32.totalorder %s56, 0
      %p329 = por %p327, %p328
      %s330 = ssub.s32 %s58, %s65
      %p331 = scmp.eq.s32.totalorder %s330, 0
      %s333 = sadd.s32 %s332, 1
      %s334 = scalar_select %p331, %s332, %s333
      %p337 = pneg %p331
      %p338 = scmp.eq.s32.totalorder %s50, 3
      %p339 = por %p337, %p338
      %p340 = scmp.ne.s32.totalorder %s332, %s335
      %p341 = scmp.eq.s32.totalorder %s50, 0
      %p342 = por %p340, %p341
      %p343 = scmp.ne.s32.totalorder %s332, %s335
      %p344 = scmp.eq.s32.totalorder %s55, 3
      %p345 = por %p343, %p344
      %p346 = scmp.ne.s32.totalorder %s335, %s336
      %p347 = scmp.eq.s32.totalorder %s55, 0
      %p348 = por %p346, %p347
      %p349 = scmp.ne.s32.totalorder %s335, %s336
      %p350 = scmp.eq.s32.totalorder %s56, 3
      %p351 = por %p349, %p350
      %p353 = scmp.ne.s32.totalorder %s336, %s352
      %p354 = scmp.eq.s32.totalorder %s56, 0
      %p355 = por %p353, %p354
      %s356 = ssub.s32 %s58, %s65
      %p357 = scmp.eq.s32.totalorder %s356, 0
      %s359 = sadd.s32 %s358, 1
      %s360 = scalar_select %p357, %s358, %s359
      %p363 = pneg %p357
      %p364 = scmp.eq.s32.totalorder %s50, 3
      %p365 = por %p363, %p364
      %p366 = scmp.ne.s32.totalorder %s358, %s361
      %p367 = scmp.eq.s32.totalorder %s50, 0
      %p368 = por %p366, %p367
      %p369 = scmp.ne.s32.totalorder %s358, %s361
      %p370 = scmp.eq.s32.totalorder %s55, 3
      %p371 = por %p369, %p370
      %p372 = scmp.ne.s32.totalorder %s361, %s362
      %p373 = scmp.eq.s32.totalorder %s55, 0
      %p374 = por %p372, %p373
      %p375 = scmp.ne.s32.totalorder %s361, %s362
      %p376 = scmp.eq.s32.totalorder %s56, 3
      %p377 = por %p375, %p376
      %p379 = scmp.ne.s32.totalorder %s362, %s378
      %p380 = scmp.eq.s32.totalorder %s56, 0
      %p381 = por %p379, %p380
      %s382 = ssub.s32 %s58, %s65
      %p383 = scmp.eq.s32.totalorder %s382, 0
      %s385 = sadd.s32 %s384, 1
      %s386 = scalar_select %p383, %s384, %s385
      %p389 = pneg %p383
      %p390 = scmp.eq.s32.totalorder %s50, 3
      %p391 = por %p389, %p390
      %p392 = scmp.ne.s32.totalorder %s384, %s387
      %p393 = scmp.eq.s32.totalorder %s50, 0
      %p394 = por %p392, %p393
      %p395 = scmp.ne.s32.totalorder %s384, %s387
      %p396 = scmp.eq.s32.totalorder %s55, 3
      %p397 = por %p395, %p396
      %p398 = scmp.ne.s32.totalorder %s387, %s388
      %p399 = scmp.eq.s32.totalorder %s55, 0
      %p400 = por %p398, %p399
      %p401 = scmp.ne.s32.totalorder %s387, %s388
      %p402 = scmp.eq.s32.totalorder %s56, 3
      %p403 = por %p401, %p402
      %p405 = scmp.ne.s32.totalorder %s388, %s404
      %p406 = scmp.eq.s32.totalorder %s56, 0
      %p407 = por %p405, %p406
      %s408 = ssub.s32 %s58, %s65
      %p409 = scmp.eq.s32.totalorder %s408, 0
      %s411 = sadd.s32 %s410, 1
      %s412 = scalar_select %p409, %s410, %s411
      %p415 = pneg %p409
      %p416 = scmp.eq.s32.totalorder %s50, 3
      %p417 = por %p415, %p416
      %p418 = scmp.ne.s32.totalorder %s410, %s413
      %p419 = scmp.eq.s32.totalorder %s50, 0
      %p420 = por %p418, %p419
      %p421 = scmp.ne.s32.totalorder %s410, %s413
      %p422 = scmp.eq.s32.totalorder %s55, 3
      %p423 = por %p421, %p422
      %p424 = scmp.ne.s32.totalorder %s413, %s414
      %p425 = scmp.eq.s32.totalorder %s55, 0
      %p426 = por %p424, %p425
      %p427 = scmp.ne.s32.totalorder %s413, %s414
      %p428 = scmp.eq.s32.totalorder %s56, 3
      %p429 = por %p427, %p428
      %p431 = scmp.ne.s32.totalorder %s414, %s430
      %p432 = scmp.eq.s32.totalorder %s56, 0
      %p433 = por %p431, %p432
      %s435 = sadd.s32 %s434, 1
      %p438 = scmp.eq.s32.totalorder %s50, 3
      %p439 = scmp.ne.s32.totalorder %s434, %s436
      %p440 = scmp.eq.s32.totalorder %s50, 0
      %p441 = por %p439, %p440
      %p442 = scmp.ne.s32.totalorder %s434, %s436
      %p443 = scmp.eq.s32.totalorder %s55, 3
      %p444 = por %p442, %p443
      %p445 = scmp.ne.s32.totalorder %s436, %s437
      %p446 = scmp.eq.s32.totalorder %s55, 0
      %p447 = por %p445, %p446
      %p448 = scmp.ne.s32.totalorder %s436, %s437
      %p449 = scmp.eq.s32.totalorder %s56, 3
      %p450 = por %p448, %p449
      %p452 = scmp.ne.s32.totalorder %s437, %s451
      %p453 = scmp.eq.s32.totalorder %s56, 0
      %p454 = por %p452, %p453
      %s456 = sadd.s32 %s455, 1
      %p459 = scmp.eq.s32.totalorder %s50, 3
      %p460 = scmp.ne.s32.totalorder %s455, %s457
      %p461 = scmp.eq.s32.totalorder %s50, 0
      %p462 = por %p460, %p461
      %p463 = scmp.ne.s32.totalorder %s455, %s457
      %p464 = scmp.eq.s32.totalorder %s55, 3
      %p465 = por %p463, %p464
      %p466 = scmp.ne.s32.totalorder %s457, %s458
      %p467 = scmp.eq.s32.totalorder %s55, 0
      %p468 = por %p466, %p467
      %p469 = scmp.ne.s32.totalorder %s457, %s458
      %p470 = scmp.eq.s32.totalorder %s56, 3
      %p471 = por %p469, %p470
      %p473 = scmp.ne.s32.totalorder %s458, %s472
      %p474 = scmp.eq.s32.totalorder %s56, 0
      %p475 = por %p473, %p474
      %s477 = sadd.s32 %s476, 1
      %p480 = scmp.eq.s32.totalorder %s50, 3
      %p481 = scmp.ne.s32.totalorder %s476, %s478
      %p482 = scmp.eq.s32.totalorder %s50, 0
      %p483 = por %p481, %p482
      %p484 = scmp.ne.s32.totalorder %s476, %s478
      %p485 = scmp.eq.s32.totalorder %s55, 3
      %p486 = por %p484, %p485
      %p487 = scmp.ne.s32.totalorder %s478, %s479
      %p488 = scmp.eq.s32.totalorder %s55, 0
      %p489 = por %p487, %p488
      %p490 = scmp.ne.s32.totalorder %s478, %s479
      %p491 = scmp.eq.s32.totalorder %s56, 3
      %p492 = por %p490, %p491
      %p494 = scmp.ne.s32.totalorder %s479, %s493
      %p495 = scmp.eq.s32.totalorder %s56, 0
      %p496 = por %p494, %p495
      %s498 = sadd.s32 %s497, 1
      %p501 = scmp.eq.s32.totalorder %s50, 3
      %p502 = scmp.ne.s32.totalorder %s497, %s499
      %p503 = scmp.eq.s32.totalorder %s50, 0
      %p504 = por %p502, %p503
      %p505 = scmp.ne.s32.totalorder %s497, %s499
      %p506 = scmp.eq.s32.totalorder %s55, 3
      %p507 = por %p505, %p506
      %p508 = scmp.ne.s32.totalorder %s499, %s500
      %p509 = scmp.eq.s32.totalorder %s55, 0
      %p510 = por %p508, %p509
      %p511 = scmp.ne.s32.totalorder %s499, %s500
      %p512 = scmp.eq.s32.totalorder %s56, 3
      %p513 = por %p511, %p512
      %p515 = scmp.ne.s32.totalorder %s500, %s514
      %p516 = scmp.eq.s32.totalorder %s56, 0
      %p517 = por %p515, %p516
      %s519 = sadd.s32 %s518, 1
      %p522 = scmp.eq.s32.totalorder %s50, 3
      %p523 = scmp.ne.s32.totalorder %s518, %s520
      %p524 = scmp.eq.s32.totalorder %s50, 0
      %p525 = por %p523, %p524
      %p526 = scmp.ne.s32.totalorder %s518, %s520
      %p527 = scmp.eq.s32.totalorder %s55, 3
      %p528 = por %p526, %p527
      %p529 = scmp.ne.s32.totalorder %s520, %s521
      %p530 = scmp.eq.s32.totalorder %s55, 0
      %p531 = por %p529, %p530
      %p532 = scmp.ne.s32.totalorder %s520, %s521
      %p533 = scmp.eq.s32.totalorder %s56, 3
      %p534 = por %p532, %p533
      %p536 = scmp.ne.s32.totalorder %s521, %s535
      %p537 = scmp.eq.s32.totalorder %s56, 0
      %p538 = por %p536, %p537
      %s540 = sadd.s32 %s539, 1
      %p543 = scmp.eq.s32.totalorder %s50, 3
      %p544 = scmp.ne.s32.totalorder %s539, %s541
      %p545 = scmp.eq.s32.totalorder %s50, 0
      %p546 = por %p544, %p545
      %p547 = scmp.ne.s32.totalorder %s539, %s541
      %p548 = scmp.eq.s32.totalorder %s55, 3
      %p549 = por %p547, %p548
      %p550 = scmp.ne.s32.totalorder %s541, %s542
      %p551 = scmp.eq.s32.totalorder %s55, 0
      %p552 = por %p550, %p551
      %p553 = scmp.ne.s32.totalorder %s541, %s542
      %p554 = scmp.eq.s32.totalorder %s56, 3
      %p555 = por %p553, %p554
      %p557 = scmp.ne.s32.totalorder %s542, %s556
      %p558 = scmp.eq.s32.totalorder %s56, 0
      %p559 = por %p557, %p558
      %s560 = ssub.s32 %s57, %s69
      %p561 = scmp.eq.s32.totalorder %s560, 0
      %s563 = sadd.s32 %s562, 1
      %s564 = scalar_select %p561, %s562, %s563
      %p567 = pneg %p561
      %p568 = scmp.eq.s32.totalorder %s50, 3
      %p569 = por %p567, %p568
      %p570 = scmp.ne.s32.totalorder %s562, %s565
      %p571 = scmp.eq.s32.totalorder %s50, 0
      %p572 = por %p570, %p571
      %p573 = scmp.ne.s32.totalorder %s562, %s565
      %p574 = scmp.eq.s32.totalorder %s55, 3
      %p575 = por %p573, %p574
      %p576 = scmp.ne.s32.totalorder %s565, %s566
      %p577 = scmp.eq.s32.totalorder %s55, 0
      %p578 = por %p576, %p577
      %p579 = scmp.ne.s32.totalorder %s565, %s566
      %p580 = scmp.eq.s32.totalorder %s56, 3
      %p581 = por %p579, %p580
      %p583 = scmp.ne.s32.totalorder %s566, %s582
      %p584 = scmp.eq.s32.totalorder %s56, 0
      %p585 = por %p583, %p584
      %p586 = scmp.le.s32.totalorder 1, %s50
      %p587 = scmp.lt.s32.totalorder %s50, 5
      %p588 = pnand %p586, %p587
      %p589 = pneg %p588
      // Predicated region
      $region9: #{tpu_custom_call.1} parent=5 // pred_check
        _
      $region10: #{tpu_custom_call.1} parent=5 // pred_check_branch
        %591 = sbr.rel (%p588) target = $region12
      $region11: #{tpu_custom_call.1} parent=5 // pred_region
        %s592 = ssub.s32 %s50, 1
        // Predicated region
        $region13: #{tpu_custom_call.1} parent=11 // pred_check
          %p593 = pneg %p447
        $region14: #{tpu_custom_call.1} parent=11 // pred_check_branch
          %595 = sbr.rel (%p593) target = $region16
        $region15: #{tpu_custom_call.1} parent=11 // pred_region
          _
        $region16: #{tpu_custom_call.1} parent=11 // pred_fallthru
          _
        // Predicated region
        $region17: #{tpu_custom_call.1} parent=11 // pred_check
          %p596 = pneg %p468
        $region18: #{tpu_custom_call.1} parent=11 // pred_check_branch
          %598 = sbr.rel (%p596) target = $region20
        $region19: #{tpu_custom_call.1} parent=11 // pred_region
          %s600 = ssub.s32 16, 16
          %601 = vsyncadd [#allocation23], %s600
          %s603 = sshll.u32 [#allocation22], 4
          %s604 = int_to_ptr.vmem [resolvable:$true] %s603
          %606 = dma.hbm_to_vmem [thread:$0]  %s15, 16, %s604, [#allocation23]
        $region20: #{tpu_custom_call.1} parent=11 // pred_fallthru
          _
        // Predicated region
        $region21: #{tpu_custom_call.1} parent=11 // pred_check
          %p607 = pneg %p489
        $region22: #{tpu_custom_call.1} parent=11 // pred_check_branch
          %609 = sbr.rel (%p607) target = $region24
        $region23: #{tpu_custom_call.1} parent=11 // pred_region
          %s611 = ssub.s32 16, 16
          %612 = vsyncadd [#allocation23], %s611
          %s614 = sshll.u32 [#allocation24], 4
          %s615 = int_to_ptr.vmem [resolvable:$true] %s614
          %617 = dma.hbm_to_vmem [thread:$0]  %s16, 16, %s615, [#allocation23]
        $region24: #{tpu_custom_call.1} parent=11 // pred_fallthru
          _
        // Predicated region
        $region25: #{tpu_custom_call.1} parent=11 // pred_check
          %p618 = pneg %p510
        $region26: #{tpu_custom_call.1} parent=11 // pred_check_branch
          %620 = sbr.rel (%p618) target = $region28
        $region27: #{tpu_custom_call.1} parent=11 // pred_region
          _
        $region28: #{tpu_custom_call.1} parent=11 // pred_fallthru
          _
        // Predicated region
        $region29: #{tpu_custom_call.1} parent=11 // pred_check
          %p621 = pneg %p531
        $region30: #{tpu_custom_call.1} parent=11 // pred_check_branch
          %623 = sbr.rel (%p621) target = $region32
        $region31: #{tpu_custom_call.1} parent=11 // pred_region
          _
        $region32: #{tpu_custom_call.1} parent=11 // pred_fallthru
          _
        // Predicated region
        $region33: #{tpu_custom_call.1} parent=11 // pred_check
          %p624 = pneg %p552
        $region34: #{tpu_custom_call.1} parent=11 // pred_check_branch
          %626 = sbr.rel (%p624) target = $region36
        $region35: #{tpu_custom_call.1} parent=11 // pred_region
          _
        $region36: #{tpu_custom_call.1} parent=11 // pred_fallthru
          _
      $region12: #{tpu_custom_call.1} parent=5 // pred_fallthru
        _
      %p627 = scmp.lt.s32.totalorder %s50, 4
      // Predicated region
      $region37: #{tpu_custom_call.1} parent=5 // pred_check
        %p628 = pneg %p627
      $region38: #{tpu_custom_call.1} parent=5 // pred_check_branch
        %630 = sbr.rel (%p628) target = $region40
      $region39: #{tpu_custom_call.1} parent=5 // pred_region
        // Predicated region
        $region41: #{tpu_custom_call.1} parent=39 // pred_check
          %p631 = pneg %p82
        $region42: #{tpu_custom_call.1} parent=39 // pred_check_branch
          %633 = sbr.rel (%p631) target = $region44
        $region43: #{tpu_custom_call.1} parent=39 // pred_region
          %p634 = scmp.lt.s32.totalorder %s57, 1
          %s635 = scalar_select %p634, %s57, 1
          %s636 = smul.addr %s635, 2
          %s637 = smul.addr %s636, 8
          %s638 = scalar_lea.vmem %s0, %s637
        $region44: #{tpu_custom_call.1} parent=39 // pred_fallthru
          _
        // Predicated region
        $region45: #{tpu_custom_call.1} parent=39 // pred_check
          %p639 = pneg %p108
        $region46: #{tpu_custom_call.1} parent=39 // pred_check_branch
          %641 = sbr.rel (%p639) target = $region48
        $region47: #{tpu_custom_call.1} parent=39 // pred_region
          %p642 = scmp.lt.s32.totalorder %s57, 1
          %s643 = scalar_select %p642, %s57, 1
          %s644 = smul.addr %s643, 8
          %s645 = smul.addr %s644, 4
          %s646 = scalar_lea.vmem %s1, %s645
        $region48: #{tpu_custom_call.1} parent=39 // pred_fallthru
          _
        // Predicated region
        $region49: #{tpu_custom_call.1} parent=39 // pred_check
          %p647 = pneg %p134
        $region50: #{tpu_custom_call.1} parent=39 // pred_check_branch
          %649 = sbr.rel (%p647) target = $region52
        $region51: #{tpu_custom_call.1} parent=39 // pred_region
          %s650 = sand.u32 %s124, 1
          %s651 = scalar_lea.sflag [#allocation5], %s650
          %s652 = sand.u32 %s124, 1
          %s653 = scalar_lea.vmem [#allocation4], %s652
          %s655 = ssub.s32 16, 16
          %656 = vsyncadd %s651, %s655
          %s657 = smul.addr %s58, 16
          %s658 = scalar_lea.hbm %s2, %s657
          %s660 = sshll.u32 %s653, 4
          %s661 = int_to_ptr.vmem [resolvable:$true] %s660
          %663 = dma.hbm_to_vmem [thread:$0]  %s658, 16, %s661, %s651
        $region52: #{tpu_custom_call.1} parent=39 // pred_fallthru
          _
        // Predicated region
        $region53: #{tpu_custom_call.1} parent=39 // pred_check
          %p664 = pneg %p160
        $region54: #{tpu_custom_call.1} parent=39 // pred_check_branch
          %666 = sbr.rel (%p664) target = $region56
        $region55: #{tpu_custom_call.1} parent=39 // pred_region
          %s667 = sand.u32 %s50, 1
          %s668 = scalar_lea.sflag [#allocation8], %s667
          %s669 = sand.u32 %s150, 1
          %s670 = scalar_lea.vmem [#allocation7], %s669
          %s672 = ssub.s32 16, 16
          %673 = vsyncadd %s668, %s672
          %s674 = smul.addr %s58, 16
          %s675 = scalar_lea.hbm %s3, %s674
          %s677 = sshll.u32 %s670, 4
          %s678 = int_to_ptr.vmem [resolvable:$true] %s677
          %680 = dma.hbm_to_vmem [thread:$0]  %s675, 16, %s678, %s668
        $region56: #{tpu_custom_call.1} parent=39 // pred_fallthru
          _
        // Predicated region
        $region57: #{tpu_custom_call.1} parent=39 // pred_check
          %p681 = pneg %p186
        $region58: #{tpu_custom_call.1} parent=39 // pred_check_branch
          %683 = sbr.rel (%p681) target = $region60
        $region59: #{tpu_custom_call.1} parent=39 // pred_region
          %s684 = sand.u32 %s50, 1
          %s685 = scalar_lea.sflag [#allocation8], %s684
          %s686 = sand.u32 %s176, 1
          %s687 = smul.addr %s686, 16
          %s688 = scalar_lea.vmem [#allocation9], %s687
          %s690 = ssub.s32 256, 256
          %691 = vsyncadd %s685, %s690
          %s692 = smul.addr %s58, 4
          %s693 = smul.addr %s692, 64
          %s694 = scalar_lea.hbm %s4, %s693
          %s695 = sshll.u32 %s688, 4
          %s696 = int_to_ptr.vmem [resolvable:$true] %s695
          %701 = dma.hbm_to_vmem [thread:$0]  %s694, 256, %s696, %s685, 64, 64, 4
        $region60: #{tpu_custom_call.1} parent=39 // pred_fallthru
          _
        // Predicated region
        $region61: #{tpu_custom_call.1} parent=39 // pred_check
          %p702 = pneg %p212
        $region62: #{tpu_custom_call.1} parent=39 // pred_check_branch
          %704 = sbr.rel (%p702) target = $region64
        $region63: #{tpu_custom_call.1} parent=39 // pred_region
          %s705 = sand.u32 %s50, 1
          %s706 = scalar_lea.sflag [#allocation11], %s705
          %s707 = sand.u32 %s202, 1
          %s708 = scalar_lea.vmem [#allocation10], %s707
          %s710 = ssub.s32 16, 16
          %711 = vsyncadd %s706, %s710
          %s712 = smul.addr %s58, 16
          %s713 = scalar_lea.hbm %s5, %s712
          %s715 = sshll.u32 %s708, 4
          %s716 = int_to_ptr.vmem [resolvable:$true] %s715
          %718 = dma.hbm_to_vmem [thread:$0]  %s713, 16, %s716, %s706
        $region64: #{tpu_custom_call.1} parent=39 // pred_fallthru
          _
        // Predicated region
        $region65: #{tpu_custom_call.1} parent=39 // pred_check
          %p719 = pneg %p238
        $region66: #{tpu_custom_call.1} parent=39 // pred_check_branch
          %721 = sbr.rel (%p719) target = $region68
        $region67: #{tpu_custom_call.1} parent=39 // pred_region
          %s722 = sand.u32 %s50, 1
          %s723 = scalar_lea.sflag [#allocation11], %s722
          %s724 = sand.u32 %s228, 1
          %s725 = smul.addr %s724, 16
          %s726 = scalar_lea.vmem [#allocation12], %s725
          %s728 = ssub.s32 256, 256
          %729 = vsyncadd %s723, %s728
          %s730 = smul.addr %s58, 4
          %s731 = smul.addr %s730, 64
          %s732 = scalar_lea.hbm %s6, %s731
          %s733 = sshll.u32 %s726, 4
          %s734 = int_to_ptr.vmem [resolvable:$true] %s733
          %739 = dma.hbm_to_vmem [thread:$0]  %s732, 256, %s734, %s723, 64, 64, 4
        $region68: #{tpu_custom_call.1} parent=39 // pred_fallthru
          _
        // Predicated region
        $region69: #{tpu_custom_call.1} parent=39 // pred_check
          %p740 = pneg %p264
        $region70: #{tpu_custom_call.1} parent=39 // pred_check_branch
          %742 = sbr.rel (%p740) target = $region72
        $region71: #{tpu_custom_call.1} parent=39 // pred_region
          %s743 = sand.u32 %s50, 1
          %s744 = scalar_lea.sflag [#allocation14], %s743
          %s745 = sand.u32 %s254, 1
          %s746 = scalar_lea.vmem [#allocation13], %s745
          %s748 = ssub.s32 16, 16
          %749 = vsyncadd %s744, %s748
          %s750 = smul.addr %s58, 16
          %s751 = scalar_lea.hbm %s7, %s750
          %s753 = sshll.u32 %s746, 4
          %s754 = int_to_ptr.vmem [resolvable:$true] %s753
          %756 = dma.hbm_to_vmem [thread:$0]  %s751, 16, %s754, %s744
        $region72: #{tpu_custom_call.1} parent=39 // pred_fallthru
          _
        // Predicated region
        $region73: #{tpu_custom_call.1} parent=39 // pred_check
          %p757 = pneg %p290
        $region74: #{tpu_custom_call.1} parent=39 // pred_check_branch
          %759 = sbr.rel (%p757) target = $region76
        $region75: #{tpu_custom_call.1} parent=39 // pred_region
          %s760 = sand.u32 %s50, 1
          %s761 = scalar_lea.sflag [#allocation14], %s760
          %s762 = sand.u32 %s280, 1
          %s763 = scalar_lea.vmem [#allocation15], %s762
          %s765 = ssub.s32 16, 16
          %766 = vsyncadd %s761, %s765
          %s767 = smul.addr %s58, 16
          %s768 = scalar_lea.hbm %s8, %s767
          %s770 = sshll.u32 %s763, 4
          %s771 = int_to_ptr.vmem [resolvable:$true] %s770
          %773 = dma.hbm_to_vmem [thread:$0]  %s768, 16, %s771, %s761
        $region76: #{tpu_custom_call.1} parent=39 // pred_fallthru
          _
        // Predicated region
        $region77: #{tpu_custom_call.1} parent=39 // pred_check
          %p774 = pneg %p316
        $region78: #{tpu_custom_call.1} parent=39 // pred_check_branch
          %776 = sbr.rel (%p774) target = $region80
        $region79: #{tpu_custom_call.1} parent=39 // pred_region
          %s777 = sand.u32 %s50, 1
          %s778 = scalar_lea.sflag [#allocation17], %s777
          %s779 = sand.u32 %s306, 1
          %s780 = scalar_lea.vmem [#allocation16], %s779
          %s782 = ssub.s32 16, 16
          %783 = vsyncadd %s778, %s782
          %s784 = smul.addr %s58, 16
          %s785 = scalar_lea.hbm %s9, %s784
          %s787 = sshll.u32 %s780, 4
          %s788 = int_to_ptr.vmem [resolvable:$true] %s787
          %790 = dma.hbm_to_vmem [thread:$0]  %s785, 16, %s788, %s778
        $region80: #{tpu_custom_call.1} parent=39 // pred_fallthru
          _
        // Predicated region
        $region81: #{tpu_custom_call.1} parent=39 // pred_check
          %p791 = pneg %p342
        $region82: #{tpu_custom_call.1} parent=39 // pred_check_branch
          %793 = sbr.rel (%p791) target = $region84
        $region83: #{tpu_custom_call.1} parent=39 // pred_region
          %s794 = sand.u32 %s50, 1
          %s795 = scalar_lea.sflag [#allocation17], %s794
          %s796 = sand.u32 %s332, 1
          %s797 = smul.addr %s796, 16
          %s798 = scalar_lea.vmem [#allocation18], %s797
          %s800 = ssub.s32 256, 256
          %801 = vsyncadd %s795, %s800
          %s802 = smul.addr %s58, 4
          %s803 = smul.addr %s802, 64
          %s804 = scalar_lea.hbm %s10, %s803
          %s805 = sshll.u32 %s798, 4
          %s806 = int_to_ptr.vmem [resolvable:$true] %s805
          %811 = dma.hbm_to_vmem [thread:$0]  %s804, 256, %s806, %s795, 64, 64, 4
        $region84: #{tpu_custom_call.1} parent=39 // pred_fallthru
          _
        // Predicated region
        $region85: #{tpu_custom_call.1} parent=39 // pred_check
          %p812 = pneg %p368
        $region86: #{tpu_custom_call.1} parent=39 // pred_check_branch
          %814 = sbr.rel (%p812) target = $region88
        $region87: #{tpu_custom_call.1} parent=39 // pred_region
          %s815 = sand.u32 %s50, 1
          %s816 = scalar_lea.sflag [#allocation20], %s815
          %s817 = sand.u32 %s358, 1
          %s818 = scalar_lea.vmem [#allocation19], %s817
          %s820 = ssub.s32 16, 16
          %821 = vsyncadd %s816, %s820
          %s822 = smul.addr %s58, 16
          %s823 = scalar_lea.hbm %s11, %s822
          %s825 = sshll.u32 %s818, 4
          %s826 = int_to_ptr.vmem [resolvable:$true] %s825
          %828 = dma.hbm_to_vmem [thread:$0]  %s823, 16, %s826, %s816
        $region88: #{tpu_custom_call.1} parent=39 // pred_fallthru
          _
        // Predicated region
        $region89: #{tpu_custom_call.1} parent=39 // pred_check
          %p829 = pneg %p394
        $region90: #{tpu_custom_call.1} parent=39 // pred_check_branch
          %831 = sbr.rel (%p829) target = $region92
        $region91: #{tpu_custom_call.1} parent=39 // pred_region
          %p832 = scmp.lt.s32.totalorder %s58, 1
          %s833 = scalar_select %p832, %s58, 1
          %s834 = smul.addr %s833, 8
          %s835 = smul.addr %s834, 4
          %s836 = scalar_lea.vmem %s12, %s835
        $region92: #{tpu_custom_call.1} parent=39 // pred_fallthru
          _
        // Predicated region
        $region93: #{tpu_custom_call.1} parent=39 // pred_check
          %p837 = pneg %p420
        $region94: #{tpu_custom_call.1} parent=39 // pred_check_branch
          %839 = sbr.rel (%p837) target = $region96
        $region95: #{tpu_custom_call.1} parent=39 // pred_region
          %s840 = sand.u32 %s50, 1
          %s841 = scalar_lea.sflag [#allocation20], %s840
          %s842 = sand.u32 %s410, 1
          %s843 = scalar_lea.vmem [#allocation21], %s842
          %s845 = ssub.s32 16, 16
          %846 = vsyncadd %s841, %s845
          %s847 = smul.addr %s58, 16
          %s848 = scalar_lea.hbm %s13, %s847
          %s850 = sshll.u32 %s843, 4
          %s851 = int_to_ptr.vmem [resolvable:$true] %s850
          %853 = dma.hbm_to_vmem [thread:$0]  %s848, 16, %s851, %s841
        $region96: #{tpu_custom_call.1} parent=39 // pred_fallthru
          _
      $region40: #{tpu_custom_call.1} parent=5 // pred_fallthru
        _
      %p854 = scmp.le.s32.totalorder 1, %s50
      %p855 = scmp.lt.s32.totalorder %s50, 5
      %p856 = pnand %p854, %p855
      %p857 = pneg %p856
      // Predicated region
      $region97: #{tpu_custom_call.1} parent=5 // pred_check
        _
      $region98: #{tpu_custom_call.1} parent=5 // pred_check_branch
        %859 = sbr.rel (%p856) target = $region100
      $region99: #{tpu_custom_call.1} parent=5 // pred_region
        %s860 = ssub.s32 %s50, 1
        %s861 = sand.u32 %s127, 1
        %s862 = scalar_lea.sflag [#allocation5], %s861
        %s863 = sand.u32 %s127, 1
        %s864 = scalar_lea.vmem [#allocation4], %s863
        // Predicated region
        $region101: #{tpu_custom_call.1} parent=99 // pred_check
          %p865 = pneg %p140
        $region102: #{tpu_custom_call.1} parent=99 // pred_check_branch
          %867 = sbr.rel (%p865) target = $region104
        $region103: #{tpu_custom_call.1} parent=99 // pred_region
          %868 = dma.done %s862, 16
        $region104: #{tpu_custom_call.1} parent=99 // pred_fallthru
          _
        %s869 = sand.u32 %s55, 1
        %s870 = scalar_lea.sflag [#allocation8], %s869
        %s871 = sand.u32 %s153, 1
        %s872 = scalar_lea.vmem [#allocation7], %s871
        // Predicated region
        $region105: #{tpu_custom_call.1} parent=99 // pred_check
          %p873 = pneg %p166
        $region106: #{tpu_custom_call.1} parent=99 // pred_check_branch
          %875 = sbr.rel (%p873) target = $region108
        $region107: #{tpu_custom_call.1} parent=99 // pred_region
          %876 = dma.done %s870, 16
        $region108: #{tpu_custom_call.1} parent=99 // pred_fallthru
          _
        %s877 = sand.u32 %s55, 1
        %s878 = scalar_lea.sflag [#allocation8], %s877
        %s879 = sand.u32 %s179, 1
        %s880 = smul.addr %s879, 16
        %s881 = scalar_lea.vmem [#allocation9], %s880
        // Predicated region
        $region109: #{tpu_custom_call.1} parent=99 // pred_check
          %p882 = pneg %p192
        $region110: #{tpu_custom_call.1} parent=99 // pred_check_branch
          %884 = sbr.rel (%p882) target = $region112
        $region111: #{tpu_custom_call.1} parent=99 // pred_region
          %885 = dma.done %s878, 256
        $region112: #{tpu_custom_call.1} parent=99 // pred_fallthru
          _
        %s886 = sand.u32 %s55, 1
        %s887 = scalar_lea.sflag [#allocation11], %s886
        %s888 = sand.u32 %s205, 1
        %s889 = scalar_lea.vmem [#allocation10], %s888
        // Predicated region
        $region113: #{tpu_custom_call.1} parent=99 // pred_check
          %p890 = pneg %p218
        $region114: #{tpu_custom_call.1} parent=99 // pred_check_branch
          %892 = sbr.rel (%p890) target = $region116
        $region115: #{tpu_custom_call.1} parent=99 // pred_region
          %893 = dma.done %s887, 16
        $region116: #{tpu_custom_call.1} parent=99 // pred_fallthru
          _
        %s894 = sand.u32 %s55, 1
        %s895 = scalar_lea.sflag [#allocation11], %s894
        %s896 = sand.u32 %s231, 1
        %s897 = smul.addr %s896, 16
        %s898 = scalar_lea.vmem [#allocation12], %s897
        // Predicated region
        $region117: #{tpu_custom_call.1} parent=99 // pred_check
          %p899 = pneg %p244
        $region118: #{tpu_custom_call.1} parent=99 // pred_check_branch
          %901 = sbr.rel (%p899) target = $region120
        $region119: #{tpu_custom_call.1} parent=99 // pred_region
          %902 = dma.done %s895, 256
        $region120: #{tpu_custom_call.1} parent=99 // pred_fallthru
          _
        %s903 = sand.u32 %s55, 1
        %s904 = scalar_lea.sflag [#allocation14], %s903
        %s905 = sand.u32 %s257, 1
        %s906 = scalar_lea.vmem [#allocation13], %s905
        // Predicated region
        $region121: #{tpu_custom_call.1} parent=99 // pred_check
          %p907 = pneg %p270
        $region122: #{tpu_custom_call.1} parent=99 // pred_check_branch
          %909 = sbr.rel (%p907) target = $region124
        $region123: #{tpu_custom_call.1} parent=99 // pred_region
          %910 = dma.done %s904, 16
        $region124: #{tpu_custom_call.1} parent=99 // pred_fallthru
          _
        %s911 = sand.u32 %s55, 1
        %s912 = scalar_lea.sflag [#allocation14], %s911
        %s913 = sand.u32 %s283, 1
        %s914 = scalar_lea.vmem [#allocation15], %s913
        // Predicated region
        $region125: #{tpu_custom_call.1} parent=99 // pred_check
          %p915 = pneg %p296
        $region126: #{tpu_custom_call.1} parent=99 // pred_check_branch
          %917 = sbr.rel (%p915) target = $region128
        $region127: #{tpu_custom_call.1} parent=99 // pred_region
          %918 = dma.done %s912, 16
        $region128: #{tpu_custom_call.1} parent=99 // pred_fallthru
          _
        %s919 = sand.u32 %s55, 1
        %s920 = scalar_lea.sflag [#allocation17], %s919
        %s921 = sand.u32 %s309, 1
        %s922 = scalar_lea.vmem [#allocation16], %s921
        // Predicated region
        $region129: #{tpu_custom_call.1} parent=99 // pred_check
          %p923 = pneg %p322
        $region130: #{tpu_custom_call.1} parent=99 // pred_check_branch
          %925 = sbr.rel (%p923) target = $region132
        $region131: #{tpu_custom_call.1} parent=99 // pred_region
          %926 = dma.done %s920, 16
        $region132: #{tpu_custom_call.1} parent=99 // pred_fallthru
          _
        %s927 = sand.u32 %s55, 1
        %s928 = scalar_lea.sflag [#allocation17], %s927
        %s929 = sand.u32 %s335, 1
        %s930 = smul.addr %s929, 16
        %s931 = scalar_lea.vmem [#allocation18], %s930
        // Predicated region
        $region133: #{tpu_custom_call.1} parent=99 // pred_check
          %p932 = pneg %p348
        $region134: #{tpu_custom_call.1} parent=99 // pred_check_branch
          %934 = sbr.rel (%p932) target = $region136
        $region135: #{tpu_custom_call.1} parent=99 // pred_region
          %935 = dma.done %s928, 256
        $region136: #{tpu_custom_call.1} parent=99 // pred_fallthru
          _
        %s936 = sand.u32 %s55, 1
        %s937 = scalar_lea.sflag [#allocation20], %s936
        %s938 = sand.u32 %s361, 1
        %s939 = scalar_lea.vmem [#allocation19], %s938
        // Predicated region
        $region137: #{tpu_custom_call.1} parent=99 // pred_check
          %p940 = pneg %p374
        $region138: #{tpu_custom_call.1} parent=99 // pred_check_branch
          %942 = sbr.rel (%p940) target = $region140
        $region139: #{tpu_custom_call.1} parent=99 // pred_region
          %943 = dma.done %s937, 16
        $region140: #{tpu_custom_call.1} parent=99 // pred_fallthru
          _
        %s944 = sand.u32 %s55, 1
        %s945 = scalar_lea.sflag [#allocation20], %s944
        %s946 = sand.u32 %s413, 1
        %s947 = scalar_lea.vmem [#allocation21], %s946
        // Predicated region
        $region141: #{tpu_custom_call.1} parent=99 // pred_check
          %p948 = pneg %p426
        $region142: #{tpu_custom_call.1} parent=99 // pred_check_branch
          %950 = sbr.rel (%p948) target = $region144
        $region143: #{tpu_custom_call.1} parent=99 // pred_region
          %951 = dma.done %s945, 16
        $region144: #{tpu_custom_call.1} parent=99 // pred_fallthru
          _
        // Predicated region
        $region145: #{tpu_custom_call.1} parent=99 // pred_check
          %p952 = pneg %p468
        $region146: #{tpu_custom_call.1} parent=99 // pred_check_branch
          %954 = sbr.rel (%p952) target = $region148
        $region147: #{tpu_custom_call.1} parent=99 // pred_region
          %955 = dma.done [#allocation23], 16
        $region148: #{tpu_custom_call.1} parent=99 // pred_fallthru
          _
        // Predicated region
        $region149: #{tpu_custom_call.1} parent=99 // pred_check
          %p956 = pneg %p489
        $region150: #{tpu_custom_call.1} parent=99 // pred_check_branch
          %958 = sbr.rel (%p956) target = $region152
        $region151: #{tpu_custom_call.1} parent=99 // pred_region
          %959 = dma.done [#allocation23], 16
        $region152: #{tpu_custom_call.1} parent=99 // pred_fallthru
          _
        %p960 = scmp.lt.s32.totalorder %s59, 1
        %s961 = scalar_select %p960, %s59, 1
        %s962 = smul.addr %s961, 2
        %s963 = smul.addr %s962, 8
        %s964 = scalar_lea.vmem %s0, %s963
        %p965 = pneg %p88
        %p966 = pneg %p85
        %p967 = scmp.lt.s32.totalorder %s59, 1
        %s968 = scalar_select %p967, %s59, 1
        %s969 = smul.addr %s968, 8
        %s970 = smul.addr %s969, 4
        %s971 = scalar_lea.vmem %s1, %s970
        %p972 = pneg %p114
        %p973 = pneg %p111
        %s974 = sand.u32 %s127, 1
        %s975 = scalar_lea.sflag [#allocation5], %s974
        %s976 = sand.u32 %s127, 1
        %s977 = scalar_lea.vmem [#allocation4], %s976
        %p978 = pneg %p140
        %p979 = pneg %p137
        %s980 = sand.u32 %s55, 1
        %s981 = scalar_lea.sflag [#allocation8], %s980
        %s982 = sand.u32 %s153, 1
        %s983 = scalar_lea.vmem [#allocation7], %s982
        %p984 = pneg %p166
        %p985 = pneg %p163
        %s986 = sand.u32 %s55, 1
        %s987 = scalar_lea.sflag [#allocation8], %s986
        %s988 = sand.u32 %s179, 1
        %s989 = smul.addr %s988, 16
        %s990 = scalar_lea.vmem [#allocation9], %s989
        %p991 = pneg %p192
        %p992 = pneg %p189
        %s993 = sand.u32 %s55, 1
        %s994 = scalar_lea.sflag [#allocation11], %s993
        %s995 = sand.u32 %s205, 1
        %s996 = scalar_lea.vmem [#allocation10], %s995
        %p997 = pneg %p218
        %p998 = pneg %p215
        %s999 = sand.u32 %s55, 1
        %s1000 = scalar_lea.sflag [#allocation11], %s999
        %s1001 = sand.u32 %s231, 1
        %s1002 = smul.addr %s1001, 16
        %s1003 = scalar_lea.vmem [#allocation12], %s1002
        %p1004 = pneg %p244
        %p1005 = pneg %p241
        %s1006 = sand.u32 %s55, 1
        %s1007 = scalar_lea.sflag [#allocation14], %s1006
        %s1008 = sand.u32 %s257, 1
        %s1009 = scalar_lea.vmem [#allocation13], %s1008
        %p1010 = pneg %p270
        %p1011 = pneg %p267
        %s1012 = sand.u32 %s55, 1
        %s1013 = scalar_lea.sflag [#allocation14], %s1012
        %s1014 = sand.u32 %s283, 1
        %s1015 = scalar_lea.vmem [#allocation15], %s1014
        %p1016 = pneg %p296
        %p1017 = pneg %p293
        %s1018 = sand.u32 %s55, 1
        %s1019 = scalar_lea.sflag [#allocation17], %s1018
        %s1020 = sand.u32 %s309, 1
        %s1021 = scalar_lea.vmem [#allocation16], %s1020
        %p1022 = pneg %p322
        %p1023 = pneg %p319
        %s1024 = sand.u32 %s55, 1
        %s1025 = scalar_lea.sflag [#allocation17], %s1024
        %s1026 = sand.u32 %s335, 1
        %s1027 = smul.addr %s1026, 16
        %s1028 = scalar_lea.vmem [#allocation18], %s1027
        %p1029 = pneg %p348
        %p1030 = pneg %p345
        %s1031 = sand.u32 %s55, 1
        %s1032 = scalar_lea.sflag [#allocation20], %s1031
        %s1033 = sand.u32 %s361, 1
        %s1034 = scalar_lea.vmem [#allocation19], %s1033
        %p1035 = pneg %p374
        %p1036 = pneg %p371
        %p1037 = scmp.lt.s32.totalorder %s60, 1
        %s1038 = scalar_select %p1037, %s60, 1
        %s1039 = smul.addr %s1038, 8
        %s1040 = smul.addr %s1039, 4
        %s1041 = scalar_lea.vmem %s12, %s1040
        %p1042 = pneg %p400
        %p1043 = pneg %p397
        %s1044 = sand.u32 %s55, 1
        %s1045 = scalar_lea.sflag [#allocation20], %s1044
        %s1046 = sand.u32 %s413, 1
        %s1047 = scalar_lea.vmem [#allocation21], %s1046
        %p1048 = pneg %p426
        %p1049 = pneg %p423
        %p1050 = pneg %p447
        %p1051 = pneg %p444
        %p1052 = pneg %p468
        %p1053 = pneg %p465
        %p1054 = pneg %p489
        %p1055 = pneg %p486
        %p1056 = pneg %p510
        %p1057 = pneg %p507
        %p1058 = pneg %p531
        %p1059 = pneg %p528
        %p1060 = pneg %p552
        %p1061 = pneg %p549
        %p1062 = pneg %p578
        %p1063 = pneg %p575
        %s1064 = sand.u32 %s565, 1
        %s1065 = scalar_lea.sflag [#allocation6], %s1064
        %s1066 = sand.u32 %s565, 1
        %s1067 = smul.addr %s1066, 8
        %s1068 = scalar_lea.vmem [#allocation25], %s1067
        %p1069 = scmp.lt.s32.totalorder %s59, 1
        %s1070 = scalar_select %p1069, %s59, 1
        %s1071 = smul.addr %s1070, 2
        %s1072 = smul.addr %s1071, 8
        %s1073 = scalar_lea.vmem %s0, %s1072
        %p1074 = scmp.lt.s32.totalorder %s59, 1
        %s1075 = scalar_select %p1074, %s59, 1
        %s1076 = smul.addr %s1075, 8
        %s1077 = smul.addr %s1076, 4
        %s1078 = scalar_lea.vmem %s1, %s1077
        %p1079 = scmp.lt.s32.totalorder %s60, 1
        %s1080 = scalar_select %p1079, %s60, 1
        %s1081 = smul.addr %s1080, 8
        %s1082 = smul.addr %s1081, 4
        %s1083 = scalar_lea.vmem %s12, %s1082
        %p1085 = scmp.eq.s32.totalorder %s60, 0
        // Predicated region
        $region153: #{tpu_custom_call.1} parent=99 // pred_check
          %p1086 = pneg %p1085
        $region154: #{tpu_custom_call.1} parent=99 // pred_check_branch
          %1088 = sbr.rel (%p1086) target = $region156
        $region155: #{tpu_custom_call.1} parent=99 // pred_region
          %v1089 = vld [vmem:[%s1073] sm:$0xff]
          %v1090 = vld [vmem:[%s1073 + $0x8] sm:$0xff]
          %vm1091 = vcmask 261120
          %1092 = vst.msk [vmem:[#allocation2] sm:$0xff] %vm1091, %v1089
          %1093 = vst.msk [vmem:[#allocation2 + $0x8] sm:$0xff] %vm1091, %v1090
        $region156: #{tpu_custom_call.1} parent=99 // pred_fallthru
          _
        %v1094 = vld [vmem:[#allocation2] sm:$0xff]
        %v1095 = vld [vmem:[#allocation2 + $0x8] sm:$0xff]
        %v1096 = vld [vmem:[%s864] sm:$0x1]
        %v1097 = vld [vmem:[%s872] sm:$0x1]
        %vm1098 = vcmask 261120
        %v1099 = vsel %vm1098, %v1094, 0.0
        %1100 = vadd.xlane.f32.xlu0 %v1099
        %v1101 = vpop.xlane.xlu0 %1100
        %v1102 = vsel %vm1098, %v1095, 0.0
        %1103 = vadd.xlane.f32.xlu0 %v1102
        %v1104 = vpop.xlane.xlu0 %1103
        %v1105 = vrcp.pop 32.0
        %v1106 = vmul.f32 %v1101, %v1105
        %v1107 = vmul.f32 %v1104, %v1105
        %v1108 = vsub.f32 %v1094, %v1106
        %v1109 = vsub.f32 %v1095, %v1107
        %v1110 = vmul.f32 %v1108, %v1108
        %v1111 = vmul.f32 %v1109, %v1109
        %v1112 = vsel %vm1098, %v1110, 0.0
        %1113 = vadd.xlane.f32.xlu0 %v1112
        %v1114 = vpop.xlane.xlu0 %1113
        %v1115 = vsel %vm1098, %v1111, 0.0
        %1116 = vadd.xlane.f32.xlu0 %v1115
        %v1117 = vpop.xlane.xlu0 %1116
        %v1118 = vmul.f32 %v1114, %v1105
        %v1119 = vmul.f32 %v1117, %v1105
        %v1120 = vadd.f32 %v1118, 1e-05
        %v1121 = vadd.f32 %v1119, 1e-05
        %v1122 = vrsqrt.pop %v1120
        %v1123 = vrsqrt.pop %v1121
        %v1124 = vmul.f32 %v1108, %v1122
        %v1125 = vmul.f32 %v1109, %v1123
        %v1127 = vlaneseq
        %v1128 = vshrl.u32 %v1127, 7
        %v1129 = vsub.s32 0, %v1128
        %v1130 = vrot.slane %v1096, %v1129
        %v1132 = vmul.f32 %v1124, %v1130
        %v1133 = vmul.f32 %v1125, %v1130
        %v1135 = vlaneseq
        %v1136 = vshrl.u32 %v1135, 7
        %v1137 = vsub.s32 0, %v1136
        %v1138 = vrot.slane %v1097, %v1137
        %v1140 = vadd.f32 %v1132, %v1138
        %v1141 = vadd.f32 %v1133, %v1138
        %v1142 = vpack.c.bf16 %v1141, %v1140
        %v1143 = vld [vmem:[%s881] sm:$0xf]
        %v1144 = vld [vmem:[%s881 + $0x4] sm:$0xf]
        %v1145 = vld [vmem:[%s881 + $0x8] sm:$0xf]
        %v1146 = vld [vmem:[%s881 + $0xc] sm:$0xf]
        %v1147 = vld [vmem:[%s889] sm:$0x1]
        %v1149 = vlaneseq
        %v1150 = vshrl.u32 %v1149, 7
        %v1151 = vsub.s32 0, %v1150
        %v1152 = vrot.slane %v1147, %v1151
        %v1158 = vunpack.c.l.b16 %v1143
        %v1159 = vunpack.c.l.b16 %v1144
        %v1160 = vunpack.c.l.b16 %v1145
        %v1161 = vunpack.c.l.b16 %v1146
        %v1162 = vpack.c.b16 %v1159, %v1158
        %v1163 = vpack.c.b16 %v1161, %v1160
        %v1167 = vsel %vm1098, %v1142, 0
        %1169 = vmatprep.subr.bf16.mxu0 0
        %1170 = vmatpush1.bf16.msra.mxu0 %v1162
        %1171 = vmatprep.subr.bf16.mxu0 0
        %1172 = vmatpush1.bf16.msra.mxu0 %v1163
        %1173 = vmatprep.subr.bf16.mxu0 0
        %1174 = vmatpush1.bf16.msra.mxu0 0
        %1175 = vmatprep.subr.bf16.mxu0 0
        %1176 = vmatpush1.bf16.msra.mxu0 0
        %1177 = vmatprep.subr.bf16.mxu0 0
        %1178 = vmatpush1.bf16.msra.mxu0 0
        %1179 = vmatprep.subr.bf16.mxu0 0
        %1180 = vmatpush1.bf16.msra.mxu0 0
        %1181 = vmatprep.subr.bf16.mxu0 0
        %1182 = vmatpush1.bf16.msra.mxu0 0
        %1183 = vmatprep.subr.bf16.mxu0 0
        %1184 = vmatpush1.bf16.msra.mxu0 0
        %1185 = vmatprep.subr.bf16.mxu0 0
        %1186 = vmatpush1.bf16.msra.mxu0 0
        %1187 = vmatprep.subr.bf16.mxu0 0
        %1188 = vmatpush1.bf16.msra.mxu0 0
        %1189 = vmatprep.subr.bf16.mxu0 0
        %1190 = vmatpush1.bf16.msra.mxu0 0
        %1191 = vmatprep.subr.bf16.mxu0 0
        %1192 = vmatpush1.bf16.msra.mxu0 0
        %1193 = vmatprep.subr.bf16.mxu0 0
        %1194 = vmatpush1.bf16.msra.mxu0 0
        %1195 = vmatprep.subr.bf16.mxu0 0
        %1196 = vmatpush1.bf16.msra.mxu0 0
        %1197 = vmatprep.subr.bf16.mxu0 0
        %1198 = vmatpush1.bf16.msra.mxu0 0
        %1199 = vmatprep.subr.bf16.mxu0 0
        %1200 = vmatpush1.bf16.msra.mxu0 0
        %1201 = vmatprep.mubr.bf16.mxu0 0
        %1202 = vmatmul.mubr.bf16.gmra.mrb[0].mxu0 %v1167
        %v1203 = vpop.f32.mrb[0].mxu0
        %v1204 = vadd.f32 %v1152, %v1203
        %v1205 = vpop.f32.mrb[0].mxu0
        %v1206 = vpop.f32.mrb[0].mxu0
        %v1207 = vadd.f32 %v1152, %v1206
        %v1208 = vpop.f32.mrb[0].mxu0
        %1209 = vdwg.mxu0
        %v1210 = vpack.c.bf16 %v1207, %v1204
        %v1211 = vld [vmem:[%s1078] sm:$0xf]
        %v1212 = vld [vmem:[%s1078 + $0x4] sm:$0xf]
        %v1213 = vunpack.c.l.bf16 %v1211
        %v1214 = vunpack.c.l.bf16 %v1212
        %1216 = vrot.lane.b32.xlu0 %v1210, 96
        %v1217 = vpop.permute.xlu0 %1216
        %vm1218 = vcmask 64512
        %v1220 = vsel %vm1218, %v1210, 0
        %v1223 = vsel %vm1218, %v1217, 0
        %1225 = vmatprep.subr.bf16.mxu0 0
        %1226 = vmatpush1.bf16.xpose.msra.mxu0 %v1223
        %1227 = vmatprep.subr.bf16.mxu0 0
        %1228 = vmatpush1.bf16.xpose.msra.mxu0 0
        %1229 = vmatprep.subr.bf16.mxu0 0
        %1230 = vmatpush1.bf16.xpose.msra.mxu0 0
        %1231 = vmatprep.subr.bf16.mxu0 0
        %1232 = vmatpush1.bf16.xpose.msra.mxu0 0
        %1233 = vmatprep.subr.bf16.mxu0 0
        %1234 = vmatpush1.bf16.xpose.msra.mxu0 0
        %1235 = vmatprep.subr.bf16.mxu0 0
        %1236 = vmatpush1.bf16.xpose.msra.mxu0 0
        %1237 = vmatprep.subr.bf16.mxu0 0
        %1238 = vmatpush1.bf16.xpose.msra.mxu0 0
        %1239 = vmatprep.subr.bf16.mxu0 0
        %1240 = vmatpush1.bf16.xpose.msra.mxu0 0
        %1241 = vmatprep.subr.bf16.mxu0 0
        %1242 = vmatpush1.bf16.xpose.msra.mxu0 0
        %1243 = vmatprep.subr.bf16.mxu0 0
        %1244 = vmatpush1.bf16.xpose.msra.mxu0 0
        %1245 = vmatprep.subr.bf16.mxu0 0
        %1246 = vmatpush1.bf16.xpose.msra.mxu0 0
        %1247 = vmatprep.subr.bf16.mxu0 0
        %1248 = vmatpush1.bf16.xpose.msra.mxu0 0
        %1249 = vmatprep.subr.bf16.mxu0 0
        %1250 = vmatpush1.bf16.xpose.msra.mxu0 0
        %1251 = vmatprep.subr.bf16.mxu0 0
        %1252 = vmatpush1.bf16.xpose.msra.mxu0 0
        %1253 = vmatprep.subr.bf16.mxu0 0
        %1254 = vmatpush1.bf16.xpose.msra.mxu0 0
        %1255 = vmatprep.subr.bf16.mxu0 0
        %1256 = vmatpush1.bf16.xpose.msra.mxu0 0
        %1257 = vmatprep.mubr.bf16.mxu0 0
        %1258 = vmatmul.mubr.bf16.gmra.mrb[0].mxu0 %v1220
        %v1259 = vpop.f32.mrb[0].mxu0
        %v1260 = vadd.f32 %v1213, %v1259
        %v1261 = vpop.f32.mrb[0].mxu0
        %v1262 = vpop.f32.mrb[0].mxu0
        %v1263 = vadd.f32 %v1214, %v1262
        %v1264 = vpop.f32.mrb[0].mxu0
        %1265 = vdwg.mxu0
        %vm1266 = vcmask 130048
        %v1267 = vsel %vm1266, %v1260, -inf
        %1268 = vmax.xlane.f32.xlu0 %v1267
        %v1269 = vpop.xlane.xlu0 %1268
        %v1270 = vsel %vm1266, %v1263, -inf
        %1271 = vmax.xlane.f32.xlu0 %v1270
        %v1272 = vpop.xlane.xlu0 %1271
        %v1273 = vsub.f32 %v1260, %v1269
        %v1274 = vsub.f32 %v1263, %v1272
        %v1275 = vmul.f32 %v1273, 1.442695
        %v1276 = vpow.pop %v1275
        %v1277 = vmul.f32 %v1274, 1.442695
        %v1278 = vpow.pop %v1277
        %v1279 = vsel %vm1266, %v1276, 0.0
        %1280 = vadd.xlane.f32.xlu0 %v1279
        %v1281 = vpop.xlane.xlu0 %1280
        %v1282 = vsel %vm1266, %v1278, 0.0
        %1283 = vadd.xlane.f32.xlu0 %v1282
        %v1284 = vpop.xlane.xlu0 %1283
        %v1285 = vrcp.pop %v1281
        %v1286 = vrcp.pop %v1284
        %v1287 = vmul.f32 %v1276, %v1285
        %v1288 = vmul.f32 %v1278, %v1286
        %v1289 = vpack.c.bf16 %v1288, %v1287
        %1290 = vrot.lane.b32.xlu0 %v1210, 64
        %v1291 = vpop.permute.xlu0 %1290
        %v1294 = vsel %vm1266, %v1289, 0
        %1296 = vmatprep.subr.bf16.mxu0 0
        %1297 = vmatpush1.bf16.msra.mxu0 %v1291
        %1298 = vmatprep.subr.bf16.mxu0 0
        %1299 = vmatpush1.bf16.msra.mxu0 0
        %1300 = vmatprep.subr.bf16.mxu0 0
        %1301 = vmatpush1.bf16.msra.mxu0 0
        %1302 = vmatprep.subr.bf16.mxu0 0
        %1303 = vmatpush1.bf16.msra.mxu0 0
        %1304 = vmatprep.subr.bf16.mxu0 0
        %1305 = vmatpush1.bf16.msra.mxu0 0
        %1306 = vmatprep.subr.bf16.mxu0 0
        %1307 = vmatpush1.bf16.msra.mxu0 0
        %1308 = vmatprep.subr.bf16.mxu0 0
        %1309 = vmatpush1.bf16.msra.mxu0 0
        %1310 = vmatprep.subr.bf16.mxu0 0
        %1311 = vmatpush1.bf16.msra.mxu0 0
        %1312 = vmatprep.subr.bf16.mxu0 0
        %1313 = vmatpush1.bf16.msra.mxu0 0
        %1314 = vmatprep.subr.bf16.mxu0 0
        %1315 = vmatpush1.bf16.msra.mxu0 0
        %1316 = vmatprep.subr.bf16.mxu0 0
        %1317 = vmatpush1.bf16.msra.mxu0 0
        %1318 = vmatprep.subr.bf16.mxu0 0
        %1319 = vmatpush1.bf16.msra.mxu0 0
        %1320 = vmatprep.subr.bf16.mxu0 0
        %1321 = vmatpush1.bf16.msra.mxu0 0
        %1322 = vmatprep.subr.bf16.mxu0 0
        %1323 = vmatpush1.bf16.msra.mxu0 0
        %1324 = vmatprep.subr.bf16.mxu0 0
        %1325 = vmatpush1.bf16.msra.mxu0 0
        %1326 = vmatprep.subr.bf16.mxu0 0
        %1327 = vmatpush1.bf16.msra.mxu0 0
        %1328 = vmatprep.mubr.bf16.mxu0 0
        %1329 = vmatmul.mubr.bf16.gmra.mrb[0].mxu0 %v1294
        %v1330 = vpop.f32.mrb[0].mxu0
        %v1331 = vadd.f32 0.0, %v1330
        %v1332 = vpop.f32.mrb[0].mxu0
        %v1333 = vpop.f32.mrb[0].mxu0
        %v1334 = vadd.f32 0.0, %v1333
        %v1335 = vpop.f32.mrb[0].mxu0
        %1336 = vdwg.mxu0
        %v1337 = vpack.c.bf16 %v1334, %v1331
        %s1338 = scalar_lea.vmem %s1078, 8
        %v1339 = vld [vmem:[%s1338] sm:$0xf]
        %v1340 = vld [vmem:[%s1338 + $0x4] sm:$0xf]
        %v1341 = vunpack.c.l.bf16 %v1339
        %v1342 = vunpack.c.l.bf16 %v1340
        %1343 = vrot.lane.b32.xlu0 %v1210, 120
        %v1344 = vpop.permute.xlu0 %1343
        %1345 = vrot.lane.b32.xlu0 %v1210, 88
        %v1346 = vpop.permute.xlu0 %1345
        %v1348 = vsel %vm1218, %v1344, 0
        %v1351 = vsel %vm1218, %v1346, 0
        %1353 = vmatprep.subr.bf16.mxu0 0
        %1354 = vmatpush1.bf16.xpose.msra.mxu0 %v1351
        %1355 = vmatprep.subr.bf16.mxu0 0
        %1356 = vmatpush1.bf16.xpose.msra.mxu0 0
        %1357 = vmatprep.subr.bf16.mxu0 0
        %1358 = vmatpush1.bf16.xpose.msra.mxu0 0
        %1359 = vmatprep.subr.bf16.mxu0 0
        %1360 = vmatpush1.bf16.xpose.msra.mxu0 0
        %1361 = vmatprep.subr.bf16.mxu0 0
        %1362 = vmatpush1.bf16.xpose.msra.mxu0 0
        %1363 = vmatprep.subr.bf16.mxu0 0
        %1364 = vmatpush1.bf16.xpose.msra.mxu0 0
        %1365 = vmatprep.subr.bf16.mxu0 0
        %1366 = vmatpush1.bf16.xpose.msra.mxu0 0
        %1367 = vmatprep.subr.bf16.mxu0 0
        %1368 = vmatpush1.bf16.xpose.msra.mxu0 0
        %1369 = vmatprep.subr.bf16.mxu0 0
        %1370 = vmatpush1.bf16.xpose.msra.mxu0 0
        %1371 = vmatprep.subr.bf16.mxu0 0
        %1372 = vmatpush1.bf16.xpose.msra.mxu0 0
        %1373 = vmatprep.subr.bf16.mxu0 0
        %1374 = vmatpush1.bf16.xpose.msra.mxu0 0
        %1375 = vmatprep.subr.bf16.mxu0 0
        %1376 = vmatpush1.bf16.xpose.msra.mxu0 0
        %1377 = vmatprep.subr.bf16.mxu0 0
        %1378 = vmatpush1.bf16.xpose.msra.mxu0 0
        %1379 = vmatprep.subr.bf16.mxu0 0
        %1380 = vmatpush1.bf16.xpose.msra.mxu0 0
        %1381 = vmatprep.subr.bf16.mxu0 0
        %1382 = vmatpush1.bf16.xpose.msra.mxu0 0
        %1383 = vmatprep.subr.bf16.mxu0 0
        %1384 = vmatpush1.bf16.xpose.msra.mxu0 0
        %1385 = vmatprep.mubr.bf16.mxu0 0
        %1386 = vmatmul.mubr.bf16.gmra.mrb[0].mxu0 %v1348
        %v1387 = vpop.f32.mrb[0].mxu0
        %v1388 = vadd.f32 %v1341, %v1387
        %v1389 = vpop.f32.mrb[0].mxu0
        %v1390 = vpop.f32.mrb[0].mxu0
        %v1391 = vadd.f32 %v1342, %v1390
        %v1392 = vpop.f32.mrb[0].mxu0
        %1393 = vdwg.mxu0
        %v1394 = vsel %vm1266, %v1388, -inf
        %1395 = vmax.xlane.f32.xlu0 %v1394
        %v1396 = vpop.xlane.xlu0 %1395
        %v1397 = vsel %vm1266, %v1391, -inf
        %1398 = vmax.xlane.f32.xlu0 %v1397
        %v1399 = vpop.xlane.xlu0 %1398
        %v1400 = vsub.f32 %v1388, %v1396
        %v1401 = vsub.f32 %v1391, %v1399
        %v1402 = vmul.f32 %v1400, 1.442695
        %v1403 = vpow.pop %v1402
        %v1404 = vmul.f32 %v1401, 1.442695
        %v1405 = vpow.pop %v1404
        %v1406 = vsel %vm1266, %v1403, 0.0
        %1407 = vadd.xlane.f32.xlu0 %v1406
        %v1408 = vpop.xlane.xlu0 %1407
        %v1409 = vsel %vm1266, %v1405, 0.0
        %1410 = vadd.xlane.f32.xlu0 %v1409
        %v1411 = vpop.xlane.xlu0 %1410
        %v1412 = vrcp.pop %v1408
        %v1413 = vrcp.pop %v1411
        %v1414 = vmul.f32 %v1403, %v1412
        %v1415 = vmul.f32 %v1405, %v1413
        %v1416 = vpack.c.bf16 %v1415, %v1414
        %1417 = vrot.lane.b32.xlu0 %v1210, 56
        %v1418 = vpop.permute.xlu0 %1417
        %v1421 = vsel %vm1266, %v1416, 0
        %1423 = vmatprep.subr.bf16.mxu0 0
        %1424 = vmatpush1.bf16.msra.mxu0 %v1418
        %1425 = vmatprep.subr.bf16.mxu0 0
        %1426 = vmatpush1.bf16.msra.mxu0 0
        %1427 = vmatprep.subr.bf16.mxu0 0
        %1428 = vmatpush1.bf16.msra.mxu0 0
        %1429 = vmatprep.subr.bf16.mxu0 0
        %1430 = vmatpush1.bf16.msra.mxu0 0
        %1431 = vmatprep.subr.bf16.mxu0 0
        %1432 = vmatpush1.bf16.msra.mxu0 0
        %1433 = vmatprep.subr.bf16.mxu0 0
        %1434 = vmatpush1.bf16.msra.mxu0 0
        %1435 = vmatprep.subr.bf16.mxu0 0
        %1436 = vmatpush1.bf16.msra.mxu0 0
        %1437 = vmatprep.subr.bf16.mxu0 0
        %1438 = vmatpush1.bf16.msra.mxu0 0
        %1439 = vmatprep.subr.bf16.mxu0 0
        %1440 = vmatpush1.bf16.msra.mxu0 0
        %1441 = vmatprep.subr.bf16.mxu0 0
        %1442 = vmatpush1.bf16.msra.mxu0 0
        %1443 = vmatprep.subr.bf16.mxu0 0
        %1444 = vmatpush1.bf16.msra.mxu0 0
        %1445 = vmatprep.subr.bf16.mxu0 0
        %1446 = vmatpush1.bf16.msra.mxu0 0
        %1447 = vmatprep.subr.bf16.mxu0 0
        %1448 = vmatpush1.bf16.msra.mxu0 0
        %1449 = vmatprep.subr.bf16.mxu0 0
        %1450 = vmatpush1.bf16.msra.mxu0 0
        %1451 = vmatprep.subr.bf16.mxu0 0
        %1452 = vmatpush1.bf16.msra.mxu0 0
        %1453 = vmatprep.subr.bf16.mxu0 0
        %1454 = vmatpush1.bf16.msra.mxu0 0
        %1455 = vmatprep.mubr.bf16.mxu0 0
        %1456 = vmatmul.mubr.bf16.gmra.mrb[0].mxu0 %v1421
        %v1457 = vpop.f32.mrb[0].mxu0
        %v1458 = vadd.f32 0.0, %v1457
        %v1459 = vpop.f32.mrb[0].mxu0
        %v1460 = vpop.f32.mrb[0].mxu0
        %v1461 = vadd.f32 0.0, %v1460
        %v1462 = vpop.f32.mrb[0].mxu0
        %1463 = vdwg.mxu0
        %v1464 = vpack.c.bf16 %v1461, %v1458
        %s1465 = scalar_lea.vmem %s1078, 16
        %v1466 = vld [vmem:[%s1465] sm:$0xf]
        %v1467 = vld [vmem:[%s1465 + $0x4] sm:$0xf]
        %v1468 = vunpack.c.l.bf16 %v1466
        %v1469 = vunpack.c.l.bf16 %v1467
        %1470 = vrot.lane.b32.xlu0 %v1210, 112
        %v1471 = vpop.permute.xlu0 %1470
        %1472 = vrot.lane.b32.xlu0 %v1210, 80
        %v1473 = vpop.permute.xlu0 %1472
        %v1475 = vsel %vm1218, %v1471, 0
        %v1478 = vsel %vm1218, %v1473, 0
        %1480 = vmatprep.subr.bf16.mxu0 0
        %1481 = vmatpush1.bf16.xpose.msra.mxu0 %v1478
        %1482 = vmatprep.subr.bf16.mxu0 0
        %1483 = vmatpush1.bf16.xpose.msra.mxu0 0
        %1484 = vmatprep.subr.bf16.mxu0 0
        %1485 = vmatpush1.bf16.xpose.msra.mxu0 0
        %1486 = vmatprep.subr.bf16.mxu0 0
        %1487 = vmatpush1.bf16.xpose.msra.mxu0 0
        %1488 = vmatprep.subr.bf16.mxu0 0
        %1489 = vmatpush1.bf16.xpose.msra.mxu0 0
        %1490 = vmatprep.subr.bf16.mxu0 0
        %1491 = vmatpush1.bf16.xpose.msra.mxu0 0
        %1492 = vmatprep.subr.bf16.mxu0 0
        %1493 = vmatpush1.bf16.xpose.msra.mxu0 0
        %1494 = vmatprep.subr.bf16.mxu0 0
        %1495 = vmatpush1.bf16.xpose.msra.mxu0 0
        %1496 = vmatprep.subr.bf16.mxu0 0
        %1497 = vmatpush1.bf16.xpose.msra.mxu0 0
        %1498 = vmatprep.subr.bf16.mxu0 0
        %1499 = vmatpush1.bf16.xpose.msra.mxu0 0
        %1500 = vmatprep.subr.bf16.mxu0 0
        %1501 = vmatpush1.bf16.xpose.msra.mxu0 0
        %1502 = vmatprep.subr.bf16.mxu0 0
        %1503 = vmatpush1.bf16.xpose.msra.mxu0 0
        %1504 = vmatprep.subr.bf16.mxu0 0
        %1505 = vmatpush1.bf16.xpose.msra.mxu0 0
        %1506 = vmatprep.subr.bf16.mxu0 0
        %1507 = vmatpush1.bf16.xpose.msra.mxu0 0
        %1508 = vmatprep.subr.bf16.mxu0 0
        %1509 = vmatpush1.bf16.xpose.msra.mxu0 0
        %1510 = vmatprep.subr.bf16.mxu0 0
        %1511 = vmatpush1.bf16.xpose.msra.mxu0 0
        %1512 = vmatprep.mubr.bf16.mxu0 0
        %1513 = vmatmul.mubr.bf16.gmra.mrb[0].mxu0 %v1475
        %v1514 = vpop.f32.mrb[0].mxu0
        %v1515 = vadd.f32 %v1468, %v1514
        %v1516 = vpop.f32.mrb[0].mxu0
        %v1517 = vpop.f32.mrb[0].mxu0
        %v1518 = vadd.f32 %v1469, %v1517
        %v1519 = vpop.f32.mrb[0].mxu0
        %1520 = vdwg.mxu0
        %v1521 = vsel %vm1266, %v1515, -inf
        %1522 = vmax.xlane.f32.xlu0 %v1521
        %v1523 = vpop.xlane.xlu0 %1522
        %v1524 = vsel %vm1266, %v1518, -inf
        %1525 = vmax.xlane.f32.xlu0 %v1524
        %v1526 = vpop.xlane.xlu0 %1525
        %v1527 = vsub.f32 %v1515, %v1523
        %v1528 = vsub.f32 %v1518, %v1526
        %v1529 = vmul.f32 %v1527, 1.442695
        %v1530 = vpow.pop %v1529
        %v1531 = vmul.f32 %v1528, 1.442695
        %v1532 = vpow.pop %v1531
        %v1533 = vsel %vm1266, %v1530, 0.0
        %1534 = vadd.xlane.f32.xlu0 %v1533
        %v1535 = vpop.xlane.xlu0 %1534
        %v1536 = vsel %vm1266, %v1532, 0.0
        %1537 = vadd.xlane.f32.xlu0 %v1536
        %v1538 = vpop.xlane.xlu0 %1537
        %v1539 = vrcp.pop %v1535
        %v1540 = vrcp.pop %v1538
        %v1541 = vmul.f32 %v1530, %v1539
        %v1542 = vmul.f32 %v1532, %v1540
        %v1543 = vpack.c.bf16 %v1542, %v1541
        %1544 = vrot.lane.b32.xlu0 %v1210, 48
        %v1545 = vpop.permute.xlu0 %1544
        %v1548 = vsel %vm1266, %v1543, 0
        %1550 = vmatprep.subr.bf16.mxu0 0
        %1551 = vmatpush1.bf16.msra.mxu0 %v1545
        %1552 = vmatprep.subr.bf16.mxu0 0
        %1553 = vmatpush1.bf16.msra.mxu0 0
        %1554 = vmatprep.subr.bf16.mxu0 0
        %1555 = vmatpush1.bf16.msra.mxu0 0
        %1556 = vmatprep.subr.bf16.mxu0 0
        %1557 = vmatpush1.bf16.msra.mxu0 0
        %1558 = vmatprep.subr.bf16.mxu0 0
        %1559 = vmatpush1.bf16.msra.mxu0 0
        %1560 = vmatprep.subr.bf16.mxu0 0
        %1561 = vmatpush1.bf16.msra.mxu0 0
        %1562 = vmatprep.subr.bf16.mxu0 0
        %1563 = vmatpush1.bf16.msra.mxu0 0
        %1564 = vmatprep.subr.bf16.mxu0 0
        %1565 = vmatpush1.bf16.msra.mxu0 0
        %1566 = vmatprep.subr.bf16.mxu0 0
        %1567 = vmatpush1.bf16.msra.mxu0 0
        %1568 = vmatprep.subr.bf16.mxu0 0
        %1569 = vmatpush1.bf16.msra.mxu0 0
        %1570 = vmatprep.subr.bf16.mxu0 0
        %1571 = vmatpush1.bf16.msra.mxu0 0
        %1572 = vmatprep.subr.bf16.mxu0 0
        %1573 = vmatpush1.bf16.msra.mxu0 0
        %1574 = vmatprep.subr.bf16.mxu0 0
        %1575 = vmatpush1.bf16.msra.mxu0 0
        %1576 = vmatprep.subr.bf16.mxu0 0
        %1577 = vmatpush1.bf16.msra.mxu0 0
        %1578 = vmatprep.subr.bf16.mxu0 0
        %1579 = vmatpush1.bf16.msra.mxu0 0
        %1580 = vmatprep.subr.bf16.mxu0 0
        %1581 = vmatpush1.bf16.msra.mxu0 0
        %1582 = vmatprep.mubr.bf16.mxu0 0
        %1583 = vmatmul.mubr.bf16.gmra.mrb[0].mxu0 %v1548
        %v1584 = vpop.f32.mrb[0].mxu0
        %v1585 = vadd.f32 0.0, %v1584
        %v1586 = vpop.f32.mrb[0].mxu0
        %v1587 = vpop.f32.mrb[0].mxu0
        %v1588 = vadd.f32 0.0, %v1587
        %v1589 = vpop.f32.mrb[0].mxu0
        %1590 = vdwg.mxu0
        %v1591 = vpack.c.bf16 %v1588, %v1585
        %s1592 = scalar_lea.vmem %s1078, 24
        %v1593 = vld [vmem:[%s1592] sm:$0xf]
        %v1594 = vld [vmem:[%s1592 + $0x4] sm:$0xf]
        %v1595 = vunpack.c.l.bf16 %v1593
        %v1596 = vunpack.c.l.bf16 %v1594
        %1597 = vrot.lane.b32.xlu0 %v1210, 104
        %v1598 = vpop.permute.xlu0 %1597
        %1599 = vrot.lane.b32.xlu0 %v1210, 72
        %v1600 = vpop.permute.xlu0 %1599
        %v1602 = vsel %vm1218, %v1598, 0
        %v1605 = vsel %vm1218, %v1600, 0
        %1607 = vmatprep.subr.bf16.mxu0 0
        %1608 = vmatpush1.bf16.xpose.msra.mxu0 %v1605
        %1609 = vmatprep.subr.bf16.mxu0 0
        %1610 = vmatpush1.bf16.xpose.msra.mxu0 0
        %1611 = vmatprep.subr.bf16.mxu0 0
        %1612 = vmatpush1.bf16.xpose.msra.mxu0 0
        %1613 = vmatprep.subr.bf16.mxu0 0
        %1614 = vmatpush1.bf16.xpose.msra.mxu0 0
        %1615 = vmatprep.subr.bf16.mxu0 0
        %1616 = vmatpush1.bf16.xpose.msra.mxu0 0
        %1617 = vmatprep.subr.bf16.mxu0 0
        %1618 = vmatpush1.bf16.xpose.msra.mxu0 0
        %1619 = vmatprep.subr.bf16.mxu0 0
        %1620 = vmatpush1.bf16.xpose.msra.mxu0 0
        %1621 = vmatprep.subr.bf16.mxu0 0
        %1622 = vmatpush1.bf16.xpose.msra.mxu0 0
        %1623 = vmatprep.subr.bf16.mxu0 0
        %1624 = vmatpush1.bf16.xpose.msra.mxu0 0
        %1625 = vmatprep.subr.bf16.mxu0 0
        %1626 = vmatpush1.bf16.xpose.msra.mxu0 0
        %1627 = vmatprep.subr.bf16.mxu0 0
        %1628 = vmatpush1.bf16.xpose.msra.mxu0 0
        %1629 = vmatprep.subr.bf16.mxu0 0
        %1630 = vmatpush1.bf16.xpose.msra.mxu0 0
        %1631 = vmatprep.subr.bf16.mxu0 0
        %1632 = vmatpush1.bf16.xpose.msra.mxu0 0
        %1633 = vmatprep.subr.bf16.mxu0 0
        %1634 = vmatpush1.bf16.xpose.msra.mxu0 0
        %1635 = vmatprep.subr.bf16.mxu0 0
        %1636 = vmatpush1.bf16.xpose.msra.mxu0 0
        %1637 = vmatprep.subr.bf16.mxu0 0
        %1638 = vmatpush1.bf16.xpose.msra.mxu0 0
        %1639 = vmatprep.mubr.bf16.mxu0 0
        %1640 = vmatmul.mubr.bf16.gmra.mrb[0].mxu0 %v1602
        %v1641 = vpop.f32.mrb[0].mxu0
        %v1642 = vadd.f32 %v1595, %v1641
        %v1643 = vpop.f32.mrb[0].mxu0
        %v1644 = vpop.f32.mrb[0].mxu0
        %v1645 = vadd.f32 %v1596, %v1644
        %v1646 = vpop.f32.mrb[0].mxu0
        %1647 = vdwg.mxu0
        %v1648 = vsel %vm1266, %v1642, -inf
        %1649 = vmax.xlane.f32.xlu0 %v1648
        %v1650 = vpop.xlane.xlu0 %1649
        %v1651 = vsel %vm1266, %v1645, -inf
        %1652 = vmax.xlane.f32.xlu0 %v1651
        %v1653 = vpop.xlane.xlu0 %1652
        %v1654 = vsub.f32 %v1642, %v1650
        %v1655 = vsub.f32 %v1645, %v1653
        %v1656 = vmul.f32 %v1654, 1.442695
        %v1657 = vpow.pop %v1656
        %v1658 = vmul.f32 %v1655, 1.442695
        %v1659 = vpow.pop %v1658
        %v1660 = vsel %vm1266, %v1657, 0.0
        %1661 = vadd.xlane.f32.xlu0 %v1660
        %v1662 = vpop.xlane.xlu0 %1661
        %v1663 = vsel %vm1266, %v1659, 0.0
        %1664 = vadd.xlane.f32.xlu0 %v1663
        %v1665 = vpop.xlane.xlu0 %1664
        %v1666 = vrcp.pop %v1662
        %v1667 = vrcp.pop %v1665
        %v1668 = vmul.f32 %v1657, %v1666
        %v1669 = vmul.f32 %v1659, %v1667
        %v1670 = vpack.c.bf16 %v1669, %v1668
        %1671 = vrot.lane.b32.xlu0 %v1210, 40
        %v1672 = vpop.permute.xlu0 %1671
        %v1675 = vsel %vm1266, %v1670, 0
        %1677 = vmatprep.subr.bf16.mxu0 0
        %1678 = vmatpush1.bf16.msra.mxu0 %v1672
        %1679 = vmatprep.subr.bf16.mxu0 0
        %1680 = vmatpush1.bf16.msra.mxu0 0
        %1681 = vmatprep.subr.bf16.mxu0 0
        %1682 = vmatpush1.bf16.msra.mxu0 0
        %1683 = vmatprep.subr.bf16.mxu0 0
        %1684 = vmatpush1.bf16.msra.mxu0 0
        %1685 = vmatprep.subr.bf16.mxu0 0
        %1686 = vmatpush1.bf16.msra.mxu0 0
        %1687 = vmatprep.subr.bf16.mxu0 0
        %1688 = vmatpush1.bf16.msra.mxu0 0
        %1689 = vmatprep.subr.bf16.mxu0 0
        %1690 = vmatpush1.bf16.msra.mxu0 0
        %1691 = vmatprep.subr.bf16.mxu0 0
        %1692 = vmatpush1.bf16.msra.mxu0 0
        %1693 = vmatprep.subr.bf16.mxu0 0
        %1694 = vmatpush1.bf16.msra.mxu0 0
        %1695 = vmatprep.subr.bf16.mxu0 0
        %1696 = vmatpush1.bf16.msra.mxu0 0
        %1697 = vmatprep.subr.bf16.mxu0 0
        %1698 = vmatpush1.bf16.msra.mxu0 0
        %1699 = vmatprep.subr.bf16.mxu0 0
        %1700 = vmatpush1.bf16.msra.mxu0 0
        %1701 = vmatprep.subr.bf16.mxu0 0
        %1702 = vmatpush1.bf16.msra.mxu0 0
        %1703 = vmatprep.subr.bf16.mxu0 0
        %1704 = vmatpush1.bf16.msra.mxu0 0
        %1705 = vmatprep.subr.bf16.mxu0 0
        %1706 = vmatpush1.bf16.msra.mxu0 0
        %1707 = vmatprep.subr.bf16.mxu0 0
        %1708 = vmatpush1.bf16.msra.mxu0 0
        %1709 = vmatprep.mubr.bf16.mxu0 0
        %1710 = vmatmul.mubr.bf16.gmra.mrb[0].mxu0 %v1675
        %v1711 = vpop.f32.mrb[0].mxu0
        %v1712 = vadd.f32 0.0, %v1711
        %v1713 = vpop.f32.mrb[0].mxu0
        %v1714 = vpop.f32.mrb[0].mxu0
        %v1715 = vadd.f32 0.0, %v1714
        %v1716 = vpop.f32.mrb[0].mxu0
        %1717 = vdwg.mxu0
        %v1718 = vpack.c.bf16 %v1715, %v1712
        %1720 = vrot.lane.b32.xlu0 %v1464, 8
        %v1721 = vpop.permute.xlu0 %1720
        %1723 = vrot.lane.b32.xlu0 %v1591, 16
        %v1724 = vpop.permute.xlu0 %1723
        %1726 = vrot.lane.b32.xlu0 %v1718, 24
        %v1727 = vpop.permute.xlu0 %1726
        %v1730 = vsel %vm1218, %v1337, %v1721
        %v1732 = vsel %vm1266, %v1730, %v1724
        %vm1733 = vcmask 195584
        %v1735 = vsel %vm1733, %v1732, %v1727
        %v1736 = vld [vmem:[%s898] sm:$0xf]
        %v1737 = vld [vmem:[%s898 + $0x4] sm:$0xf]
        %v1738 = vld [vmem:[%s898 + $0x8] sm:$0xf]
        %v1739 = vld [vmem:[%s898 + $0xc] sm:$0xf]
        %v1744 = vunpack.c.l.b16 %v1736
        %v1745 = vunpack.c.l.b16 %v1737
        %v1746 = vunpack.c.l.b16 %v1738
        %v1747 = vunpack.c.l.b16 %v1739
        %v1748 = vpack.c.b16 %v1745, %v1744
        %v1749 = vpack.c.b16 %v1747, %v1746
        %v1752 = vsel %vm1098, %v1735, 0
        %1754 = vmatprep.subr.bf16.mxu0 0
        %1755 = vmatpush1.bf16.msra.mxu0 %v1748
        %1756 = vmatprep.subr.bf16.mxu0 0
        %1757 = vmatpush1.bf16.msra.mxu0 %v1749
        %1758 = vmatprep.subr.bf16.mxu0 0
        %1759 = vmatpush1.bf16.msra.mxu0 0
        %1760 = vmatprep.subr.bf16.mxu0 0
        %1761 = vmatpush1.bf16.msra.mxu0 0
        %1762 = vmatprep.subr.bf16.mxu0 0
        %1763 = vmatpush1.bf16.msra.mxu0 0
        %1764 = vmatprep.subr.bf16.mxu0 0
        %1765 = vmatpush1.bf16.msra.mxu0 0
        %1766 = vmatprep.subr.bf16.mxu0 0
        %1767 = vmatpush1.bf16.msra.mxu0 0
        %1768 = vmatprep.subr.bf16.mxu0 0
        %1769 = vmatpush1.bf16.msra.mxu0 0
        %1770 = vmatprep.subr.bf16.mxu0 0
        %1771 = vmatpush1.bf16.msra.mxu0 0
        %1772 = vmatprep.subr.bf16.mxu0 0
        %1773 = vmatpush1.bf16.msra.mxu0 0
        %1774 = vmatprep.subr.bf16.mxu0 0
        %1775 = vmatpush1.bf16.msra.mxu0 0
        %1776 = vmatprep.subr.bf16.mxu0 0
        %1777 = vmatpush1.bf16.msra.mxu0 0
        %1778 = vmatprep.subr.bf16.mxu0 0
        %1779 = vmatpush1.bf16.msra.mxu0 0
        %1780 = vmatprep.subr.bf16.mxu0 0
        %1781 = vmatpush1.bf16.msra.mxu0 0
        %1782 = vmatprep.subr.bf16.mxu0 0
        %1783 = vmatpush1.bf16.msra.mxu0 0
        %1784 = vmatprep.subr.bf16.mxu0 0
        %1785 = vmatpush1.bf16.msra.mxu0 0
        %1786 = vmatprep.mubr.bf16.mxu0 0
        %1787 = vmatmul.mubr.bf16.gmra.mrb[0].mxu0 %v1752
        %v1788 = vpop.f32.mrb[0].mxu0
        %v1789 = vadd.f32 0.0, %v1788
        %v1790 = vpop.f32.mrb[0].mxu0
        %v1791 = vpop.f32.mrb[0].mxu0
        %v1792 = vadd.f32 0.0, %v1791
        %v1793 = vpop.f32.mrb[0].mxu0
        %1794 = vdwg.mxu0
        %v1795 = vadd.f32 %v1094, %v1789
        %v1796 = vadd.f32 %v1095, %v1792
        %v1797 = vld [vmem:[%s906] sm:$0x1]
        %v1799 = vlaneseq
        %v1800 = vshrl.u32 %v1799, 7
        %v1801 = vsub.s32 0, %v1800
        %v1802 = vrot.slane %v1797, %v1801
        %v1804 = vadd.f32 %v1795, %v1802
        %v1805 = vadd.f32 %v1796, %v1802
        %v1806 = vld [vmem:[%s914] sm:$0x1]
        %v1807 = vld [vmem:[%s922] sm:$0x1]
        %v1808 = vsel %vm1098, %v1804, 0.0
        %1809 = vadd.xlane.f32.xlu0 %v1808
        %v1810 = vpop.xlane.xlu0 %1809
        %v1811 = vsel %vm1098, %v1805, 0.0
        %1812 = vadd.xlane.f32.xlu0 %v1811
        %v1813 = vpop.xlane.xlu0 %1812
        %v1814 = vmul.f32 %v1810, %v1105
        %v1815 = vmul.f32 %v1813, %v1105
        %v1816 = vsub.f32 %v1804, %v1814
        %v1817 = vsub.f32 %v1805, %v1815
        %v1818 = vmul.f32 %v1816, %v1816
        %v1819 = vmul.f32 %v1817, %v1817
        %v1820 = vsel %vm1098, %v1818, 0.0
        %1821 = vadd.xlane.f32.xlu0 %v1820
        %v1822 = vpop.xlane.xlu0 %1821
        %v1823 = vsel %vm1098, %v1819, 0.0
        %1824 = vadd.xlane.f32.xlu0 %v1823
        %v1825 = vpop.xlane.xlu0 %1824
        %v1826 = vmul.f32 %v1822, %v1105
        %v1827 = vmul.f32 %v1825, %v1105
        %v1828 = vadd.f32 %v1826, 1e-05
        %v1829 = vadd.f32 %v1827, 1e-05
        %v1830 = vrsqrt.pop %v1828
        %v1831 = vrsqrt.pop %v1829
        %v1832 = vmul.f32 %v1816, %v1830
        %v1833 = vmul.f32 %v1817, %v1831
        %v1835 = vlaneseq
        %v1836 = vshrl.u32 %v1835, 7
        %v1837 = vsub.s32 0, %v1836
        %v1838 = vrot.slane %v1806, %v1837
        %v1840 = vmul.f32 %v1832, %v1838
        %v1841 = vmul.f32 %v1833, %v1838
        %v1843 = vlaneseq
        %v1844 = vshrl.u32 %v1843, 7
        %v1845 = vsub.s32 0, %v1844
        %v1846 = vrot.slane %v1807, %v1845
        %v1848 = vadd.f32 %v1840, %v1846
        %v1849 = vadd.f32 %v1841, %v1846
        %v1850 = vpack.c.bf16 %v1849, %v1848
        %v1851 = vld [vmem:[%s931] sm:$0xf]
        %v1852 = vld [vmem:[%s931 + $0x4] sm:$0xf]
        %v1853 = vld [vmem:[%s931 + $0x8] sm:$0xf]
        %v1854 = vld [vmem:[%s931 + $0xc] sm:$0xf]
        %v1855 = vld [vmem:[%s939] sm:$0x1]
        %v1857 = vlaneseq
        %v1858 = vshrl.u32 %v1857, 7
        %v1859 = vsub.s32 0, %v1858
        %v1860 = vrot.slane %v1855, %v1859
        %v1866 = vunpack.c.l.b16 %v1851
        %v1867 = vunpack.c.l.b16 %v1852
        %v1868 = vunpack.c.l.b16 %v1853
        %v1869 = vunpack.c.l.b16 %v1854
        %v1870 = vpack.c.b16 %v1867, %v1866
        %v1871 = vpack.c.b16 %v1869, %v1868
        %v1875 = vsel %vm1098, %v1850, 0
        %1877 = vmatprep.subr.bf16.mxu0 0
        %1878 = vmatpush1.bf16.msra.mxu0 %v1870
        %1879 = vmatprep.subr.bf16.mxu0 0
        %1880 = vmatpush1.bf16.msra.mxu0 %v1871
        %1881 = vmatprep.subr.bf16.mxu0 0
        %1882 = vmatpush1.bf16.msra.mxu0 0
        %1883 = vmatprep.subr.bf16.mxu0 0
        %1884 = vmatpush1.bf16.msra.mxu0 0
        %1885 = vmatprep.subr.bf16.mxu0 0
        %1886 = vmatpush1.bf16.msra.mxu0 0
        %1887 = vmatprep.subr.bf16.mxu0 0
        %1888 = vmatpush1.bf16.msra.mxu0 0
        %1889 = vmatprep.subr.bf16.mxu0 0
        %1890 = vmatpush1.bf16.msra.mxu0 0
        %1891 = vmatprep.subr.bf16.mxu0 0
        %1892 = vmatpush1.bf16.msra.mxu0 0
        %1893 = vmatprep.subr.bf16.mxu0 0
        %1894 = vmatpush1.bf16.msra.mxu0 0
        %1895 = vmatprep.subr.bf16.mxu0 0
        %1896 = vmatpush1.bf16.msra.mxu0 0
        %1897 = vmatprep.subr.bf16.mxu0 0
        %1898 = vmatpush1.bf16.msra.mxu0 0
        %1899 = vmatprep.subr.bf16.mxu0 0
        %1900 = vmatpush1.bf16.msra.mxu0 0
        %1901 = vmatprep.subr.bf16.mxu0 0
        %1902 = vmatpush1.bf16.msra.mxu0 0
        %1903 = vmatprep.subr.bf16.mxu0 0
        %1904 = vmatpush1.bf16.msra.mxu0 0
        %1905 = vmatprep.subr.bf16.mxu0 0
        %1906 = vmatpush1.bf16.msra.mxu0 0
        %1907 = vmatprep.subr.bf16.mxu0 0
        %1908 = vmatpush1.bf16.msra.mxu0 0
        %1909 = vmatprep.mubr.bf16.mxu0 0
        %1910 = vmatmul.mubr.bf16.gmra.mrb[0].mxu0 %v1875
        %v1911 = vpop.f32.mrb[0].mxu0
        %v1912 = vadd.f32 %v1860, %v1911
        %v1913 = vpop.f32.mrb[0].mxu0
        %v1914 = vpop.f32.mrb[0].mxu0
        %v1915 = vadd.f32 %v1860, %v1914
        %v1916 = vpop.f32.mrb[0].mxu0
        %1917 = vdwg.mxu0
        %v1918 = vmul.f32 %v1912, 0.5
        %v1919 = vmul.f32 %v1915, 0.5
        %v1920 = vmul.f32 %v1912, 0.044715
        %v1921 = vmul.f32 %v1915, 0.044715
        %v1922 = vmul.f32 %v1920, %v1912
        %v1923 = vmul.f32 %v1921, %v1915
        %v1924 = vmul.f32 %v1922, %v1912
        %v1925 = vmul.f32 %v1923, %v1915
        %v1926 = vadd.f32 %v1912, %v1924
        %v1927 = vadd.f32 %v1915, %v1925
        %v1928 = vmul.f32 %v1926, 0.7978846
        %v1929 = vmul.f32 %v1927, 0.7978846
        %v1930 = vtanh.pop %v1928
        %v1931 = vtanh.pop %v1929
        %v1932 = vadd.f32 %v1930, 1.0
        %v1933 = vadd.f32 %v1931, 1.0
        %v1934 = vmul.f32 %v1918, %v1932
        %v1935 = vmul.f32 %v1919, %v1933
        %v1936 = vpack.c.bf16 %v1935, %v1934
        %v1937 = vld [vmem:[%s1083] sm:$0xf]
        %v1938 = vld [vmem:[%s1083 + $0x4] sm:$0xf]
        %v1939 = vld [vmem:[%s1083 + $0x8] sm:$0xf]
        %v1940 = vld [vmem:[%s1083 + $0xc] sm:$0xf]
        %v1941 = vld [vmem:[%s1083 + $0x10] sm:$0xf]
        %v1942 = vld [vmem:[%s1083 + $0x14] sm:$0xf]
        %v1943 = vld [vmem:[%s1083 + $0x18] sm:$0xf]
        %v1944 = vld [vmem:[%s1083 + $0x1c] sm:$0xf]
        %v1945 = vld [vmem:[%s947] sm:$0x1]
        %v1947 = vlaneseq
        %v1948 = vshrl.u32 %v1947, 7
        %v1949 = vsub.s32 0, %v1948
        %v1950 = vrot.slane %v1945, %v1949
        %v1960 = vunpack.c.l.b16 %v1937
        %v1961 = vunpack.c.l.b16 %v1938
        %v1962 = vunpack.c.l.b16 %v1939
        %v1963 = vunpack.c.l.b16 %v1940
        %v1964 = vunpack.c.l.b16 %v1941
        %v1965 = vunpack.c.l.b16 %v1942
        %v1966 = vunpack.c.l.b16 %v1943
        %v1967 = vunpack.c.l.b16 %v1944
        %v1968 = vpack.c.b16 %v1961, %v1960
        %v1969 = vpack.c.b16 %v1963, %v1962
        %v1970 = vpack.c.b16 %v1965, %v1964
        %v1971 = vpack.c.b16 %v1967, %v1966
        %vm1976 = vcmask 523264
        %v1978 = vsel %vm1976, %v1936, 0
        %1980 = vmatprep.subr.bf16.mxu0 0
        %1981 = vmatpush1.bf16.msra.mxu0 %v1968
        %1982 = vmatprep.subr.bf16.mxu0 0
        %1983 = vmatpush1.bf16.msra.mxu0 %v1969
        %1984 = vmatprep.subr.bf16.mxu0 0
        %1985 = vmatpush1.bf16.msra.mxu0 %v1970
        %1986 = vmatprep.subr.bf16.mxu0 0
        %1987 = vmatpush1.bf16.msra.mxu0 %v1971
        %1988 = vmatprep.subr.bf16.mxu0 0
        %1989 = vmatpush1.bf16.msra.mxu0 0
        %1990 = vmatprep.subr.bf16.mxu0 0
        %1991 = vmatpush1.bf16.msra.mxu0 0
        %1992 = vmatprep.subr.bf16.mxu0 0
        %1993 = vmatpush1.bf16.msra.mxu0 0
        %1994 = vmatprep.subr.bf16.mxu0 0
        %1995 = vmatpush1.bf16.msra.mxu0 0
        %1996 = vmatprep.subr.bf16.mxu0 0
        %1997 = vmatpush1.bf16.msra.mxu0 0
        %1998 = vmatprep.subr.bf16.mxu0 0
        %1999 = vmatpush1.bf16.msra.mxu0 0
        %2000 = vmatprep.subr.bf16.mxu0 0
        %2001 = vmatpush1.bf16.msra.mxu0 0
        %2002 = vmatprep.subr.bf16.mxu0 0
        %2003 = vmatpush1.bf16.msra.mxu0 0
        %2004 = vmatprep.subr.bf16.mxu0 0
        %2005 = vmatpush1.bf16.msra.mxu0 0
        %2006 = vmatprep.subr.bf16.mxu0 0
        %2007 = vmatpush1.bf16.msra.mxu0 0
        %2008 = vmatprep.subr.bf16.mxu0 0
        %2009 = vmatpush1.bf16.msra.mxu0 0
        %2010 = vmatprep.subr.bf16.mxu0 0
        %2011 = vmatpush1.bf16.msra.mxu0 0
        %2012 = vmatprep.mubr.bf16.mxu0 0
        %2013 = vmatmul.mubr.bf16.gmra.mrb[0].mxu0 %v1978
        %v2014 = vpop.f32.mrb[0].mxu0
        %v2015 = vadd.f32 %v1950, %v2014
        %v2016 = vpop.f32.mrb[0].mxu0
        %v2017 = vpop.f32.mrb[0].mxu0
        %v2018 = vadd.f32 %v1950, %v2017
        %v2019 = vpop.f32.mrb[0].mxu0
        %2020 = vdwg.mxu0
        %v2021 = vadd.f32 %v1804, %v2015
        %v2022 = vadd.f32 %v1805, %v2018
        %2023 = vst.msk [vmem:[#allocation2] sm:$0xff] %vm1098, %v2021
        %2024 = vst.msk [vmem:[#allocation2 + $0x8] sm:$0xff] %vm1098, %v2022
        %p2025 = scmp.eq.s32.totalorder %s60, 1
        // Predicated region
        $region157: #{tpu_custom_call.1} parent=99 // pred_check
          %p2026 = pneg %p2025
        $region158: #{tpu_custom_call.1} parent=99 // pred_check_branch
          %2028 = sbr.rel (%p2026) target = $region160
        $region159: #{tpu_custom_call.1} parent=99 // pred_region
          %v2029 = vpack.c.bf16 %v2022, %v2021
          %v2030 = vld [vmem:[%s14] sm:$0xf]
          %v2031 = vld [vmem:[%s14 + $0x4] sm:$0xf]
          %v2032 = vld [vmem:[%s14 + $0x8] sm:$0xf]
          %v2033 = vld [vmem:[%s14 + $0xc] sm:$0xf]
          %v2034 = vld [vmem:[#allocation22] sm:$0x1]
          %v2036 = vlaneseq
          %v2037 = vshrl.u32 %v2036, 7
          %v2038 = vsub.s32 0, %v2037
          %v2039 = vrot.slane %v2034, %v2038
          %v2045 = vunpack.c.l.b16 %v2030
          %v2046 = vunpack.c.l.b16 %v2031
          %v2047 = vunpack.c.l.b16 %v2032
          %v2048 = vunpack.c.l.b16 %v2033
          %v2049 = vpack.c.b16 %v2046, %v2045
          %v2050 = vpack.c.b16 %v2048, %v2047
          %v2054 = vsel %vm1098, %v2029, 0
          %2056 = vmatprep.subr.bf16.mxu0 0
          %2057 = vmatpush1.bf16.msra.mxu0 %v2049
          %2058 = vmatprep.subr.bf16.mxu0 0
          %2059 = vmatpush1.bf16.msra.mxu0 %v2050
          %2060 = vmatprep.subr.bf16.mxu0 0
          %2061 = vmatpush1.bf16.msra.mxu0 0
          %2062 = vmatprep.subr.bf16.mxu0 0
          %2063 = vmatpush1.bf16.msra.mxu0 0
          %2064 = vmatprep.subr.bf16.mxu0 0
          %2065 = vmatpush1.bf16.msra.mxu0 0
          %2066 = vmatprep.subr.bf16.mxu0 0
          %2067 = vmatpush1.bf16.msra.mxu0 0
          %2068 = vmatprep.subr.bf16.mxu0 0
          %2069 = vmatpush1.bf16.msra.mxu0 0
          %2070 = vmatprep.subr.bf16.mxu0 0
          %2071 = vmatpush1.bf16.msra.mxu0 0
          %2072 = vmatprep.subr.bf16.mxu0 0
          %2073 = vmatpush1.bf16.msra.mxu0 0
          %2074 = vmatprep.subr.bf16.mxu0 0
          %2075 = vmatpush1.bf16.msra.mxu0 0
          %2076 = vmatprep.subr.bf16.mxu0 0
          %2077 = vmatpush1.bf16.msra.mxu0 0
          %2078 = vmatprep.subr.bf16.mxu0 0
          %2079 = vmatpush1.bf16.msra.mxu0 0
          %2080 = vmatprep.subr.bf16.mxu0 0
          %2081 = vmatpush1.bf16.msra.mxu0 0
          %2082 = vmatprep.subr.bf16.mxu0 0
          %2083 = vmatpush1.bf16.msra.mxu0 0
          %2084 = vmatprep.subr.bf16.mxu0 0
          %2085 = vmatpush1.bf16.msra.mxu0 0
          %2086 = vmatprep.subr.bf16.mxu0 0
          %2087 = vmatpush1.bf16.msra.mxu0 0
          %2088 = vmatprep.mubr.bf16.mxu0 0
          %2089 = vmatmul.mubr.bf16.gmra.mrb[0].mxu0 %v2054
          %v2090 = vpop.f32.mrb[0].mxu0
          %v2091 = vadd.f32 %v2039, %v2090
          %v2092 = vpop.f32.mrb[0].mxu0
          %v2093 = vpop.f32.mrb[0].mxu0
          %v2094 = vadd.f32 %v2039, %v2093
          %v2095 = vpop.f32.mrb[0].mxu0
          %2096 = vdwg.mxu0
          %v2097 = vmul.f32 %v2091, 0.5
          %v2098 = vmul.f32 %v2094, 0.5
          %v2099 = vmul.f32 %v2091, 0.044715
          %v2100 = vmul.f32 %v2094, 0.044715
          %v2101 = vmul.f32 %v2099, %v2091
          %v2102 = vmul.f32 %v2100, %v2094
          %v2103 = vmul.f32 %v2101, %v2091
          %v2104 = vmul.f32 %v2102, %v2094
          %v2105 = vadd.f32 %v2091, %v2103
          %v2106 = vadd.f32 %v2094, %v2104
          %v2107 = vmul.f32 %v2105, 0.7978846
          %v2108 = vmul.f32 %v2106, 0.7978846
          %v2109 = vtanh.pop %v2107
          %v2110 = vtanh.pop %v2108
          %v2111 = vadd.f32 %v2109, 1.0
          %v2112 = vadd.f32 %v2110, 1.0
          %v2113 = vmul.f32 %v2097, %v2111
          %v2114 = vmul.f32 %v2098, %v2112
          %v2115 = vld [vmem:[#allocation24] sm:$0x1]
          %v2116 = vld [vmem:[%s17] sm:$0x1]
          %v2117 = vsel %vm1098, %v2113, 0.0
          %2118 = vadd.xlane.f32.xlu0 %v2117
          %v2119 = vpop.xlane.xlu0 %2118
          %v2120 = vsel %vm1098, %v2114, 0.0
          %2121 = vadd.xlane.f32.xlu0 %v2120
          %v2122 = vpop.xlane.xlu0 %2121
          %v2123 = vmul.f32 %v2119, %v1105
          %v2124 = vmul.f32 %v2122, %v1105
          %v2125 = vsub.f32 %v2113, %v2123
          %v2126 = vsub.f32 %v2114, %v2124
          %v2127 = vmul.f32 %v2125, %v2125
          %v2128 = vmul.f32 %v2126, %v2126
          %v2129 = vsel %vm1098, %v2127, 0.0
          %2130 = vadd.xlane.f32.xlu0 %v2129
          %v2131 = vpop.xlane.xlu0 %2130
          %v2132 = vsel %vm1098, %v2128, 0.0
          %2133 = vadd.xlane.f32.xlu0 %v2132
          %v2134 = vpop.xlane.xlu0 %2133
          %v2135 = vmul.f32 %v2131, %v1105
          %v2136 = vmul.f32 %v2134, %v1105
          %v2137 = vadd.f32 %v2135, 1e-05
          %v2138 = vadd.f32 %v2136, 1e-05
          %v2139 = vrsqrt.pop %v2137
          %v2140 = vrsqrt.pop %v2138
          %v2141 = vmul.f32 %v2125, %v2139
          %v2142 = vmul.f32 %v2126, %v2140
          %v2144 = vlaneseq
          %v2145 = vshrl.u32 %v2144, 7
          %v2146 = vsub.s32 0, %v2145
          %v2147 = vrot.slane %v2115, %v2146
          %v2149 = vmul.f32 %v2141, %v2147
          %v2150 = vmul.f32 %v2142, %v2147
          %v2152 = vlaneseq
          %v2153 = vshrl.u32 %v2152, 7
          %v2154 = vsub.s32 0, %v2153
          %v2155 = vrot.slane %v2116, %v2154
          %v2157 = vadd.f32 %v2149, %v2155
          %v2158 = vadd.f32 %v2150, %v2155
          %v2159 = vpack.c.bf16 %v2158, %v2157
          %v2160 = vld [vmem:[%s18] sm:$0xf]
          %v2161 = vld [vmem:[%s18 + $0x4] sm:$0xf]
          %v2162 = vld [vmem:[%s18 + $0x8] sm:$0xf]
          %v2163 = vld [vmem:[%s18 + $0xc] sm:$0xf]
          %v2164 = vld [vmem:[#allocation3] sm:$0x1]
          %v2166 = vlaneseq
          %v2167 = vshrl.u32 %v2166, 7
          %v2168 = vsub.s32 0, %v2167
          %v2169 = vrot.slane %v2164, %v2168
          %2170 = vset.pattern.permute.xlu0 0
          %2171 = vperm.xlu0 %2170, %v2169
          %v2172 = vpop.permute.xlu0 %2171
          %v2178 = vunpack.c.l.b16 %v2160
          %v2179 = vunpack.c.l.b16 %v2161
          %v2180 = vunpack.c.l.b16 %v2162
          %v2181 = vunpack.c.l.b16 %v2163
          %v2182 = vpack.c.b16 %v2179, %v2178
          %v2183 = vpack.c.b16 %v2181, %v2180
          %v2187 = vsel %vm1098, %v2159, 0
          %2189 = vmatprep.subr.bf16.mxu0 0
          %2190 = vmatpush1.bf16.msra.mxu0 %v2182
          %2191 = vmatprep.subr.bf16.mxu0 0
          %2192 = vmatpush1.bf16.msra.mxu0 %v2183
          %2193 = vmatprep.subr.bf16.mxu0 0
          %2194 = vmatpush1.bf16.msra.mxu0 0
          %2195 = vmatprep.subr.bf16.mxu0 0
          %2196 = vmatpush1.bf16.msra.mxu0 0
          %2197 = vmatprep.subr.bf16.mxu0 0
          %2198 = vmatpush1.bf16.msra.mxu0 0
          %2199 = vmatprep.subr.bf16.mxu0 0
          %2200 = vmatpush1.bf16.msra.mxu0 0
          %2201 = vmatprep.subr.bf16.mxu0 0
          %2202 = vmatpush1.bf16.msra.mxu0 0
          %2203 = vmatprep.subr.bf16.mxu0 0
          %2204 = vmatpush1.bf16.msra.mxu0 0
          %2205 = vmatprep.subr.bf16.mxu0 0
          %2206 = vmatpush1.bf16.msra.mxu0 0
          %2207 = vmatprep.subr.bf16.mxu0 0
          %2208 = vmatpush1.bf16.msra.mxu0 0
          %2209 = vmatprep.subr.bf16.mxu0 0
          %2210 = vmatpush1.bf16.msra.mxu0 0
          %2211 = vmatprep.subr.bf16.mxu0 0
          %2212 = vmatpush1.bf16.msra.mxu0 0
          %2213 = vmatprep.subr.bf16.mxu0 0
          %2214 = vmatpush1.bf16.msra.mxu0 0
          %2215 = vmatprep.subr.bf16.mxu0 0
          %2216 = vmatpush1.bf16.msra.mxu0 0
          %2217 = vmatprep.subr.bf16.mxu0 0
          %2218 = vmatpush1.bf16.msra.mxu0 0
          %2219 = vmatprep.subr.bf16.mxu0 0
          %2220 = vmatpush1.bf16.msra.mxu0 0
          %2221 = vmatprep.mubr.bf16.mxu0 0
          %2222 = vmatmul.mubr.bf16.gmra.mrb[0].mxu0 %v2187
          %v2223 = vpop.f32.mrb[0].mxu0
          %v2224 = vadd.f32 %v2172, %v2223
          %v2225 = vpop.f32.mrb[0].mxu0
          %v2226 = vpop.f32.mrb[0].mxu0
          %v2227 = vadd.f32 %v2172, %v2226
          %v2228 = vpop.f32.mrb[0].mxu0
          %2229 = vdwg.mxu0
          %v2230 = vpack.c.bf16 %v2227, %v2224
          %v2232 = vunpack.c.l.b16 %v2230
          %v2233 = vunpack.c.h.b16 %v2230
          %v2234 = vpack.c.b16 %v2232, %v2232
          %v2235 = vpack.c.b16 %v2233, %v2233
          %2238 = vst [vmem:[%s1068] sm:$0xf] %v2234
          %2239 = vst [vmem:[%s1068 + $0x4] sm:$0xf] %v2235
        $region160: #{tpu_custom_call.1} parent=99 // pred_fallthru
          _
        %s2240 = sand.u32 %s565, 1
        %s2241 = scalar_lea.sflag [#allocation6], %s2240
        %s2242 = sand.u32 %s565, 1
        %s2243 = smul.addr %s2242, 8
        %s2244 = scalar_lea.vmem [#allocation25], %s2243
        // Predicated region
        $region161: #{tpu_custom_call.1} parent=99 // pred_check
          %p2245 = pneg %p575
        $region162: #{tpu_custom_call.1} parent=99 // pred_check_branch
          %2247 = sbr.rel (%p2245) target = $region164
        $region163: #{tpu_custom_call.1} parent=99 // pred_region
          %s2249 = ssub.s32 128, 128
          %2250 = vsyncadd %s2241, %s2249
          %s2251 = smul.addr %s59, 2
          %s2252 = smul.addr %s2251, 64
          %s2253 = scalar_lea.hbm %s20, %s2252
          %s2254 = sshll.u32 %s2244, 4
          %s2255 = int_to_ptr.vmem [resolvable:$true] %s2254
          %2260 = dma.vmem_to_hbm [thread:$0]  %s2255, 128, %s2253, %s2241, 64, 64, 4
        $region164: #{tpu_custom_call.1} parent=99 // pred_fallthru
          _
      $region100: #{tpu_custom_call.1} parent=5 // pred_fallthru
        _
      %p2261 = scmp.le.s32.totalorder 2, %s50
      // Predicated region
      $region165: #{tpu_custom_call.1} parent=5 // pred_check
        %p2262 = pneg %p2261
      $region166: #{tpu_custom_call.1} parent=5 // pred_check_branch
        %2264 = sbr.rel (%p2262) target = $region168
      $region167: #{tpu_custom_call.1} parent=5 // pred_region
        %s2265 = ssub.s32 %s50, 2
        // Predicated region
        $region169: #{tpu_custom_call.1} parent=167 // pred_check
          %p2266 = pneg %p581
        $region170: #{tpu_custom_call.1} parent=167 // pred_check_branch
          %2268 = sbr.rel (%p2266) target = $region172
        $region171: #{tpu_custom_call.1} parent=167 // pred_region
          %s2269 = sand.u32 %s566, 1
          %s2270 = scalar_lea.sflag [#allocation6], %s2269
          %s2271 = sand.u32 %s566, 1
          %s2272 = smul.addr %s2271, 8
          %s2273 = scalar_lea.vmem [#allocation25], %s2272
          %2274 = dma.done %s2270, 128
        $region172: #{tpu_custom_call.1} parent=167 // pred_fallthru
          _
      $region168: #{tpu_custom_call.1} parent=5 // pred_fallthru
        _
    $region6: #{tpu_custom_call.1} parent=1 // loop_footer
      %s54 = sadd.s32 1, %s50
    $region7: #{tpu_custom_call.1} parent=1 // loop_footer_branch
      %49 = sbr.rel target = $region3
    $region8: #{tpu_custom_call.1} parent=1 // loop_exit
      _
    %2275 = vsyncpa [#allocation5], 1
    %s2276 = scalar_lea.sflag [#allocation5], 1
    %2277 = vsyncpa %s2276, 1
    %2278 = vsyncpa [#allocation8], 1
    %s2279 = scalar_lea.sflag [#allocation8], 1
    %2280 = vsyncpa %s2279, 1
    %2281 = vsyncpa [#allocation11], 1
    %s2282 = scalar_lea.sflag [#allocation11], 1
    %2283 = vsyncpa %s2282, 1
    %2284 = vsyncpa [#allocation14], 1
    %s2285 = scalar_lea.sflag [#allocation14], 1
    %2286 = vsyncpa %s2285, 1
    %2287 = vsyncpa [#allocation17], 1
    %s2288 = scalar_lea.sflag [#allocation17], 1
    %2289 = vsyncpa %s2288, 1
    %2290 = vsyncpa [#allocation20], 1
    %s2291 = scalar_lea.sflag [#allocation20], 1
    %2292 = vsyncpa %s2291, 1
    %2293 = vsyncpa [#allocation23], 1
    %2294 = vsyncpa [#allocation6], 1
    %s2295 = scalar_lea.sflag [#allocation6], 1
    %2296 = vsyncpa %s2295, 1

</llo_original>
